<compile_context>
chip_gen: v7x
topology: tpu7x:2x2x1
jax: 0.10.0
libtpu: 0.0.40
codegen_flags: <defaults>
</compile_context>

<pallas_src>
import functools
import math

import jax
import jax.numpy as jnp
from jax import lax
from jax.experimental import pallas as pl
from jax.experimental.pallas import tpu as pltpu

EPS = 1e-5                      # nn.LayerNorm default eps
_SQRT2_INV = 0.7071067811865476


def _layernorm(x, gamma, beta):
    x = x.astype(jnp.float32)
    mean = jnp.mean(x, axis=-1, keepdims=True)
    var = jnp.mean((x - mean) ** 2, axis=-1, keepdims=True)
    return (x - mean) * lax.rsqrt(var + EPS) * gamma + beta


def _gelu_exact(x):
    return 0.5 * x * (1.0 + lax.erf(x * _SQRT2_INV))


# --------------------------------------------------------------------------------------
# Kernel 1: LayerNorm1 + fused QKV projection  (grid = (B, S // seq_tile))
# Emits q/k/v in head-separated (B, H, S, D) layout; query scale folded into the weights.
# --------------------------------------------------------------------------------------
def qkv_proj_kernel(x_ref, g1_ref, be1_ref, wqkv_ref, bqkv_ref,
                    q_ref, k_ref, v_ref, *, num_heads, compute_dtype):
    x = x_ref[0]                                    # (TS, E)
    TS, E = x.shape
    H = num_heads
    D = E // H

    xn = _layernorm(x, g1_ref[...], be1_ref[...])   # f32 (TS, E)
    # 1/sqrt(D) query scale is already folded into wqkv/bqkv (wrapper-side prep).
    qkv = (jnp.dot(xn.astype(compute_dtype), wqkv_ref[...],
                   preferred_element_type=jnp.float32)
           + bqkv_ref[...]).astype(compute_dtype)   # (TS, 3E)

    # One head-split relayout per sequence tile (hoisted out of the attention kv loop).
    q_ref[0] = qkv[:, :E].reshape(TS, H, D).transpose(1, 0, 2)
    k_ref[0] = qkv[:, E:2 * E].reshape(TS, H, D).transpose(1, 0, 2)
    v_ref[0] = qkv[:, 2 * E:].reshape(TS, H, D).transpose(1, 0, 2)


# --------------------------------------------------------------------------------------
# Kernel 2: flash attention (kv = grid axis) + out-proj + residual + LN2 + MLP + residual
# grid = (B, S // q_tile, S // kv_tile); m/l/acc in VMEM scratch across the kv axis.
# --------------------------------------------------------------------------------------
def attn_mlp_kernel(x_ref, q_ref, k_ref, v_ref,
                    wo_ref, bo_ref, g2_ref, be2_ref,
                    w1_ref, b1_ref, w2_ref, b2_ref,
                    o_ref, m_sc, l_sc, acc_sc, *, compute_dtype):
    H, TQ, D = q_ref.shape[1], q_ref.shape[2], q_ref.shape[3]
    E = H * D
    kv = pl.program_id(2)
    is_f32 = jnp.dtype(compute_dtype) == jnp.dtype(jnp.float32)
    # bf16 exp uses the bf16 EUP path (v6e/v7x); statistics & accumulation stay f32.
    exp_dtype = jnp.float32 if is_f32 else jnp.bfloat16

    @pl.when(kv == 0)
    def _():
        m_sc[...] = jnp.full_like(m_sc, -jnp.inf)
        l_sc[...] = jnp.zeros_like(l_sc)
        acc_sc[...] = jnp.zeros_like(acc_sc)

    q = q_ref[0]        # (H, TQ, D), compute dtype, query scale already applied
    kt = k_ref[0]       # (H, TK, D)
    vt = v_ref[0]       # (H, TK, D)

    s = jnp.einsum("hqd,hkd->hqk", q, kt,
                   preferred_element_type=jnp.float32)            # (H, TQ, TK) f32
    m_prev = m_sc[...]
    m_new = jnp.maximum(m_prev, s.max(axis=-1, keepdims=True))
    alpha = jnp.exp(m_prev - m_new)
    p = jnp.exp((s - m_new).astype(exp_dtype))
    l_sc[...] = alpha * l_sc[...] + p.sum(axis=-1, dtype=jnp.float32, keepdims=True)
    acc_sc[...] = alpha * acc_sc[...] + jnp.einsum(
        "hqk,hkd->hqd", p.astype(compute_dtype), vt,
        preferred_element_type=jnp.float32)
    m_sc[...] = m_new

    @pl.when(kv == pl.num_programs(2) - 1)
    def _():
        l = l_sc[...]
        inv_l = (1.0 / l) if is_f32 else pl.reciprocal(l, approx=True)
        acc = acc_sc[...] * inv_l                                  # (H, TQ, D) f32

        # Head merge folded into the out-projection (no (H,TQ,D)->(TQ,E) transpose):
        # wo_ref is (H, D, E); accumulate per-head (TQ, D) @ (D, E) matmuls.
        attn = jnp.zeros((TQ, E), jnp.float32)
        for h in range(H):
            attn = attn + jnp.dot(acc[h].astype(compute_dtype), wo_ref[h],
                                  preferred_element_type=jnp.float32)
        attn = attn + bo_ref[...]

        x1 = x_ref[0].astype(jnp.float32) + attn                   # residual 1 (f32)
        xn2 = _layernorm(x1, g2_ref[...], be2_ref[...])
        h1 = jnp.dot(xn2.astype(compute_dtype), w1_ref[...],
                     preferred_element_type=jnp.float32) + b1_ref[...]
        h1 = _gelu_exact(h1)                                        # exact GELU (nn.GELU)
        h2 = jnp.dot(h1.astype(compute_dtype), w2_ref[...],
                     preferred_element_type=jnp.float32) + b2_ref[...]
        o_ref[0] = (x1 + h2).astype(o_ref.dtype)                    # residual 2


# --------------------------------------------------------------------------------------
# Wrapper helpers
# --------------------------------------------------------------------------------------
_BUFFERED1_SUPPORTED = None
_VMEM_CAP = None


def _buffered_one_supported():
    """One-time probe (cached): does this jax/Mosaic build accept pl.Buffered(1)?"""
    global _BUFFERED1_SUPPORTED
    if _BUFFERED1_SUPPORTED is None:
        try:
            def _probe(x_ref, o_ref):
                o_ref[...] = x_ref[...] + 1.0
            f = pl.pallas_call(
                _probe, grid=(1,),
                in_specs=[pl.BlockSpec((8, 128), lambda i: (0, 0),
                                       pipeline_mode=pl.Buffered(1))],
                out_specs=pl.BlockSpec((8, 128), lambda i: (0, 0)),
                out_shape=jax.ShapeDtypeStruct((8, 128), jnp.float32))
            jax.block_until_ready(f(jnp.zeros((8, 128), jnp.float32)))
            _BUFFERED1_SUPPORTED = True
        except Exception:   # probe only -- real kernel errors are never swallowed
            _BUFFERED1_SUPPORTED = False
    return _BUFFERED1_SUPPORTED


def _vmem_capacity_bytes():
    global _VMEM_CAP
    if _VMEM_CAP is None:
        try:
            _VMEM_CAP = int(pltpu.get_tpu_info().vmem_capacity_bytes)
        except Exception:            # conservative default: v7x per-core VMEM
            _VMEM_CAP = 64 << 20
    return _VMEM_CAP


def _vmem_request(est_bytes):
    """Request ~1.25x the estimated working set, clamped to capacity - headroom."""
    cap = _vmem_capacity_bytes()
    return int(min(max(32 << 20, int(1.25 * est_bytes)), cap - (8 << 20)))


def _weight_spec(shape, single_buffered):
    idx = lambda *_: (0,) * len(shape)
    if single_buffered:
        # Constant-index weight blocks: single-buffer them to halve their VMEM footprint.
        return pl.BlockSpec(shape, idx, pipeline_mode=pl.Buffered(1))
    return pl.BlockSpec(shape, idx)


def _pick_tile(n, target, step=128):
    """Largest `step`-multiple tile <= target that divides n (MXU / bf16-packing
    friendly); falls back to 8-multiples, then to n itself."""
    if n <= target:
        return n
    t = (min(target, n) // step) * step
    while t >= step:
        if n % t == 0:
            return t
        t -= step
    t = (min(target, n) // 8) * 8
    while t >= 8:
        if n % t == 0:
            return t
        t -= 8
    return n


# --------------------------------------------------------------------------------------
# Wrapper
# --------------------------------------------------------------------------------------
def transformer_block(x, params, num_heads, *, compute_dtype=None,
                      seq_tile=256, q_tile=256, kv_tile=256):
    """Forward pass of the TransformerBlock as two fused Pallas TPU kernels."""
    B, S, E = x.shape
    assert E % num_heads == 0
    H = num_heads
    D = E // H
    Hm = params["w1"].shape[0]
    cd = jnp.dtype(x.dtype if compute_dtype is None else compute_dtype)
    xb = jnp.dtype(x.dtype).itemsize
    cdb = cd.itemsize
    f32b = 4

    single_buffered = _buffered_one_supported()
    wb = 1 if single_buffered else 2

    # One-time weight prep (transpose / cast / scale-fold). Under jit this is compiled
    # once; every in-kernel matmul is a natural (M, K) @ (K, N) contraction.
    scale = 1.0 / math.sqrt(D)
    qkv_scale = jnp.concatenate([jnp.full((E,), scale, jnp.float32),
                                 jnp.ones((2 * E,), jnp.float32)])
    wqkv_t = (params["wqkv"].T.astype(jnp.float32) * qkv_scale).astype(cd)   # (E, 3E)
    bqkv = params["bqkv"].astype(jnp.float32).reshape(1, 3 * E) * qkv_scale  # (1, 3E)
    wo_hde = params["wo"].T.reshape(H, D, E).astype(cd)                      # (H, D, E)
    w1_t = params["w1"].T.astype(cd)                                         # (E, Hm)
    w2_t = params["w2"].T.astype(cd)                                         # (Hm, E)
    bo = params["bo"].astype(jnp.float32).reshape(1, E)
    b1 = params["b1"].astype(jnp.float32).reshape(1, Hm)
    b2 = params["b2"].astype(jnp.float32).reshape(1, E)
    g1 = params["g1"].astype(jnp.float32).reshape(1, E)
    be1 = params["be1"].astype(jnp.float32).reshape(1, E)
    g2 = params["g2"].astype(jnp.float32).reshape(1, E)
    be2 = params["be2"].astype(jnp.float32).reshape(1, E)

    ts = _pick_tile(S, seq_tile)
    tq = _pick_tile(S, q_tile)
    tk = _pick_tile(S, kv_tile)

    # ---------------- kernel 1: LN1 + QKV projection ----------------
    est_a = (2 * ts * E * xb                         # x tile (double-buffered)
             + 2 * 3 * ts * E * cdb                  # q/k/v output tiles
             + wb * (3 * E * E * cdb + 6 * E * f32b) # weights + bias/LN params
             + 4 * ts * 3 * E * f32b)                # in-kernel intermediates
    q, k, v = pl.pallas_call(
        functools.partial(qkv_proj_kernel, num_heads=H, compute_dtype=cd),
        grid=(B, S // ts),
        in_specs=[
            pl.BlockSpec((1, ts, E), lambda b, s: (b, s, 0)),        # x
            _weight_spec((1, E), single_buffered),                   # gamma1
            _weight_spec((1, E), single_buffered),                   # beta1
            _weight_spec((E, 3 * E), single_buffered),               # Wqkv^T (scaled)
            _weight_spec((1, 3 * E), single_buffered),               # bqkv   (scaled)
        ],
        out_specs=[pl.BlockSpec((1, H, ts, D), lambda b, s: (b, 0, s, 0))] * 3,
        out_shape=[jax.ShapeDtypeStruct((B, H, S, D), cd)] * 3,
        compiler_params=pltpu.CompilerParams(
            dimension_semantics=("parallel", "parallel"),
            vmem_limit_bytes=_vmem_request(est_a)),
    )(x, g1, be1, wqkv_t, bqkv)

    # ---- kernel 2: flash attention (kv grid axis) + out-proj + LN2 + MLP ----
    est_b = (4 * tq * E * xb                                   # x tile + out tile
             + 2 * tq * E * cdb                                # q tile
             + 4 * tk * E * cdb                                # k/v tiles
             + wb * ((E * E + 2 * E * Hm) * cdb + (Hm + 5 * E) * f32b)  # weights/biases
             + H * tq * (D + 2) * f32b                         # m/l/acc scratch
             + 3 * H * tq * tk * f32b                          # score/exp intermediates
             + 2 * tq * Hm * f32b                              # MLP hidden
             + 6 * tq * E * f32b)                              # attn / residual / LN temps
    out = pl.pallas_call(
        functools.partial(attn_mlp_kernel, compute_dtype=cd),
        grid=(B, S // tq, S // tk),
        in_specs=[
            pl.BlockSpec((1, tq, E), lambda b, qi, ki: (b, qi, 0)),          # x (residual)
            pl.BlockSpec((1, H, tq, D), lambda b, qi, ki: (b, 0, qi, 0)),    # q tile
            pl.BlockSpec((1, H, tk, D), lambda b, qi, ki: (b, 0, ki, 0)),    # k tile
            pl.BlockSpec((1, H, tk, D), lambda b, qi, ki: (b, 0, ki, 0)),    # v tile
            _weight_spec((H, D, E), single_buffered),                        # Wo (H,D,E)
            _weight_spec((1, E), single_buffered),                           # bo
            _weight_spec((1, E), single_buffered),                           # gamma2
            _weight_spec((1, E), single_buffered),                           # beta2
            _weight_spec((E, Hm), single_buffered),                          # W1^T
            _weight_spec((1, Hm), single_buffered),                          # b1
            _weight_spec((Hm, E), single_buffered),                          # W2^T
            _weight_spec((1, E), single_buffered),                           # b2
        ],
        out_specs=pl.BlockSpec((1, tq, E), lambda b, qi, ki: (b, qi, 0)),
        out_shape=jax.ShapeDtypeStruct((B, S, E), x.dtype),
        scratch_shapes=[pltpu.VMEM((H, tq, 1), jnp.float32),    # m
                        pltpu.VMEM((H, tq, 1), jnp.float32),    # l
                        pltpu.VMEM((H, tq, D), jnp.float32)],   # acc
        compiler_params=pltpu.CompilerParams(
            dimension_semantics=("parallel", "parallel", "arbitrary"),
            vmem_limit_bytes=_vmem_request(est_b)),
    )(x, q, k, v, wo_hde, bo, g2, be2, w1_t, b1, w2_t, b2)
    return out


# --------------------------------------------------------------------------------------
# Pure-JAX reference (identical semantics) and parameter init
# --------------------------------------------------------------------------------------
def reference_jax(x, params, num_heads):
    B, S, E = x.shape
    D = E // num_heads

    def ln(v, g, b):
        m = jnp.mean(v, -1, keepdims=True)
        var = jnp.mean((v - m) ** 2, -1, keepdims=True)
        return (v - m) / jnp.sqrt(var + EPS) * g + b

    xn = ln(x, params["g1"], params["be1"])
    qkv = xn @ params["wqkv"].T + params["bqkv"]
    q, k, v = qkv[..., :E], qkv[..., E:2 * E], qkv[..., 2 * E:]
    q = q.reshape(B, S, num_heads, D).transpose(0, 2, 1, 3) / (D ** 0.5)
    k = k.reshape(B, S, num_heads, D).transpose(0, 2, 1, 3)
    v = v.reshape(B, S, num_heads, D).transpose(0, 2, 1, 3)
    s = jnp.einsum("bhqd,bhkd->bhqk", q, k)
    p = jax.nn.softmax(s, axis=-1)
    o = jnp.einsum("bhqk,bhkd->bhqd", p, v).transpose(0, 2, 1, 3).reshape(B, S, E)
    attn = o @ params["wo"].T + params["bo"]
    x1 = x + attn
    xn2 = ln(x1, params["g2"], params["be2"])
    h1 = xn2 @ params["w1"].T + params["b1"]
    h1 = 0.5 * h1 * (1.0 + lax.erf(h1 / jnp.sqrt(2.0)))
    h2 = h1 @ params["w2"].T + params["b2"]
    return x1 + h2


def init_params(key, embed_dim, num_heads, mlp_ratio=4.0):
    hidden = int(embed_dim * mlp_ratio)
    ks = jax.random.split(key, 8)
    sc = 0.05
    return {
        "g1": jnp.ones((1, embed_dim), jnp.float32),
        "be1": jnp.zeros((1, embed_dim), jnp.float32),
        "wqkv": sc * jax.random.normal(ks[0], (3 * embed_dim, embed_dim), jnp.float32),
        "bqkv": sc * jax.random.normal(ks[1], (1, 3 * embed_dim), jnp.float32),
        "wo": sc * jax.random.normal(ks[2], (embed_dim, embed_dim), jnp.float32),
        "bo": sc * jax.random.normal(ks[3], (1, embed_dim), jnp.float32),
        "g2": jnp.ones((1, embed_dim), jnp.float32),
        "be2": jnp.zeros((1, embed_dim), jnp.float32),
        "w1": sc * jax.random.normal(ks[4], (hidden, embed_dim), jnp.float32),
        "b1": sc * jax.random.normal(ks[5], (1, hidden), jnp.float32),
        "w2": sc * jax.random.normal(ks[6], (embed_dim, hidden), jnp.float32),
        "b2": sc * jax.random.normal(ks[7], (1, embed_dim), jnp.float32),
    }


if __name__ == "__main__":
    B, S, E, NH = 2, 8, 32, 4
    key = jax.random.PRNGKey(0)
    kx, kp = jax.random.split(key)
    x = jax.random.normal(kx, (B, S, E), jnp.float32)
    params = init_params(kp, E, NH, mlp_ratio=4.0)

    ref = reference_jax(x, params, num_heads=NH)

    _ = _buffered_one_supported()   # warm the one-time capability probe (cached)

    # f32 path: exact-precision check against the pure-JAX reference.
    fwd_f32 = jax.jit(functools.partial(transformer_block, num_heads=NH))
    out = jax.block_until_ready(fwd_f32(x, params))
    assert out.shape == (B, S, E)
    assert jnp.allclose(out, ref, atol=1e-4, rtol=1e-4), "f32 kernel mismatch vs reference"

    # bf16 MXU path: weights/activations bf16, f32 accumulation, f32 statistics,
    # bf16 exp (EUP) and approx reciprocal in the softmax normalization.
    fwd_bf16 = jax.jit(functools.partial(transformer_block, num_heads=NH,
                                         compute_dtype=jnp.bfloat16))
    out_bf16 = jax.block_until_ready(fwd_bf16(x, params))
    assert jnp.allclose(out_bf16.astype(jnp.float32), ref, atol=5e-2, rtol=5e-2), \
        "bf16 kernel mismatch vs reference"

    print("KERNEL_OK")
</pallas_src>

<mosaic_0001>
module attributes {stable_mosaic.version = 11 : i64} {
  func.func @_probe(%arg0: i32, %arg1: memref<8x128xf32, #tpu.memory_space<vmem>>, %arg2: memref<8x128xf32, #tpu.memory_space<vmem>>) attributes {dimension_semantics = [#tpu.dimension_semantics<arbitrary>], iteration_bounds = array<i64: 1>, scalar_prefetch = 0 : i64, scratch_operands = 0 : i64, tpu.core_type = #tpu.core_type<tc>, window_params = [{pipeline_mode = #tpu.pipeline_mode<synchronous>, transform_indices = @transform_0, window_bounds = array<i64: 8, 128>}, {pipeline_mode = #tpu.pipeline_mode<synchronous>, transform_indices = @transform_1, window_bounds = array<i64: 8, 128>}]} {
    %c0 = arith.constant 0 : index
    %c0_0 = arith.constant 0 : index
    %0 = vector.load %arg1[%c0, %c0_0] : memref<8x128xf32, #tpu.memory_space<vmem>>, vector<8x128xf32>
    %cst = arith.constant 1.000000e+00 : f32
    %1 = vector.broadcast %cst : f32 to vector<8x128xf32>
    %2 = arith.addf %0, %1 : vector<8x128xf32>
    %c0_1 = arith.constant 0 : index
    %c0_2 = arith.constant 0 : index
    %3 = vector.load %arg2[%c0_1, %c0_2] : memref<8x128xf32, #tpu.memory_space<vmem>>, vector<8x128xf32>
    tpu.vector_store %arg2[%c0_1, %c0_2], %2 {strides = array<i32>} : memref<8x128xf32, #tpu.memory_space<vmem>>, vector<8x128xf32>,
    return
  }
  func.func @transform_0(%arg0: i32) -> (i32, i32) {
    %c0_i32 = arith.constant 0 : i32
    %c0_i32_0 = arith.constant 0 : i32
    %c0_i32_1 = arith.constant 0 : i32
    return %c0_i32, %c0_i32_0 : i32, i32
  }
  func.func @transform_1(%arg0: i32) -> (i32, i32) {
    %c0_i32 = arith.constant 0 : i32
    %c0_i32_0 = arith.constant 0 : i32
    %c0_i32_1 = arith.constant 0 : i32
    return %c0_i32, %c0_i32_0 : i32, i32
  }
}

module attributes {stable_mosaic.version = 11 : i64} {
  func.func @qkv_proj_kernel(%arg0: i32, %arg1: i32, %arg2: memref<1x8x32xf32, #tpu.memory_space<vmem>>, %arg3: memref<1x32xf32, #tpu.memory_space<vmem>>, %arg4: memref<1x32xf32, #tpu.memory_space<vmem>>, %arg5: memref<32x96xf32, #tpu.memory_space<vmem>>, %arg6: memref<1x96xf32, #tpu.memory_space<vmem>>, %arg7: memref<1x4x8x8xf32, #tpu.memory_space<vmem>>, %arg8: memref<1x4x8x8xf32, #tpu.memory_space<vmem>>, %arg9: memref<1x4x8x8xf32, #tpu.memory_space<vmem>>) attributes {dimension_semantics = [#tpu.dimension_semantics<parallel>, #tpu.dimension_semantics<parallel>], iteration_bounds = array<i64: 2, 1>, scalar_prefetch = 0 : i64, scratch_operands = 0 : i64, tpu.core_type = #tpu.core_type<tc>, window_params = [{transform_indices = @transform_0, window_bounds = array<i64: 1, 8, 32>}, {pipeline_mode = #tpu.pipeline_mode<synchronous>, transform_indices = @transform_1, window_bounds = array<i64: 1, 32>}, {pipeline_mode = #tpu.pipeline_mode<synchronous>, transform_indices = @transform_2, window_bounds = array<i64: 1, 32>}, {pipeline_mode = #tpu.pipeline_mode<synchronous>, transform_indices = @transform_3, window_bounds = array<i64: 32, 96>}, {pipeline_mode = #tpu.pipeline_mode<synchronous>, transform_indices = @transform_4, window_bounds = array<i64: 1, 96>}, {transform_indices = @transform_5, window_bounds = array<i64: 1, 4, 8, 8>}, {transform_indices = @transform_6, window_bounds = array<i64: 1, 4, 8, 8>}, {transform_indices = @transform_7, window_bounds = array<i64: 1, 4, 8, 8>}]} {
    %c0 = arith.constant 0 : index
    %c0_0 = arith.constant 0 : index
    %c0_1 = arith.constant 0 : index
    %0 = vector.load %arg2[%c0, %c0_0, %c0_1] : memref<1x8x32xf32, #tpu.memory_space<vmem>>, vector<1x8x32xf32>
    %1 = vector.shape_cast %0 : vector<1x8x32xf32> to vector<8x32xf32>
    %c0_2 = arith.constant 0 : index
    %c0_3 = arith.constant 0 : index
    %2 = vector.load %arg3[%c0_2, %c0_3] : memref<1x32xf32, #tpu.memory_space<vmem>>, vector<1x32xf32>
    %c0_4 = arith.constant 0 : index
    %c0_5 = arith.constant 0 : index
    %3 = vector.load %arg4[%c0_4, %c0_5] : memref<1x32xf32, #tpu.memory_space<vmem>>, vector<1x32xf32>
    %cst = arith.constant dense<0.000000e+00> : vector<8xf32>
    %4 = vector.multi_reduction <add>, %1, %cst [1] : vector<8x32xf32> to vector<8xf32>
    %5 = vector.shape_cast %4 : vector<8xf32> to vector<8x1xf32>
    %cst_6 = arith.constant 3.200000e+01 : f32
    %6 = vector.broadcast %cst_6 : f32 to vector<8x1xf32>
    %7 = arith.divf %5, %6 : vector<8x1xf32>
    %8 = vector.broadcast %7 : vector<8x1xf32> to vector<8x32xf32>
    %9 = arith.subf %1, %8 : vector<8x32xf32>
    %10 = arith.mulf %9, %9 : vector<8x32xf32>
    %cst_7 = arith.constant dense<0.000000e+00> : vector<8xf32>
    %11 = vector.multi_reduction <add>, %10, %cst_7 [1] : vector<8x32xf32> to vector<8xf32>
    %12 = vector.shape_cast %11 : vector<8xf32> to vector<8x1xf32>
    %cst_8 = arith.constant 3.200000e+01 : f32
    %13 = vector.broadcast %cst_8 : f32 to vector<8x1xf32>
    %14 = arith.divf %12, %13 : vector<8x1xf32>
    %15 = vector.broadcast %7 : vector<8x1xf32> to vector<8x32xf32>
    %16 = arith.subf %1, %15 : vector<8x32xf32>
    %cst_9 = arith.constant 9.99999974E-6 : f32
    %17 = vector.broadcast %cst_9 : f32 to vector<8x1xf32>
    %18 = arith.addf %14, %17 : vector<8x1xf32>
    %19 = math.rsqrt %18 : vector<8x1xf32>
    %20 = vector.broadcast %19 : vector<8x1xf32> to vector<8x32xf32>
    %21 = arith.mulf %16, %20 : vector<8x32xf32>
    %22 = vector.broadcast %2 : vector<1x32xf32> to vector<8x32xf32>
    %23 = arith.mulf %21, %22 : vector<8x32xf32>
    %24 = vector.broadcast %3 : vector<1x32xf32> to vector<8x32xf32>
    %25 = arith.addf %23, %24 : vector<8x32xf32>
    %c0_10 = arith.constant 0 : index
    %c0_11 = arith.constant 0 : index
    %26 = vector.load %arg5[%c0_10, %c0_11] : memref<32x96xf32, #tpu.memory_space<vmem>>, vector<32x96xf32>
    %cst_12 = arith.constant dense<0.000000e+00> : vector<8x96xf32>
    %27 = tpu.matmul %25, %26, %cst_12 {dimension_numbers = #tpu.dot_dimension_numbers<[1], [0], [0], [1], [0, 0, 1, 1], [], []>} : vector<8x32xf32>, vector<32x96xf32>, vector<8x96xf32> -> vector<8x96xf32>
    %c0_13 = arith.constant 0 : index
    %c0_14 = arith.constant 0 : index
    %28 = vector.load %arg6[%c0_13, %c0_14] : memref<1x96xf32, #tpu.memory_space<vmem>>, vector<1x96xf32>
    %29 = vector.broadcast %28 : vector<1x96xf32> to vector<8x96xf32>
    %30 = arith.addf %27, %29 : vector<8x96xf32>
    %31 = vector.extract_strided_slice %30 {offsets = [0, 0], sizes = [8, 32], strides = [1, 1]} : vector<8x96xf32> to vector<8x32xf32>
    %32 = vector.shape_cast %31 : vector<8x32xf32> to vector<8x4x8xf32>
    %33 = tpu.transpose %32, [1, 0, 2] : vector<8x4x8xf32> -> vector<4x8x8xf32>
    %c0_15 = arith.constant 0 : index
    %c0_16 = arith.constant 0 : index
    %c0_17 = arith.constant 0 : index
    %c0_18 = arith.constant 0 : index
    %34 = vector.load %arg7[%c0_15, %c0_16, %c0_17, %c0_18] : memref<1x4x8x8xf32, #tpu.memory_space<vmem>>, vector<1x4x8x8xf32>
    %35 = vector.shape_cast %34 : vector<1x4x8x8xf32> to vector<4x8x8xf32>
    %36 = vector.shape_cast %33 : vector<4x8x8xf32> to vector<1x4x8x8xf32>
    tpu.vector_store %arg7[%c0_15, %c0_16, %c0_17, %c0_18], %36 {strides = array<i32>} : memref<1x4x8x8xf32, #tpu.memory_space<vmem>>, vector<1x4x8x8xf32>,
    %37 = vector.extract_strided_slice %30 {offsets = [0, 32], sizes = [8, 32], strides = [1, 1]} : vector<8x96xf32> to vector<8x32xf32>
    %38 = vector.shape_cast %37 : vector<8x32xf32> to vector<8x4x8xf32>
    %39 = tpu.transpose %38, [1, 0, 2] : vector<8x4x8xf32> -> vector<4x8x8xf32>
    %c0_19 = arith.constant 0 : index
    %c0_20 = arith.constant 0 : index
    %c0_21 = arith.constant 0 : index
    %c0_22 = arith.constant 0 : index
    %40 = vector.load %arg8[%c0_19, %c0_20, %c0_21, %c0_22] : memref<1x4x8x8xf32, #tpu.memory_space<vmem>>, vector<1x4x8x8xf32>
    %41 = vector.shape_cast %40 : vector<1x4x8x8xf32> to vector<4x8x8xf32>
    %42 = vector.shape_cast %39 : vector<4x8x8xf32> to vector<1x4x8x8xf32>
    tpu.vector_store %arg8[%c0_19, %c0_20, %c0_21, %c0_22], %42 {strides = array<i32>} : memref<1x4x8x8xf32, #tpu.memory_space<vmem>>, vector<1x4x8x8xf32>,
    %43 = vector.extract_strided_slice %30 {offsets = [0, 64], sizes = [8, 32], strides = [1, 1]} : vector<8x96xf32> to vector<8x32xf32>
    %44 = vector.shape_cast %43 : vector<8x32xf32> to vector<8x4x8xf32>
    %45 = tpu.transpose %44, [1, 0, 2] : vector<8x4x8xf32> -> vector<4x8x8xf32>
    %c0_23 = arith.constant 0 : index
    %c0_24 = arith.constant 0 : index
    %c0_25 = arith.constant 0 : index
    %c0_26 = arith.constant 0 : index
    %46 = vector.load %arg9[%c0_23, %c0_24, %c0_25, %c0_26] : memref<1x4x8x8xf32, #tpu.memory_space<vmem>>, vector<1x4x8x8xf32>
    %47 = vector.shape_cast %46 : vector<1x4x8x8xf32> to vector<4x8x8xf32>
    %48 = vector.shape_cast %45 : vector<4x8x8xf32> to vector<1x4x8x8xf32>
    tpu.vector_store %arg9[%c0_23, %c0_24, %c0_25, %c0_26], %48 {strides = array<i32>} : memref<1x4x8x8xf32, #tpu.memory_space<vmem>>, vector<1x4x8x8xf32>,
    return
  }
  func.func @transform_0(%arg0: i32, %arg1: i32) -> (i32, i32, i32) {
    %c0_i32 = arith.constant 0 : i32
    %c0_i32_0 = arith.constant 0 : i32
    return %arg0, %arg1, %c0_i32 : i32, i32, i32
  }
  func.func @transform_1(%arg0: i32, %arg1: i32) -> (i32, i32) {
    %c0_i32 = arith.constant 0 : i32
    %c0_i32_0 = arith.constant 0 : i32
    %c0_i32_1 = arith.constant 0 : i32
    return %c0_i32, %c0_i32_0 : i32, i32
  }
  func.func @transform_2(%arg0: i32, %arg1: i32) -> (i32, i32) {
    %c0_i32 = arith.constant 0 : i32
    %c0_i32_0 = arith.constant 0 : i32
    %c0_i32_1 = arith.constant 0 : i32
    return %c0_i32, %c0_i32_0 : i32, i32
  }
  func.func @transform_3(%arg0: i32, %arg1: i32) -> (i32, i32) {
    %c0_i32 = arith.constant 0 : i32
    %c0_i32_0 = arith.constant 0 : i32
    %c0_i32_1 = arith.constant 0 : i32
    return %c0_i32, %c0_i32_0 : i32, i32
  }
  func.func @transform_4(%arg0: i32, %arg1: i32) -> (i32, i32) {
    %c0_i32 = arith.constant 0 : i32
    %c0_i32_0 = arith.constant 0 : i32
    %c0_i32_1 = arith.constant 0 : i32
    return %c0_i32, %c0_i32_0 : i32, i32
  }
  func.func @transform_5(%arg0: i32, %arg1: i32) -> (i32, i32, i32, i32) {
    %c0_i32 = arith.constant 0 : i32
    %c0_i32_0 = arith.constant 0 : i32
    %c0_i32_1 = arith.constant 0 : i32
    return %arg0, %c0_i32, %arg1, %c0_i32_0 : i32, i32, i32, i32
  }
  func.func @transform_6(%arg0: i32, %arg1: i32) -> (i32, i32, i32, i32) {
    %c0_i32 = arith.constant 0 : i32
    %c0_i32_0 = arith.constant 0 : i32
    %c0_i32_1 = arith.constant 0 : i32
    return %arg0, %c0_i32, %arg1, %c0_i32_0 : i32, i32, i32, i32
  }
  func.func @transform_7(%arg0: i32, %arg1: i32) -> (i32, i32, i32, i32) {
    %c0_i32 = arith.constant 0 : i32
    %c0_i32_0 = arith.constant 0 : i32
    %c0_i32_1 = arith.constant 0 : i32
    return %arg0, %c0_i32, %arg1, %c0_i32_0 : i32, i32, i32, i32
  }
}

module attributes {stable_mosaic.version = 11 : i64} {
  func.func @attn_mlp_kernel(%arg0: i32, %arg1: i32, %arg2: i32, %arg3: memref<1x8x32xf32, #tpu.memory_space<vmem>>, %arg4: memref<1x4x8x8xf32, #tpu.memory_space<vmem>>, %arg5: memref<1x4x8x8xf32, #tpu.memory_space<vmem>>, %arg6: memref<1x4x8x8xf32, #tpu.memory_space<vmem>>, %arg7: memref<4x8x32xf32, #tpu.memory_space<vmem>>, %arg8: memref<1x32xf32, #tpu.memory_space<vmem>>, %arg9: memref<1x32xf32, #tpu.memory_space<vmem>>, %arg10: memref<1x32xf32, #tpu.memory_space<vmem>>, %arg11: memref<32x128xf32, #tpu.memory_space<vmem>>, %arg12: memref<1x128xf32, #tpu.memory_space<vmem>>, %arg13: memref<128x32xf32, #tpu.memory_space<vmem>>, %arg14: memref<1x32xf32, #tpu.memory_space<vmem>>, %arg15: memref<1x8x32xf32, #tpu.memory_space<vmem>>, %arg16: memref<4x8x1xf32, #tpu.memory_space<vmem>>, %arg17: memref<4x8x1xf32, #tpu.memory_space<vmem>>, %arg18: memref<4x8x8xf32, #tpu.memory_space<vmem>>) attributes {dimension_semantics = [#tpu.dimension_semantics<parallel>, #tpu.dimension_semantics<parallel>, #tpu.dimension_semantics<arbitrary>], iteration_bounds = array<i64: 2, 1, 1>, scalar_prefetch = 0 : i64, scratch_operands = 3 : i64, tpu.core_type = #tpu.core_type<tc>, window_params = [{transform_indices = @transform_0, window_bounds = array<i64: 1, 8, 32>}, {transform_indices = @transform_1, window_bounds = array<i64: 1, 4, 8, 8>}, {transform_indices = @transform_2, window_bounds = array<i64: 1, 4, 8, 8>}, {transform_indices = @transform_3, window_bounds = array<i64: 1, 4, 8, 8>}, {pipeline_mode = #tpu.pipeline_mode<synchronous>, transform_indices = @transform_4, window_bounds = array<i64: 4, 8, 32>}, {pipeline_mode = #tpu.pipeline_mode<synchronous>, transform_indices = @transform_5, window_bounds = array<i64: 1, 32>}, {pipeline_mode = #tpu.pipeline_mode<synchronous>, transform_indices = @transform_6, window_bounds = array<i64: 1, 32>}, {pipeline_mode = #tpu.pipeline_mode<synchronous>, transform_indices = @transform_7, window_bounds = array<i64: 1, 32>}, {pipeline_mode = #tpu.pipeline_mode<synchronous>, transform_indices = @transform_8, window_bounds = array<i64: 32, 128>}, {pipeline_mode = #tpu.pipeline_mode<synchronous>, transform_indices = @transform_9, window_bounds = array<i64: 1, 128>}, {pipeline_mode = #tpu.pipeline_mode<synchronous>, transform_indices = @transform_10, window_bounds = array<i64: 128, 32>}, {pipeline_mode = #tpu.pipeline_mode<synchronous>, transform_indices = @transform_11, window_bounds = array<i64: 1, 32>}, {transform_indices = @transform_12, window_bounds = array<i64: 1, 8, 32>}]} {
    %c0_i32 = arith.constant 0 : i32
    %0 = arith.cmpi eq, %arg2, %c0_i32 : i32
    %1 = arith.extui %0 : i1 to i32
    %c0_i32_0 = arith.constant 0 : i32
    %2 = arith.cmpi ne, %1, %c0_i32_0 : i32
    scf.if %2 {
      %cst_35 = arith.constant 0xFF800000 : f32
      %35 = vector.broadcast %cst_35 : f32 to vector<4x8x1xf32>
      %c0_36 = arith.constant 0 : index
      %c0_37 = arith.constant 0 : index
      %c0_38 = arith.constant 0 : index
      %36 = vector.load %arg16[%c0_36, %c0_37, %c0_38] : memref<4x8x1xf32, #tpu.memory_space<vmem>>, vector<4x8x1xf32>
      tpu.vector_store %arg16[%c0_36, %c0_37, %c0_38], %35 {strides = array<i32>} : memref<4x8x1xf32, #tpu.memory_space<vmem>>, vector<4x8x1xf32>,
      %cst_39 = arith.constant 0.000000e+00 : f32
      %37 = vector.broadcast %cst_39 : f32 to vector<4x8x1xf32>
      %c0_40 = arith.constant 0 : index
      %c0_41 = arith.constant 0 : index
      %c0_42 = arith.constant 0 : index
      %38 = vector.load %arg17[%c0_40, %c0_41, %c0_42] : memref<4x8x1xf32, #tpu.memory_space<vmem>>, vector<4x8x1xf32>
      tpu.vector_store %arg17[%c0_40, %c0_41, %c0_42], %37 {strides = array<i32>} : memref<4x8x1xf32, #tpu.memory_space<vmem>>, vector<4x8x1xf32>,
      %cst_43 = arith.constant 0.000000e+00 : f32
      %39 = vector.broadcast %cst_43 : f32 to vector<4x8x8xf32>
      %c0_44 = arith.constant 0 : index
      %c0_45 = arith.constant 0 : index
      %c0_46 = arith.constant 0 : index
      %40 = vector.load %arg18[%c0_44, %c0_45, %c0_46] : memref<4x8x8xf32, #tpu.memory_space<vmem>>, vector<4x8x8xf32>
      tpu.vector_store %arg18[%c0_44, %c0_45, %c0_46], %39 {strides = array<i32>} : memref<4x8x8xf32, #tpu.memory_space<vmem>>, vector<4x8x8xf32>,
    } else {
    }
    %c0 = arith.constant 0 : index
    %c0_1 = arith.constant 0 : index
    %c0_2 = arith.constant 0 : index
    %c0_3 = arith.constant 0 : index
    %3 = vector.load %arg4[%c0, %c0_1, %c0_2, %c0_3] : memref<1x4x8x8xf32, #tpu.memory_space<vmem>>, vector<1x4x8x8xf32>
    %4 = vector.shape_cast %3 : vector<1x4x8x8xf32> to vector<4x8x8xf32>
    %c0_4 = arith.constant 0 : index
    %c0_5 = arith.constant 0 : index
    %c0_6 = arith.constant 0 : index
    %c0_7 = arith.constant 0 : index
    %5 = vector.load %arg5[%c0_4, %c0_5, %c0_6, %c0_7] : memref<1x4x8x8xf32, #tpu.memory_space<vmem>>, vector<1x4x8x8xf32>
    %6 = vector.shape_cast %5 : vector<1x4x8x8xf32> to vector<4x8x8xf32>
    %c0_8 = arith.constant 0 : index
    %c0_9 = arith.constant 0 : index
    %c0_10 = arith.constant 0 : index
    %c0_11 = arith.constant 0 : index
    %7 = vector.load %arg6[%c0_8, %c0_9, %c0_10, %c0_11] : memref<1x4x8x8xf32, #tpu.memory_space<vmem>>, vector<1x4x8x8xf32>
    %8 = vector.shape_cast %7 : vector<1x4x8x8xf32> to vector<4x8x8xf32>
    "tpu.trace_start"() <{level = 10 : i32, message = "hqd,hkd->hqk"}> : () -> ()
    %cst = arith.constant dense<0.000000e+00> : vector<4x8x8xf32>
    %9 = tpu.matmul %4, %6, %cst {dimension_numbers = #tpu.dot_dimension_numbers<[2], [2], [1], [1], [0, 0, 0, 1, 1, 1], [0], [0]>} : vector<4x8x8xf32>, vector<4x8x8xf32>, vector<4x8x8xf32> -> vector<4x8x8xf32>
    "tpu.trace_stop"() : () -> ()
    %c0_12 = arith.constant 0 : index
    %c0_13 = arith.constant 0 : index
    %c0_14 = arith.constant 0 : index
    %10 = vector.load %arg16[%c0_12, %c0_13, %c0_14] : memref<4x8x1xf32, #tpu.memory_space<vmem>>, vector<4x8x1xf32>
    %cst_15 = arith.constant dense<0xFF800000> : vector<4x8xf32>
    %11 = vector.multi_reduction <maximumf>, %9, %cst_15 [2] : vector<4x8x8xf32> to vector<4x8xf32>
    %12 = vector.shape_cast %11 : vector<4x8xf32> to vector<4x8x1xf32>
    %13 = arith.maximumf %10, %12 : vector<4x8x1xf32>
    %14 = arith.subf %10, %13 : vector<4x8x1xf32>
    %15 = math.exp %14 : vector<4x8x1xf32>
    %16 = vector.broadcast %13 : vector<4x8x1xf32> to vector<4x8x8xf32>
    %17 = arith.subf %9, %16 : vector<4x8x8xf32>
    %18 = math.exp %17 : vector<4x8x8xf32>
    %c0_16 = arith.constant 0 : index
    %c0_17 = arith.constant 0 : index
    %c0_18 = arith.constant 0 : index
    %19 = vector.load %arg17[%c0_16, %c0_17, %c0_18] : memref<4x8x1xf32, #tpu.memory_space<vmem>>, vector<4x8x1xf32>
    %20 = arith.mulf %15, %19 : vector<4x8x1xf32>
    %cst_19 = arith.constant dense<0.000000e+00> : vector<4x8xf32>
    %21 = vector.multi_reduction <add>, %18, %cst_19 [2] : vector<4x8x8xf32> to vector<4x8xf32>
    %22 = vector.shape_cast %21 : vector<4x8xf32> to vector<4x8x1xf32>
    %23 = arith.addf %20, %22 : vector<4x8x1xf32>
    %c0_20 = arith.constant 0 : index
    %c0_21 = arith.constant 0 : index
    %c0_22 = arith.constant 0 : index
    %24 = vector.load %arg17[%c0_20, %c0_21, %c0_22] : memref<4x8x1xf32, #tpu.memory_space<vmem>>, vector<4x8x1xf32>
    tpu.vector_store %arg17[%c0_20, %c0_21, %c0_22], %23 {strides = array<i32>} : memref<4x8x1xf32, #tpu.memory_space<vmem>>, vector<4x8x1xf32>,
    %c0_23 = arith.constant 0 : index
    %c0_24 = arith.constant 0 : index
    %c0_25 = arith.constant 0 : index
    %25 = vector.load %arg18[%c0_23, %c0_24, %c0_25] : memref<4x8x8xf32, #tpu.memory_space<vmem>>, vector<4x8x8xf32>
    %26 = vector.broadcast %15 : vector<4x8x1xf32> to vector<4x8x8xf32>
    %27 = arith.mulf %26, %25 : vector<4x8x8xf32>
    "tpu.trace_start"() <{level = 10 : i32, message = "hqk,hkd->hqd"}> : () -> ()
    %cst_26 = arith.constant dense<0.000000e+00> : vector<4x8x8xf32>
    %28 = tpu.matmul %18, %8, %cst_26 {dimension_numbers = #tpu.dot_dimension_numbers<[2], [1], [1], [2], [0, 0, 0, 1, 1, 2], [0], [0]>} : vector<4x8x8xf32>, vector<4x8x8xf32>, vector<4x8x8xf32> -> vector<4x8x8xf32>
    "tpu.trace_stop"() : () -> ()
    %29 = arith.addf %27, %28 : vector<4x8x8xf32>
    %c0_27 = arith.constant 0 : index
    %c0_28 = arith.constant 0 : index
    %c0_29 = arith.constant 0 : index
    %30 = vector.load %arg18[%c0_27, %c0_28, %c0_29] : memref<4x8x8xf32, #tpu.memory_space<vmem>>, vector<4x8x8xf32>
    tpu.vector_store %arg18[%c0_27, %c0_28, %c0_29], %29 {strides = array<i32>} : memref<4x8x8xf32, #tpu.memory_space<vmem>>, vector<4x8x8xf32>,
    %c0_30 = arith.constant 0 : index
    %c0_31 = arith.constant 0 : index
    %c0_32 = arith.constant 0 : index
    %31 = vector.load %arg16[%c0_30, %c0_31, %c0_32] : memref<4x8x1xf32, #tpu.memory_space<vmem>>, vector<4x8x1xf32>
    tpu.vector_store %arg16[%c0_30, %c0_31, %c0_32], %13 {strides = array<i32>} : memref<4x8x1xf32, #tpu.memory_space<vmem>>, vector<4x8x1xf32>,
    %c0_i32_33 = arith.constant 0 : i32
    %32 = arith.cmpi eq, %arg2, %c0_i32_33 : i32
    %33 = arith.extui %32 : i1 to i32
    %c0_i32_34 = arith.constant 0 : i32
    %34 = arith.cmpi ne, %33, %c0_i32_34 : i32
    scf.if %34 {
      %c0_35 = arith.constant 0 : index
      %c0_36 = arith.constant 0 : index
      %c0_37 = arith.constant 0 : index
      %35 = vector.load %arg17[%c0_35, %c0_36, %c0_37] : memref<4x8x1xf32, #tpu.memory_space<vmem>>, vector<4x8x1xf32>
      %cst_38 = arith.constant 1.000000e+00 : f32
      %36 = vector.broadcast %cst_38 : f32 to vector<4x8x1xf32>
      %37 = arith.divf %36, %35 : vector<4x8x1xf32>
      %c0_39 = arith.constant 0 : index
      %c0_40 = arith.constant 0 : index
      %c0_41 = arith.constant 0 : index
      %38 = vector.load %arg18[%c0_39, %c0_40, %c0_41] : memref<4x8x8xf32, #tpu.memory_space<vmem>>, vector<4x8x8xf32>
      %39 = vector.broadcast %37 : vector<4x8x1xf32> to vector<4x8x8xf32>
      %40 = arith.mulf %38, %39 : vector<4x8x8xf32>
      %cst_42 = arith.constant 0.000000e+00 : f32
      %41 = vector.broadcast %cst_42 : f32 to vector<8x32xf32>
      %42 = vector.extract_strided_slice %40 {offsets = [0, 0, 0], sizes = [1, 8, 8], strides = [1, 1, 1]} : vector<4x8x8xf32> to vector<1x8x8xf32>
      %43 = vector.shape_cast %42 : vector<1x8x8xf32> to vector<8x8xf32>
      %c0_43 = arith.constant 0 : index
      %c0_44 = arith.constant 0 : index
      %c0_45 = arith.constant 0 : index
      %44 = vector.load %arg7[%c0_43, %c0_44, %c0_45] : memref<4x8x32xf32, #tpu.memory_space<vmem>>, vector<1x8x32xf32>
      %45 = vector.shape_cast %44 : vector<1x8x32xf32> to vector<8x32xf32>
      %cst_46 = arith.constant dense<0.000000e+00> : vector<8x32xf32>
      %46 = tpu.matmul %43, %45, %cst_46 {dimension_numbers = #tpu.dot_dimension_numbers<[1], [0], [0], [1], [0, 0, 1, 1], [], []>} : vector<8x8xf32>, vector<8x32xf32>, vector<8x32xf32> -> vector<8x32xf32>
      %47 = arith.addf %41, %46 : vector<8x32xf32>
      %48 = vector.extract_strided_slice %40 {offsets = [1, 0, 0], sizes = [1, 8, 8], strides = [1, 1, 1]} : vector<4x8x8xf32> to vector<1x8x8xf32>
      %49 = vector.shape_cast %48 : vector<1x8x8xf32> to vector<8x8xf32>
      %c1 = arith.constant 1 : index
      %c0_47 = arith.constant 0 : index
      %c0_48 = arith.constant 0 : index
      %50 = vector.load %arg7[%c1, %c0_47, %c0_48] : memref<4x8x32xf32, #tpu.memory_space<vmem>>, vector<1x8x32xf32>
      %51 = vector.shape_cast %50 : vector<1x8x32xf32> to vector<8x32xf32>
      %cst_49 = arith.constant dense<0.000000e+00> : vector<8x32xf32>
      %52 = tpu.matmul %49, %51, %cst_49 {dimension_numbers = #tpu.dot_dimension_numbers<[1], [0], [0], [1], [0, 0, 1, 1], [], []>} : vector<8x8xf32>, vector<8x32xf32>, vector<8x32xf32> -> vector<8x32xf32>
      %53 = arith.addf %47, %52 : vector<8x32xf32>
      %54 = vector.extract_strided_slice %40 {offsets = [2, 0, 0], sizes = [1, 8, 8], strides = [1, 1, 1]} : vector<4x8x8xf32> to vector<1x8x8xf32>
      %55 = vector.shape_cast %54 : vector<1x8x8xf32> to vector<8x8xf32>
      %c2 = arith.constant 2 : index
      %c0_50 = arith.constant 0 : index
      %c0_51 = arith.constant 0 : index
      %56 = vector.load %arg7[%c2, %c0_50, %c0_51] : memref<4x8x32xf32, #tpu.memory_space<vmem>>, vector<1x8x32xf32>
      %57 = vector.shape_cast %56 : vector<1x8x32xf32> to vector<8x32xf32>
      %cst_52 = arith.constant dense<0.000000e+00> : vector<8x32xf32>
      %58 = tpu.matmul %55, %57, %cst_52 {dimension_numbers = #tpu.dot_dimension_numbers<[1], [0], [0], [1], [0, 0, 1, 1], [], []>} : vector<8x8xf32>, vector<8x32xf32>, vector<8x32xf32> -> vector<8x32xf32>
      %59 = arith.addf %53, %58 : vector<8x32xf32>
      %60 = vector.extract_strided_slice %40 {offsets = [3, 0, 0], sizes = [1, 8, 8], strides = [1, 1, 1]} : vector<4x8x8xf32> to vector<1x8x8xf32>
      %61 = vector.shape_cast %60 : vector<1x8x8xf32> to vector<8x8xf32>
      %c3 = arith.constant 3 : index
      %c0_53 = arith.constant 0 : index
      %c0_54 = arith.constant 0 : index
      %62 = vector.load %arg7[%c3, %c0_53, %c0_54] : memref<4x8x32xf32, #tpu.memory_space<vmem>>, vector<1x8x32xf32>
      %63 = vector.shape_cast %62 : vector<1x8x32xf32> to vector<8x32xf32>
      %cst_55 = arith.constant dense<0.000000e+00> : vector<8x32xf32>
      %64 = tpu.matmul %61, %63, %cst_55 {dimension_numbers = #tpu.dot_dimension_numbers<[1], [0], [0], [1], [0, 0, 1, 1], [], []>} : vector<8x8xf32>, vector<8x32xf32>, vector<8x32xf32> -> vector<8x32xf32>
      %65 = arith.addf %59, %64 : vector<8x32xf32>
      %c0_56 = arith.constant 0 : index
      %c0_57 = arith.constant 0 : index
      %66 = vector.load %arg8[%c0_56, %c0_57] : memref<1x32xf32, #tpu.memory_space<vmem>>, vector<1x32xf32>
      %67 = vector.broadcast %66 : vector<1x32xf32> to vector<8x32xf32>
      %68 = arith.addf %65, %67 : vector<8x32xf32>
      %c0_58 = arith.constant 0 : index
      %c0_59 = arith.constant 0 : index
      %c0_60 = arith.constant 0 : index
      %69 = vector.load %arg3[%c0_58, %c0_59, %c0_60] : memref<1x8x32xf32, #tpu.memory_space<vmem>>, vector<1x8x32xf32>
      %70 = vector.shape_cast %69 : vector<1x8x32xf32> to vector<8x32xf32>
      %71 = arith.addf %70, %68 : vector<8x32xf32>
      %c0_61 = arith.constant 0 : index
      %c0_62 = arith.constant 0 : index
      %72 = vector.load %arg9[%c0_61, %c0_62] : memref<1x32xf32, #tpu.memory_space<vmem>>, vector<1x32xf32>
      %c0_63 = arith.constant 0 : index
      %c0_64 = arith.constant 0 : index
      %73 = vector.load %arg10[%c0_63, %c0_64] : memref<1x32xf32, #tpu.memory_space<vmem>>, vector<1x32xf32>
      %cst_65 = arith.constant dense<0.000000e+00> : vector<8xf32>
      %74 = vector.multi_reduction <add>, %71, %cst_65 [1] : vector<8x32xf32> to vector<8xf32>
      %75 = vector.shape_cast %74 : vector<8xf32> to vector<8x1xf32>
      %cst_66 = arith.constant 3.200000e+01 : f32
      %76 = vector.broadcast %cst_66 : f32 to vector<8x1xf32>
      %77 = arith.divf %75, %76 : vector<8x1xf32>
      %78 = vector.broadcast %77 : vector<8x1xf32> to vector<8x32xf32>
      %79 = arith.subf %71, %78 : vector<8x32xf32>
      %80 = arith.mulf %79, %79 : vector<8x32xf32>
      %cst_67 = arith.constant dense<0.000000e+00> : vector<8xf32>
      %81 = vector.multi_reduction <add>, %80, %cst_67 [1] : vector<8x32xf32> to vector<8xf32>
      %82 = vector.shape_cast %81 : vector<8xf32> to vector<8x1xf32>
      %cst_68 = arith.constant 3.200000e+01 : f32
      %83 = vector.broadcast %cst_68 : f32 to vector<8x1xf32>
      %84 = arith.divf %82, %83 : vector<8x1xf32>
      %85 = vector.broadcast %77 : vector<8x1xf32> to vector<8x32xf32>
      %86 = arith.subf %71, %85 : vector<8x32xf32>
      %cst_69 = arith.constant 9.99999974E-6 : f32
      %87 = vector.broadcast %cst_69 : f32 to vector<8x1xf32>
      %88 = arith.addf %84, %87 : vector<8x1xf32>
      %89 = math.rsqrt %88 : vector<8x1xf32>
      %90 = vector.broadcast %89 : vector<8x1xf32> to vector<8x32xf32>
      %91 = arith.mulf %86, %90 : vector<8x32xf32>
      %92 = vector.broadcast %72 : vector<1x32xf32> to vector<8x32xf32>
      %93 = arith.mulf %91, %92 : vector<8x32xf32>
      %94 = vector.broadcast %73 : vector<1x32xf32> to vector<8x32xf32>
      %95 = arith.addf %93, %94 : vector<8x32xf32>
      %c0_70 = arith.constant 0 : index
      %c0_71 = arith.constant 0 : index
      %96 = vector.load %arg11[%c0_70, %c0_71] : memref<32x128xf32, #tpu.memory_space<vmem>>, vector<32x128xf32>
      %cst_72 = arith.constant dense<0.000000e+00> : vector<8x128xf32>
      %97 = tpu.matmul %95, %96, %cst_72 {dimension_numbers = #tpu.dot_dimension_numbers<[1], [0], [0], [1], [0, 0, 1, 1], [], []>} : vector<8x32xf32>, vector<32x128xf32>, vector<8x128xf32> -> vector<8x128xf32>
      %c0_73 = arith.constant 0 : index
      %c0_74 = arith.constant 0 : index
      %98 = vector.load %arg12[%c0_73, %c0_74] : memref<1x128xf32, #tpu.memory_space<vmem>>, vector<1x128xf32>
      %99 = vector.broadcast %98 : vector<1x128xf32> to vector<8x128xf32>
      %100 = arith.addf %97, %99 : vector<8x128xf32>
      %cst_75 = arith.constant 5.000000e-01 : f32
      %101 = vector.broadcast %cst_75 : f32 to vector<8x128xf32>
      %102 = arith.mulf %101, %100 : vector<8x128xf32>
      %cst_76 = arith.constant 0.707106769 : f32
      %103 = vector.broadcast %cst_76 : f32 to vector<8x128xf32>
      %104 = arith.mulf %100, %103 : vector<8x128xf32>
      %105 = math.erf %104 : vector<8x128xf32>
      %cst_77 = arith.constant 1.000000e+00 : f32
      %106 = vector.broadcast %cst_77 : f32 to vector<8x128xf32>
      %107 = arith.addf %106, %105 : vector<8x128xf32>
      %108 = arith.mulf %102, %107 : vector<8x128xf32>
      %c0_78 = arith.constant 0 : index
      %c0_79 = arith.constant 0 : index
      %109 = vector.load %arg13[%c0_78, %c0_79] : memref<128x32xf32, #tpu.memory_space<vmem>>, vector<128x32xf32>
      %cst_80 = arith.constant dense<0.000000e+00> : vector<8x32xf32>
      %110 = tpu.matmul %108, %109, %cst_80 {dimension_numbers = #tpu.dot_dimension_numbers<[1], [0], [0], [1], [0, 0, 1, 1], [], []>} : vector<8x128xf32>, vector<128x32xf32>, vector<8x32xf32> -> vector<8x32xf32>
      %c0_81 = arith.constant 0 : index
      %c0_82 = arith.constant 0 : index
      %111 = vector.load %arg14[%c0_81, %c0_82] : memref<1x32xf32, #tpu.memory_space<vmem>>, vector<1x32xf32>
      %112 = vector.broadcast %111 : vector<1x32xf32> to vector<8x32xf32>
      %113 = arith.addf %110, %112 : vector<8x32xf32>
      %114 = arith.addf %71, %113 : vector<8x32xf32>
      %c0_83 = arith.constant 0 : index
      %c0_84 = arith.constant 0 : index
      %c0_85 = arith.constant 0 : index
      %115 = vector.load %arg15[%c0_83, %c0_84, %c0_85] : memref<1x8x32xf32, #tpu.memory_space<vmem>>, vector<1x8x32xf32>
      %116 = vector.shape_cast %115 : vector<1x8x32xf32> to vector<8x32xf32>
      %117 = vector.shape_cast %114 : vector<8x32xf32> to vector<1x8x32xf32>
      tpu.vector_store %arg15[%c0_83, %c0_84, %c0_85], %117 {strides = array<i32>} : memref<1x8x32xf32, #tpu.memory_space<vmem>>, vector<1x8x32xf32>,
    } else {
    }
    return
  }
  func.func @transform_0(%arg0: i32, %arg1: i32, %arg2: i32) -> (i32, i32, i32) {
    %c0_i32 = arith.constant 0 : i32
    %c0_i32_0 = arith.constant 0 : i32
    return %arg0, %arg1, %c0_i32 : i32, i32, i32
  }
  func.func @transform_1(%arg0: i32, %arg1: i32, %arg2: i32) -> (i32, i32, i32, i32) {
    %c0_i32 = arith.constant 0 : i32
    %c0_i32_0 = arith.constant 0 : i32
    %c0_i32_1 = arith.constant 0 : i32
    return %arg0, %c0_i32, %arg1, %c0_i32_0 : i32, i32, i32, i32
  }
  func.func @transform_2(%arg0: i32, %arg1: i32, %arg2: i32) -> (i32, i32, i32, i32) {
    %c0_i32 = arith.constant 0 : i32
    %c0_i32_0 = arith.constant 0 : i32
    %c0_i32_1 = arith.constant 0 : i32
    return %arg0, %c0_i32, %arg2, %c0_i32_0 : i32, i32, i32, i32
  }
  func.func @transform_3(%arg0: i32, %arg1: i32, %arg2: i32) -> (i32, i32, i32, i32) {
    %c0_i32 = arith.constant 0 : i32
    %c0_i32_0 = arith.constant 0 : i32
    %c0_i32_1 = arith.constant 0 : i32
    return %arg0, %c0_i32, %arg2, %c0_i32_0 : i32, i32, i32, i32
  }
  func.func @transform_4(%arg0: i32, %arg1: i32, %arg2: i32) -> (i32, i32, i32) {
    %c0_i32 = arith.constant 0 : i32
    %c0_i32_0 = arith.constant 0 : i32
    %c0_i32_1 = arith.constant 0 : i32
    %c0_i32_2 = arith.constant 0 : i32
    return %c0_i32, %c0_i32_0, %c0_i32_1 : i32, i32, i32
  }
  func.func @transform_5(%arg0: i32, %arg1: i32, %arg2: i32) -> (i32, i32) {
    %c0_i32 = arith.constant 0 : i32
    %c0_i32_0 = arith.constant 0 : i32
    %c0_i32_1 = arith.constant 0 : i32
    return %c0_i32, %c0_i32_0 : i32, i32
  }
  func.func @transform_6(%arg0: i32, %arg1: i32, %arg2: i32) -> (i32, i32) {
    %c0_i32 = arith.constant 0 : i32
    %c0_i32_0 = arith.constant 0 : i32
    %c0_i32_1 = arith.constant 0 : i32
    return %c0_i32, %c0_i32_0 : i32, i32
  }
  func.func @transform_7(%arg0: i32, %arg1: i32, %arg2: i32) -> (i32, i32) {
    %c0_i32 = arith.constant 0 : i32
    %c0_i32_0 = arith.constant 0 : i32
    %c0_i32_1 = arith.constant 0 : i32
    return %c0_i32, %c0_i32_0 : i32, i32
  }
  func.func @transform_8(%arg0: i32, %arg1: i32, %arg2: i32) -> (i32, i32) {
    %c0_i32 = arith.constant 0 : i32
    %c0_i32_0 = arith.constant 0 : i32
    %c0_i32_1 = arith.constant 0 : i32
    return %c0_i32, %c0_i32_0 : i32, i32
  }
  func.func @transform_9(%arg0: i32, %arg1: i32, %arg2: i32) -> (i32, i32) {
    %c0_i32 = arith.constant 0 : i32
    %c0_i32_0 = arith.constant 0 : i32
    %c0_i32_1 = arith.constant 0 : i32
    return %c0_i32, %c0_i32_0 : i32, i32
  }
  func.func @transform_10(%arg0: i32, %arg1: i32, %arg2: i32) -> (i32, i32) {
    %c0_i32 = arith.constant 0 : i32
    %c0_i32_0 = arith.constant 0 : i32
    %c0_i32_1 = arith.constant 0 : i32
    return %c0_i32, %c0_i32_0 : i32, i32
  }
  func.func @transform_11(%arg0: i32, %arg1: i32, %arg2: i32) -> (i32, i32) {
    %c0_i32 = arith.constant 0 : i32
    %c0_i32_0 = arith.constant 0 : i32
    %c0_i32_1 = arith.constant 0 : i32
    return %c0_i32, %c0_i32_0 : i32, i32
  }
  func.func @transform_12(%arg0: i32, %arg1: i32, %arg2: i32) -> (i32, i32, i32) {
    %c0_i32 = arith.constant 0 : i32
    %c0_i32_0 = arith.constant 0 : i32
    return %arg0, %arg1, %c0_i32 : i32, i32, i32
  }
}

</mosaic_0001>

<llo_original>
// kernel: tpu_custom_call.1
$region0: #{tpu_custom_call.1}
  #allocation0 [shape = 'u32[]', space=smem, size = 0x4, offset = 0x4, fixed_abs, tag = 'smem constant byte address 0x4 - core index']
  #allocation1 [shape = 'u32[144,128]{1,0:T(1,128)}', space=vmem, size = 0x12000, scoped, tag = 'internal scratch']
  %s0 = inlined_call_operand.hbm [shape: f32[8,128], index: 0, kind: input, shape index: {}]
  %s1 = inlined_call_operand.hbm [shape: f32[8,128], index: 1, kind: output, shape index: {}]
  %s2 = sld [smem:[#allocation0]]
  $region18: #{tpu_custom_call.1} parent=0
    _
  %s4 = ssub.s32 1, %s2
  %s5 = scalar_select 0, %s4, %s2
  $region1: #{tpu_custom_call.1} parent=0
    #allocation2 [shape = 'u8[4096]{0}', space=vmem, size = 0x1000, scoped, tag = 'input window, operand 0, single buffered']
    #allocation3 [shape = 's32[1]{0}', space=sflag, size = 0x4, scoped, tag = 'scoped memory for tpu_custom_call.1']
    #allocation4 [shape = 's32[1]{0}', space=sflag, size = 0x4, scoped, tag = 'scoped memory for tpu_custom_call.1']
    #allocation5 [shape = 'u8[4096]{0}', space=vmem, size = 0x1000, scoped, tag = 'output window, operand 0, single buffered']
    %6 = vsyncpa [#allocation3], 0
    %7 = vsyncpa [#allocation4], 0
    // Predicated region
    $region2: #{tpu_custom_call.1} parent=1 // pred_check
      _
    $region3: #{tpu_custom_call.1} parent=1 // pred_check_branch
      %9 = sbr.rel (0) target = $region5
    $region4: #{tpu_custom_call.1} parent=1 // pred_region
      %s11 = ssub.s32 128, 128
      %12 = vsyncadd [#allocation3], %s11
      %s14 = sshll.u32 [#allocation2], 4
      %s15 = int_to_ptr.vmem [resolvable:$true] %s14
      %17 = dma.hbm_to_vmem [thread:$0]  %s0, 128, %s15, [#allocation3]
    $region5: #{tpu_custom_call.1} parent=1 // pred_fallthru
      _
    // Predicated region
    $region6: #{tpu_custom_call.1} parent=1 // pred_check
      _
    $region7: #{tpu_custom_call.1} parent=1 // pred_check_branch
      %19 = sbr.rel (0) target = $region9
    $region8: #{tpu_custom_call.1} parent=1 // pred_region
      %20 = dma.done [#allocation3], 128
    $region9: #{tpu_custom_call.1} parent=1 // pred_fallthru
      _
    %v21 = vld [vmem:[#allocation2] sm:$0xff]
    %v22 = vadd.f32 %v21, 1.0
    %23 = vst [vmem:[#allocation5] sm:$0xff] %v22
    // Predicated region
    $region10: #{tpu_custom_call.1} parent=1 // pred_check
      _
    $region11: #{tpu_custom_call.1} parent=1 // pred_check_branch
      %25 = sbr.rel (0) target = $region13
    $region12: #{tpu_custom_call.1} parent=1 // pred_region
      %s27 = ssub.s32 128, 128
      %28 = vsyncadd [#allocation4], %s27
      %s30 = sshll.u32 [#allocation5], 4
      %s31 = int_to_ptr.vmem [resolvable:$true] %s30
      %33 = dma.vmem_to_hbm [thread:$0]  %s31, 128, %s1, [#allocation4]
    $region13: #{tpu_custom_call.1} parent=1 // pred_fallthru
      _
    // Predicated region
    $region14: #{tpu_custom_call.1} parent=1 // pred_check
      _
    $region15: #{tpu_custom_call.1} parent=1 // pred_check_branch
      %35 = sbr.rel (0) target = $region17
    $region16: #{tpu_custom_call.1} parent=1 // pred_region
      %36 = dma.done [#allocation4], 128
    $region17: #{tpu_custom_call.1} parent=1 // pred_fallthru
      _
    %37 = vsyncpa [#allocation3], 1
    %38 = vsyncpa [#allocation4], 1

// kernel: mul.9
$region0: #{mul.9}
  #allocation0 [shape = 's32[1]{0}', space=sflag, size = 0x4, scoped, tag = 'scoped memory for mul.9']
  %s0 = inlined_call_operand.vmem [shape: f32[1,96], index: 0, kind: input, shape index: {}]
  %s1 = inlined_call_operand.vmem [shape: f32[1,96], index: 1, kind: input, shape index: {}]
  %s2 = inlined_call_operand.vmem [shape: f32[1,96], index: 2, kind: output, shape index: {}]
  %v3 = vld [vmem:[%s0] sm:$0x1]
  %v4 = vld [vmem:[%s1] sm:$0x1]
  %5 = xla_tuple %v3, %v4
  %6 = xla_tuple %5
  %v7 = vmul.f32 %v3, %v4
  %8 = xla_tuple %v7
  %9 = vst [vmem:[%s2] sm:$0x1] %v7

// kernel: transformer_block.2
$region0: #{transformer_block.2}
  #allocation0 [shape = 'u32[]', space=smem, size = 0x4, offset = 0x4, fixed_abs, tag = 'smem constant byte address 0x4 - core index']
  #allocation1 [shape = 'u32[144,128]{1,0:T(1,128)}', space=vmem, size = 0x12000, scoped, tag = 'internal scratch']
  %s0 = inlined_call_operand.vmem [shape: f32[2,8,32], index: 0, kind: input, shape index: {}]
  %s1 = inlined_call_operand.vmem [shape: f32[1,32], index: 1, kind: input, shape index: {}]
  %s2 = inlined_call_operand.vmem [shape: f32[1,32], index: 2, kind: input, shape index: {}]
  %s3 = inlined_call_operand.vmem [shape: f32[32,96], index: 3, kind: input, shape index: {}]
  %s4 = inlined_call_operand.vmem [shape: f32[1,96], index: 4, kind: input, shape index: {}]
  %s5 = inlined_call_operand.vmem [shape: f32[2,4,8,8], index: 5, kind: output, shape index: {0}]
  %s6 = inlined_call_operand.vmem [shape: f32[2,4,8,8], index: 6, kind: output, shape index: {1}]
  %s7 = inlined_call_operand.vmem [shape: f32[2,4,8,8], index: 7, kind: output, shape index: {2}]
  %8 = xla_tuple %s5, %s6, %s7
  %s9 = sld [smem:[#allocation0]]
  $region69: #{transformer_block.2} parent=0
    _
  %s11 = ssub.s32 1, %s9
  %s12 = scalar_select 0, %s11, %s9
  loop: start=0, step=1, limit=4
  $region2: #{transformer_block.2} parent=0 // loop_pre_header
    _
  $region3: #{transformer_block.2} parent=0 // loop_header
    %s14 = sphi 0, %s18
    %p15 = scmp.ge.s32.totalorder %s14, 4
    %s21 = sphi 0, %s33
    %s22 = sphi 0, %s29
    %s23 = sphi 0, %s21
    %s24 = sphi 0, %s22
    %s25 = sphi 0, %s23
    %s26 = sphi 0, %s24
    %s38 = sphi 0, %s40
    %s41 = sphi 0, %s38
    %s42 = sphi 0, %s41
    %s58 = sphi 0, %s42
    %s62 = sphi 0, %s62
    %s64 = sphi 0, %s62
    %s65 = sphi 0, %s64
    %s79 = sphi 0, %s65
    %s83 = sphi 0, %s83
    %s85 = sphi 0, %s83
    %s86 = sphi 0, %s85
    %s100 = sphi 0, %s86
    %s104 = sphi 0, %s104
    %s106 = sphi 0, %s104
    %s107 = sphi 0, %s106
    %s121 = sphi 0, %s107
    %s125 = sphi 0, %s125
    %s127 = sphi 0, %s125
    %s128 = sphi 0, %s127
    %s142 = sphi 0, %s128
    %s150 = sphi 0, %s152
    %s153 = sphi 0, %s150
    %s154 = sphi 0, %s153
    %s170 = sphi 0, %s154
    %s178 = sphi 0, %s180
    %s181 = sphi 0, %s178
    %s182 = sphi 0, %s181
    %s198 = sphi 0, %s182
    %s206 = sphi 0, %s208
    %s209 = sphi 0, %s206
    %s210 = sphi 0, %s209
    %s226 = sphi 0, %s210
  $region4: #{transformer_block.2} parent=0 // loop_header_branch
    %17 = sbr.rel (%p15) target = $region8
  $region5: #{transformer_block.2} parent=0 // loop_body
    %s19 = ssub.s32 %s14, 1
    %s20 = ssub.s32 %s14, 2
    %s27 = sadd.s32 1, %s22
    %p28 = scmp.ge.s32.totalorder %s27, 1
    %s29 = scalar_select %p28, 0, %s27
    %s30 = sadd.s32 1, %s21
    %s31 = scalar_select %p28, %s30, %s21
    %p32 = scmp.ge.s32.totalorder %s31, 2
    %s33 = scalar_select %p32, 0, %s31
    %s34 = ssub.s32 %s21, %s33
    %s35 = ssub.s32 %s22, %s29
    %s36 = sor.u32 %s34, %s35
    %p37 = scmp.eq.s32.totalorder %s36, 0
    %s39 = sadd.s32 %s38, 1
    %s40 = scalar_select %p37, %s38, %s39
    %p43 = pneg %p37
    %p44 = scmp.eq.s32.totalorder %s14, 1
    %p45 = por %p43, %p44
    %p46 = scmp.ne.s32.totalorder %s38, %s41
    %p47 = scmp.eq.s32.totalorder %s14, 0
    %p48 = por %p46, %p47
    %p49 = scmp.ne.s32.totalorder %s38, %s41
    %p50 = scmp.eq.s32.totalorder %s19, 1
    %p51 = por %p49, %p50
    %p52 = scmp.ne.s32.totalorder %s41, %s42
    %p53 = scmp.eq.s32.totalorder %s19, 0
    %p54 = por %p52, %p53
    %p55 = scmp.ne.s32.totalorder %s41, %s42
    %p56 = scmp.eq.s32.totalorder %s20, 1
    %p57 = por %p55, %p56
    %p59 = scmp.ne.s32.totalorder %s42, %s58
    %p60 = scmp.eq.s32.totalorder %s20, 0
    %p61 = por %p59, %p60
    %s63 = sadd.s32 %s62, 1
    %p66 = scmp.eq.s32.totalorder %s14, 1
    %p67 = scmp.ne.s32.totalorder %s62, %s64
    %p68 = scmp.eq.s32.totalorder %s14, 0
    %p69 = por %p67, %p68
    %p70 = scmp.ne.s32.totalorder %s62, %s64
    %p71 = scmp.eq.s32.totalorder %s19, 1
    %p72 = por %p70, %p71
    %p73 = scmp.ne.s32.totalorder %s64, %s65
    %p74 = scmp.eq.s32.totalorder %s19, 0
    %p75 = por %p73, %p74
    %p76 = scmp.ne.s32.totalorder %s64, %s65
    %p77 = scmp.eq.s32.totalorder %s20, 1
    %p78 = por %p76, %p77
    %p80 = scmp.ne.s32.totalorder %s65, %s79
    %p81 = scmp.eq.s32.totalorder %s20, 0
    %p82 = por %p80, %p81
    %s84 = sadd.s32 %s83, 1
    %p87 = scmp.eq.s32.totalorder %s14, 1
    %p88 = scmp.ne.s32.totalorder %s83, %s85
    %p89 = scmp.eq.s32.totalorder %s14, 0
    %p90 = por %p88, %p89
    %p91 = scmp.ne.s32.totalorder %s83, %s85
    %p92 = scmp.eq.s32.totalorder %s19, 1
    %p93 = por %p91, %p92
    %p94 = scmp.ne.s32.totalorder %s85, %s86
    %p95 = scmp.eq.s32.totalorder %s19, 0
    %p96 = por %p94, %p95
    %p97 = scmp.ne.s32.totalorder %s85, %s86
    %p98 = scmp.eq.s32.totalorder %s20, 1
    %p99 = por %p97, %p98
    %p101 = scmp.ne.s32.totalorder %s86, %s100
    %p102 = scmp.eq.s32.totalorder %s20, 0
    %p103 = por %p101, %p102
    %s105 = sadd.s32 %s104, 1
    %p108 = scmp.eq.s32.totalorder %s14, 1
    %p109 = scmp.ne.s32.totalorder %s104, %s106
    %p110 = scmp.eq.s32.totalorder %s14, 0
    %p111 = por %p109, %p110
    %p112 = scmp.ne.s32.totalorder %s104, %s106
    %p113 = scmp.eq.s32.totalorder %s19, 1
    %p114 = por %p112, %p113
    %p115 = scmp.ne.s32.totalorder %s106, %s107
    %p116 = scmp.eq.s32.totalorder %s19, 0
    %p117 = por %p115, %p116
    %p118 = scmp.ne.s32.totalorder %s106, %s107
    %p119 = scmp.eq.s32.totalorder %s20, 1
    %p120 = por %p118, %p119
    %p122 = scmp.ne.s32.totalorder %s107, %s121
    %p123 = scmp.eq.s32.totalorder %s20, 0
    %p124 = por %p122, %p123
    %s126 = sadd.s32 %s125, 1
    %p129 = scmp.eq.s32.totalorder %s14, 1
    %p130 = scmp.ne.s32.totalorder %s125, %s127
    %p131 = scmp.eq.s32.totalorder %s14, 0
    %p132 = por %p130, %p131
    %p133 = scmp.ne.s32.totalorder %s125, %s127
    %p134 = scmp.eq.s32.totalorder %s19, 1
    %p135 = por %p133, %p134
    %p136 = scmp.ne.s32.totalorder %s127, %s128
    %p137 = scmp.eq.s32.totalorder %s19, 0
    %p138 = por %p136, %p137
    %p139 = scmp.ne.s32.totalorder %s127, %s128
    %p140 = scmp.eq.s32.totalorder %s20, 1
    %p141 = por %p139, %p140
    %p143 = scmp.ne.s32.totalorder %s128, %s142
    %p144 = scmp.eq.s32.totalorder %s20, 0
    %p145 = por %p143, %p144
    %s146 = ssub.s32 %s21, %s33
    %s147 = ssub.s32 %s22, %s29
    %s148 = sor.u32 %s146, %s147
    %p149 = scmp.eq.s32.totalorder %s148, 0
    %s151 = sadd.s32 %s150, 1
    %s152 = scalar_select %p149, %s150, %s151
    %p155 = pneg %p149
    %p156 = scmp.eq.s32.totalorder %s14, 1
    %p157 = por %p155, %p156
    %p158 = scmp.ne.s32.totalorder %s150, %s153
    %p159 = scmp.eq.s32.totalorder %s14, 0
    %p160 = por %p158, %p159
    %p161 = scmp.ne.s32.totalorder %s150, %s153
    %p162 = scmp.eq.s32.totalorder %s19, 1
    %p163 = por %p161, %p162
    %p164 = scmp.ne.s32.totalorder %s153, %s154
    %p165 = scmp.eq.s32.totalorder %s19, 0
    %p166 = por %p164, %p165
    %p167 = scmp.ne.s32.totalorder %s153, %s154
    %p168 = scmp.eq.s32.totalorder %s20, 1
    %p169 = por %p167, %p168
    %p171 = scmp.ne.s32.totalorder %s154, %s170
    %p172 = scmp.eq.s32.totalorder %s20, 0
    %p173 = por %p171, %p172
    %s174 = ssub.s32 %s21, %s33
    %s175 = ssub.s32 %s22, %s29
    %s176 = sor.u32 %s174, %s175
    %p177 = scmp.eq.s32.totalorder %s176, 0
    %s179 = sadd.s32 %s178, 1
    %s180 = scalar_select %p177, %s178, %s179
    %p183 = pneg %p177
    %p184 = scmp.eq.s32.totalorder %s14, 1
    %p185 = por %p183, %p184
    %p186 = scmp.ne.s32.totalorder %s178, %s181
    %p187 = scmp.eq.s32.totalorder %s14, 0
    %p188 = por %p186, %p187
    %p189 = scmp.ne.s32.totalorder %s178, %s181
    %p190 = scmp.eq.s32.totalorder %s19, 1
    %p191 = por %p189, %p190
    %p192 = scmp.ne.s32.totalorder %s181, %s182
    %p193 = scmp.eq.s32.totalorder %s19, 0
    %p194 = por %p192, %p193
    %p195 = scmp.ne.s32.totalorder %s181, %s182
    %p196 = scmp.eq.s32.totalorder %s20, 1
    %p197 = por %p195, %p196
    %p199 = scmp.ne.s32.totalorder %s182, %s198
    %p200 = scmp.eq.s32.totalorder %s20, 0
    %p201 = por %p199, %p200
    %s202 = ssub.s32 %s21, %s33
    %s203 = ssub.s32 %s22, %s29
    %s204 = sor.u32 %s202, %s203
    %p205 = scmp.eq.s32.totalorder %s204, 0
    %s207 = sadd.s32 %s206, 1
    %s208 = scalar_select %p205, %s206, %s207
    %p211 = pneg %p205
    %p212 = scmp.eq.s32.totalorder %s14, 1
    %p213 = por %p211, %p212
    %p214 = scmp.ne.s32.totalorder %s206, %s209
    %p215 = scmp.eq.s32.totalorder %s14, 0
    %p216 = por %p214, %p215
    %p217 = scmp.ne.s32.totalorder %s206, %s209
    %p218 = scmp.eq.s32.totalorder %s19, 1
    %p219 = por %p217, %p218
    %p220 = scmp.ne.s32.totalorder %s209, %s210
    %p221 = scmp.eq.s32.totalorder %s19, 0
    %p222 = por %p220, %p221
    %p223 = scmp.ne.s32.totalorder %s209, %s210
    %p224 = scmp.eq.s32.totalorder %s20, 1
    %p225 = por %p223, %p224
    %p227 = scmp.ne.s32.totalorder %s210, %s226
    %p228 = scmp.eq.s32.totalorder %s20, 0
    %p229 = por %p227, %p228
    %p230 = scmp.le.s32.totalorder 1, %s14
    %p231 = scmp.lt.s32.totalorder %s14, 3
    %p232 = pnand %p230, %p231
    %p233 = pneg %p232
    // Predicated region
    $region9: #{transformer_block.2} parent=5 // pred_check
      _
    $region10: #{transformer_block.2} parent=5 // pred_check_branch
      %235 = sbr.rel (%p232) target = $region12
    $region11: #{transformer_block.2} parent=5 // pred_region
      %s236 = ssub.s32 %s14, 1
      // Predicated region
      $region13: #{transformer_block.2} parent=11 // pred_check
        %p237 = pneg %p75
      $region14: #{transformer_block.2} parent=11 // pred_check_branch
        %239 = sbr.rel (%p237) target = $region16
      $region15: #{transformer_block.2} parent=11 // pred_region
        _
      $region16: #{transformer_block.2} parent=11 // pred_fallthru
        _
      // Predicated region
      $region17: #{transformer_block.2} parent=11 // pred_check
        %p240 = pneg %p96
      $region18: #{transformer_block.2} parent=11 // pred_check_branch
        %242 = sbr.rel (%p240) target = $region20
      $region19: #{transformer_block.2} parent=11 // pred_region
        _
      $region20: #{transformer_block.2} parent=11 // pred_fallthru
        _
      // Predicated region
      $region21: #{transformer_block.2} parent=11 // pred_check
        %p243 = pneg %p117
      $region22: #{transformer_block.2} parent=11 // pred_check_branch
        %245 = sbr.rel (%p243) target = $region24
      $region23: #{transformer_block.2} parent=11 // pred_region
        _
      $region24: #{transformer_block.2} parent=11 // pred_fallthru
        _
      // Predicated region
      $region25: #{transformer_block.2} parent=11 // pred_check
        %p246 = pneg %p138
      $region26: #{transformer_block.2} parent=11 // pred_check_branch
        %248 = sbr.rel (%p246) target = $region28
      $region27: #{transformer_block.2} parent=11 // pred_region
        _
      $region28: #{transformer_block.2} parent=11 // pred_fallthru
        _
    $region12: #{transformer_block.2} parent=5 // pred_fallthru
      _
    %p249 = scmp.lt.s32.totalorder %s14, 2
    // Predicated region
    $region29: #{transformer_block.2} parent=5 // pred_check
      %p250 = pneg %p249
    $region30: #{transformer_block.2} parent=5 // pred_check_branch
      %252 = sbr.rel (%p250) target = $region32
    $region31: #{transformer_block.2} parent=5 // pred_region
      // Predicated region
      $region33: #{transformer_block.2} parent=31 // pred_check
        %p253 = pneg %p48
      $region34: #{transformer_block.2} parent=31 // pred_check_branch
        %255 = sbr.rel (%p253) target = $region36
      $region35: #{transformer_block.2} parent=31 // pred_region
        %p256 = scmp.lt.s32.totalorder %s21, 1
        %s257 = scalar_select %p256, %s21, 1
        %p258 = scmp.lt.s32.totalorder %s22, 0
        %s259 = scalar_select %p258, %s22, 0
        %s260 = sadd.s32 %s259, %s257
        %s261 = smul.addr %s260, 8
        %s262 = scalar_lea.vmem %s0, %s261
      $region36: #{transformer_block.2} parent=31 // pred_fallthru
        _
    $region32: #{transformer_block.2} parent=5 // pred_fallthru
      _
    %p263 = scmp.le.s32.totalorder 1, %s14
    %p264 = scmp.lt.s32.totalorder %s14, 3
    %p265 = pnand %p263, %p264
    %p266 = pneg %p265
    // Predicated region
    $region37: #{transformer_block.2} parent=5 // pred_check
      _
    $region38: #{transformer_block.2} parent=5 // pred_check_branch
      %268 = sbr.rel (%p265) target = $region40
    $region39: #{transformer_block.2} parent=5 // pred_region
      %s269 = ssub.s32 %s14, 1
      %p270 = scmp.lt.s32.totalorder %s23, 1
      %s271 = scalar_select %p270, %s23, 1
      %p272 = scmp.lt.s32.totalorder %s24, 0
      %s273 = scalar_select %p272, %s24, 0
      %s274 = sadd.s32 %s273, %s271
      %s275 = smul.addr %s274, 8
      %s276 = scalar_lea.vmem %s0, %s275
      %p277 = pneg %p54
      %p278 = pneg %p51
      %p279 = pneg %p75
      %p280 = pneg %p72
      %p281 = pneg %p96
      %p282 = pneg %p93
      %p283 = pneg %p117
      %p284 = pneg %p114
      %p285 = pneg %p138
      %p286 = pneg %p135
      %p287 = pneg %p166
      %p288 = pneg %p163
      %p289 = scmp.lt.s32.totalorder %s23, 1
      %s290 = scalar_select %p289, %s23, 1
      %p291 = scmp.lt.s32.totalorder %s24, 0
      %s292 = scalar_select %p291, %s24, 0
      %s293 = smul.addr %s290, 4
      %s294 = sadd.s32 %s292, %s293
      %s295 = smul.addr %s294, 8
      %s296 = scalar_lea.vmem %s5, %s295
      %p297 = pneg %p194
      %p298 = pneg %p191
      %p299 = scmp.lt.s32.totalorder %s23, 1
      %s300 = scalar_select %p299, %s23, 1
      %p301 = scmp.lt.s32.totalorder %s24, 0
      %s302 = scalar_select %p301, %s24, 0
      %s303 = smul.addr %s300, 4
      %s304 = sadd.s32 %s302, %s303
      %s305 = smul.addr %s304, 8
      %s306 = scalar_lea.vmem %s6, %s305
      %p307 = pneg %p222
      %p308 = pneg %p219
      %p309 = scmp.lt.s32.totalorder %s23, 1
      %s310 = scalar_select %p309, %s23, 1
      %p311 = scmp.lt.s32.totalorder %s24, 0
      %s312 = scalar_select %p311, %s24, 0
      %s313 = smul.addr %s310, 4
      %s314 = sadd.s32 %s312, %s313
      %s315 = smul.addr %s314, 8
      %s316 = scalar_lea.vmem %s7, %s315
      %p317 = scmp.lt.s32.totalorder %s23, 1
      %s318 = scalar_select %p317, %s23, 1
      %p319 = scmp.lt.s32.totalorder %s24, 0
      %s320 = scalar_select %p319, %s24, 0
      %s321 = sadd.s32 %s320, %s318
      %s322 = smul.addr %s321, 8
      %s323 = scalar_lea.vmem %s0, %s322
      %p324 = scmp.lt.s32.totalorder %s23, 1
      %s325 = scalar_select %p324, %s23, 1
      %p326 = scmp.lt.s32.totalorder %s24, 0
      %s327 = scalar_select %p326, %s24, 0
      %s328 = smul.addr %s325, 4
      %s329 = sadd.s32 %s327, %s328
      %s330 = smul.addr %s329, 8
      %s331 = scalar_lea.vmem %s5, %s330
      %p332 = scmp.lt.s32.totalorder %s23, 1
      %s333 = scalar_select %p332, %s23, 1
      %p334 = scmp.lt.s32.totalorder %s24, 0
      %s335 = scalar_select %p334, %s24, 0
      %s336 = smul.addr %s333, 4
      %s337 = sadd.s32 %s335, %s336
      %s338 = smul.addr %s337, 8
      %s339 = scalar_lea.vmem %s6, %s338
      %p340 = scmp.lt.s32.totalorder %s23, 1
      %s341 = scalar_select %p340, %s23, 1
      %p342 = scmp.lt.s32.totalorder %s24, 0
      %s343 = scalar_select %p342, %s24, 0
      %s344 = smul.addr %s341, 4
      %s345 = sadd.s32 %s343, %s344
      %s346 = smul.addr %s345, 8
      %s347 = scalar_lea.vmem %s7, %s346
      %v348 = vld [vmem:[%s323] sm:$0xff]
      %v349 = vld [vmem:[%s1] sm:$0x1]
      %v350 = vld [vmem:[%s2] sm:$0x1]
      %vm351 = vcmask 261120
      %v352 = vsel %vm351, %v348, 0.0
      %353 = vadd.xlane.f32.xlu0 %v352
      %v354 = vpop.xlane.xlu0 %353
      %v355 = vrcp.pop 32.0
      %v356 = vmul.f32 %v354, %v355
      %v357 = vsub.f32 %v348, %v356
      %v358 = vmul.f32 %v357, %v357
      %v359 = vsel %vm351, %v358, 0.0
      %360 = vadd.xlane.f32.xlu0 %v359
      %v361 = vpop.xlane.xlu0 %360
      %v362 = vmul.f32 %v361, %v355
      %v363 = vadd.f32 %v362, 1e-05
      %v364 = vrsqrt.pop %v363
      %v365 = vmul.f32 %v357, %v364
      %v367 = vlaneseq
      %v368 = vshrl.u32 %v367, 7
      %v369 = vsub.s32 0, %v368
      %v370 = vrot.slane %v349, %v369
      %v372 = vmul.f32 %v365, %v370
      %v374 = vlaneseq
      %v375 = vshrl.u32 %v374, 7
      %v376 = vsub.s32 0, %v375
      %v377 = vrot.slane %v350, %v376
      %v379 = vadd.f32 %v372, %v377
      %v380 = vld [vmem:[%s3] sm:$0xff]
      %v381 = vld [vmem:[%s3 + $0x8] sm:$0xff]
      %v382 = vld [vmem:[%s3 + $0x10] sm:$0xff]
      %v383 = vld [vmem:[%s3 + $0x18] sm:$0xff]
      %v384 = vld [vmem:[%s4] sm:$0x1]
      %v386 = vlaneseq
      %v387 = vshrl.u32 %v386, 7
      %v388 = vsub.s32 0, %v387
      %v389 = vrot.slane %v384, %v388
      %v392 = vsel %vm351, %v379, 0
      %394 = vmatprep.subr.mxu0 0.0
      %395 = vmatpush1.msra.mxu0 %v380
      %396 = vmatprep.subr.mxu0 0.0
      %397 = vmatpush1.msra.mxu0 %v381
      %398 = vmatprep.subr.mxu0 0.0
      %399 = vmatpush1.msra.mxu0 %v382
      %400 = vmatprep.subr.mxu0 0.0
      %401 = vmatpush1.msra.mxu0 %v383
      %402 = vmatprep.subr.mxu0 0.0
      %403 = vmatpush1.msra.mxu0 0.0
      %404 = vmatprep.subr.mxu0 0.0
      %405 = vmatpush1.msra.mxu0 0.0
      %406 = vmatprep.subr.mxu0 0.0
      %407 = vmatpush1.msra.mxu0 0.0
      %408 = vmatprep.subr.mxu0 0.0
      %409 = vmatpush1.msra.mxu0 0.0
      %410 = vmatprep.subr.mxu0 0.0
      %411 = vmatpush1.msra.mxu0 0.0
      %412 = vmatprep.subr.mxu0 0.0
      %413 = vmatpush1.msra.mxu0 0.0
      %414 = vmatprep.subr.mxu0 0.0
      %415 = vmatpush1.msra.mxu0 0.0
      %416 = vmatprep.subr.mxu0 0.0
      %417 = vmatpush1.msra.mxu0 0.0
      %418 = vmatprep.subr.mxu0 0.0
      %419 = vmatpush1.msra.mxu0 0.0
      %420 = vmatprep.subr.mxu0 0.0
      %421 = vmatpush1.msra.mxu0 0.0
      %422 = vmatprep.subr.mxu0 0.0
      %423 = vmatpush1.msra.mxu0 0.0
      %424 = vmatprep.subr.mxu0 0.0
      %425 = vmatpush1.msra.mxu0 0.0
      %426 = vmatprep.subr.mxu0 0.0
      %427 = vmatpush1.msra.mxu0 0.0
      %428 = vmatprep.subr.mxu0 0.0
      %429 = vmatpush1.msra.mxu0 0.0
      %430 = vmatprep.subr.mxu0 0.0
      %431 = vmatpush1.msra.mxu0 0.0
      %432 = vmatprep.subr.mxu0 0.0
      %433 = vmatpush1.msra.mxu0 0.0
      %434 = vmatprep.subr.mxu0 0.0
      %435 = vmatpush1.msra.mxu0 0.0
      %436 = vmatprep.subr.mxu0 0.0
      %437 = vmatpush1.msra.mxu0 0.0
      %438 = vmatprep.subr.mxu0 0.0
      %439 = vmatpush1.msra.mxu0 0.0
      %440 = vmatprep.subr.mxu0 0.0
      %441 = vmatpush1.msra.mxu0 0.0
      %442 = vmatprep.subr.mxu0 0.0
      %443 = vmatpush1.msra.mxu0 0.0
      %444 = vmatprep.subr.mxu0 0.0
      %445 = vmatpush1.msra.mxu0 0.0
      %446 = vmatprep.subr.mxu0 0.0
      %447 = vmatpush1.msra.mxu0 0.0
      %448 = vmatprep.subr.mxu0 0.0
      %449 = vmatpush1.msra.mxu0 0.0
      %450 = vmatprep.subr.mxu0 0.0
      %451 = vmatpush1.msra.mxu0 0.0
      %452 = vmatprep.subr.mxu0 0.0
      %453 = vmatpush1.msra.mxu0 0.0
      %454 = vmatprep.subr.mxu0 0.0
      %455 = vmatpush1.msra.mxu0 0.0
      %456 = vmatprep.subr.mxu0 0.0
      %457 = vmatpush1.msra.mxu0 0.0
      %458 = vmatprep.mubr.f32.mxu0 0.0
      %459 = vmatmul.mubr.f32.gmra.mrb[0].mxu0 %v392
      %v460 = vpop.f32.mrb[0].mxu0
      %v461 = vadd.f32 %v389, %v460
      %v462 = vpop.f32.mrb[0].mxu0
      %463 = vdwg.mxu0
      %465 = vrot.lane.b32.xlu0 %v461, 120
      %v466 = vpop.permute.xlu0 %465
      %468 = vrot.lane.b32.xlu0 %v461, 112
      %v469 = vpop.permute.xlu0 %468
      %471 = vrot.lane.b32.xlu0 %v461, 104
      %v472 = vpop.permute.xlu0 %471
      %v474 = vcombine.low %v461, %v469
      %v475 = vcombine.high %v461, %v469
      %v477 = vunpack.c.l.s4 1983009808
      %v478 = vunpack.c.0.s8 %v477
      %v479 = vlaneseq
      %v480 = vshrl.u32 %v479, 7
      %v481 = vsub.s32 %v478, %v480
      %v482 = vrot.slane %v474, %v481
      %v484 = vunpack.c.l.s4 1983009808
      %v485 = vunpack.c.0.s8 %v484
      %v486 = vlaneseq
      %v487 = vshrl.u32 %v486, 7
      %v488 = vsub.s32 %v485, %v487
      %v489 = vrot.slane %v475, %v488
      %v490 = vcombine.low %v466, %v472
      %v491 = vcombine.high %v466, %v472
      %v493 = vunpack.c.l.s4 1983009808
      %v494 = vunpack.c.0.s8 %v493
      %v495 = vlaneseq
      %v496 = vshrl.u32 %v495, 7
      %v497 = vsub.s32 %v494, %v496
      %v498 = vrot.slane %v490, %v497
      %v500 = vunpack.c.l.s4 1983009808
      %v501 = vunpack.c.0.s8 %v500
      %v502 = vlaneseq
      %v503 = vshrl.u32 %v502, 7
      %v504 = vsub.s32 %v501, %v503
      %v505 = vrot.slane %v491, %v504
      %v506 = vcombine.low %v482, %v498
      %v507 = vcombine.high %v482, %v498
      %v509 = vunpack.c.l.s4 1934713408
      %v510 = vunpack.c.0.s8 %v509
      %v511 = vlaneseq
      %v512 = vshrl.u32 %v511, 7
      %v513 = vsub.s32 %v510, %v512
      %v514 = vrot.slane %v506, %v513
      %v516 = vunpack.c.l.s4 1934713408
      %v517 = vunpack.c.0.s8 %v516
      %v518 = vlaneseq
      %v519 = vshrl.u32 %v518, 7
      %v520 = vsub.s32 %v517, %v519
      %v521 = vrot.slane %v507, %v520
      %v522 = vcombine.low %v489, %v505
      %v523 = vcombine.high %v489, %v505
      %v525 = vunpack.c.l.s4 1934713408
      %v526 = vunpack.c.0.s8 %v525
      %v527 = vlaneseq
      %v528 = vshrl.u32 %v527, 7
      %v529 = vsub.s32 %v526, %v528
      %v530 = vrot.slane %v522, %v529
      %v532 = vunpack.c.l.s4 1934713408
      %v533 = vunpack.c.0.s8 %v532
      %v534 = vlaneseq
      %v535 = vshrl.u32 %v534, 7
      %v536 = vsub.s32 %v533, %v535
      %v537 = vrot.slane %v523, %v536
      %v538 = vcombine.high %v514, 0.0
      %v539 = vcombine.high %v521, 0.0
      %v540 = vcombine.high %v530, 0.0
      %v541 = vcombine.high %v537, 0.0
      %v542 = vcombine.low %v514, %v521
      %v544 = vunpack.c.l.s4 1983009808
      %v545 = vunpack.c.0.s8 %v544
      %v546 = vlaneseq
      %v547 = vshrl.u32 %v546, 7
      %v548 = vsub.s32 %v545, %v547
      %v549 = vrot.slane %v542, %v548
      %v550 = vcombine.low %v538, %v539
      %v552 = vunpack.c.l.s4 1983009808
      %v553 = vunpack.c.0.s8 %v552
      %v554 = vlaneseq
      %v555 = vshrl.u32 %v554, 7
      %v556 = vsub.s32 %v553, %v555
      %v557 = vrot.slane %v550, %v556
      %v558 = vcombine.low %v530, %v537
      %v560 = vunpack.c.l.s4 1983009808
      %v561 = vunpack.c.0.s8 %v560
      %v562 = vlaneseq
      %v563 = vshrl.u32 %v562, 7
      %v564 = vsub.s32 %v561, %v563
      %v565 = vrot.slane %v558, %v564
      %v566 = vcombine.low %v540, %v541
      %v568 = vunpack.c.l.s4 1983009808
      %v569 = vunpack.c.0.s8 %v568
      %v570 = vlaneseq
      %v571 = vshrl.u32 %v570, 7
      %v572 = vsub.s32 %v569, %v571
      %v573 = vrot.slane %v566, %v572
      %v574 = vcombine.low %v549, %v557
      %v575 = vcombine.high %v549, %v557
      %v577 = vunpack.c.l.s4 1934713408
      %v578 = vunpack.c.0.s8 %v577
      %v579 = vlaneseq
      %v580 = vshrl.u32 %v579, 7
      %v581 = vsub.s32 %v578, %v580
      %v582 = vrot.slane %v574, %v581
      %v584 = vunpack.c.l.s4 1934713408
      %v585 = vunpack.c.0.s8 %v584
      %v586 = vlaneseq
      %v587 = vshrl.u32 %v586, 7
      %v588 = vsub.s32 %v585, %v587
      %v589 = vrot.slane %v575, %v588
      %v590 = vcombine.low %v565, %v573
      %v591 = vcombine.high %v565, %v573
      %v593 = vunpack.c.l.s4 1934713408
      %v594 = vunpack.c.0.s8 %v593
      %v595 = vlaneseq
      %v596 = vshrl.u32 %v595, 7
      %v597 = vsub.s32 %v594, %v596
      %v598 = vrot.slane %v590, %v597
      %v600 = vunpack.c.l.s4 1934713408
      %v601 = vunpack.c.0.s8 %v600
      %v602 = vlaneseq
      %v603 = vshrl.u32 %v602, 7
      %v604 = vsub.s32 %v601, %v603
      %v605 = vrot.slane %v591, %v604
      %v606 = vcombine.low %v582, %v598
      %v607 = vcombine.high %v582, %v598
      %v608 = vcombine.low %v589, %v605
      %v609 = vcombine.high %v589, %v605
      %vm610 = vcmask 64512
      %611 = vst.msk [vmem:[%s331] sm:$0xff] %vm610, %v606
      %612 = vst.msk [vmem:[%s331 + $0x8] sm:$0xff] %vm610, %v607
      %613 = vst.msk [vmem:[%s331 + $0x10] sm:$0xff] %vm610, %v608
      %614 = vst.msk [vmem:[%s331 + $0x18] sm:$0xff] %vm610, %v609
      %615 = vrot.lane.b32.xlu0 %v461, 96
      %v616 = vpop.permute.xlu0 %615
      %617 = vrot.lane.b32.xlu0 %v466, 96
      %v618 = vpop.permute.xlu0 %617
      %619 = vrot.lane.b32.xlu0 %v469, 96
      %v620 = vpop.permute.xlu0 %619
      %621 = vrot.lane.b32.xlu0 %v472, 96
      %v622 = vpop.permute.xlu0 %621
      %v627 = vcombine.low %v616, %v620
      %v628 = vcombine.high %v616, %v620
      %v630 = vunpack.c.l.s4 1983009808
      %v631 = vunpack.c.0.s8 %v630
      %v632 = vlaneseq
      %v633 = vshrl.u32 %v632, 7
      %v634 = vsub.s32 %v631, %v633
      %v635 = vrot.slane %v627, %v634
      %v637 = vunpack.c.l.s4 1983009808
      %v638 = vunpack.c.0.s8 %v637
      %v639 = vlaneseq
      %v640 = vshrl.u32 %v639, 7
      %v641 = vsub.s32 %v638, %v640
      %v642 = vrot.slane %v628, %v641
      %v643 = vcombine.low %v618, %v622
      %v644 = vcombine.high %v618, %v622
      %v646 = vunpack.c.l.s4 1983009808
      %v647 = vunpack.c.0.s8 %v646
      %v648 = vlaneseq
      %v649 = vshrl.u32 %v648, 7
      %v650 = vsub.s32 %v647, %v649
      %v651 = vrot.slane %v643, %v650
      %v653 = vunpack.c.l.s4 1983009808
      %v654 = vunpack.c.0.s8 %v653
      %v655 = vlaneseq
      %v656 = vshrl.u32 %v655, 7
      %v657 = vsub.s32 %v654, %v656
      %v658 = vrot.slane %v644, %v657
      %v659 = vcombine.low %v635, %v651
      %v660 = vcombine.high %v635, %v651
      %v662 = vunpack.c.l.s4 1934713408
      %v663 = vunpack.c.0.s8 %v662
      %v664 = vlaneseq
      %v665 = vshrl.u32 %v664, 7
      %v666 = vsub.s32 %v663, %v665
      %v667 = vrot.slane %v659, %v666
      %v669 = vunpack.c.l.s4 1934713408
      %v670 = vunpack.c.0.s8 %v669
      %v671 = vlaneseq
      %v672 = vshrl.u32 %v671, 7
      %v673 = vsub.s32 %v670, %v672
      %v674 = vrot.slane %v660, %v673
      %v675 = vcombine.low %v642, %v658
      %v676 = vcombine.high %v642, %v658
      %v678 = vunpack.c.l.s4 1934713408
      %v679 = vunpack.c.0.s8 %v678
      %v680 = vlaneseq
      %v681 = vshrl.u32 %v680, 7
      %v682 = vsub.s32 %v679, %v681
      %v683 = vrot.slane %v675, %v682
      %v685 = vunpack.c.l.s4 1934713408
      %v686 = vunpack.c.0.s8 %v685
      %v687 = vlaneseq
      %v688 = vshrl.u32 %v687, 7
      %v689 = vsub.s32 %v686, %v688
      %v690 = vrot.slane %v676, %v689
      %v691 = vcombine.high %v667, 0.0
      %v692 = vcombine.high %v674, 0.0
      %v693 = vcombine.high %v683, 0.0
      %v694 = vcombine.high %v690, 0.0
      %v695 = vcombine.low %v667, %v674
      %v697 = vunpack.c.l.s4 1983009808
      %v698 = vunpack.c.0.s8 %v697
      %v699 = vlaneseq
      %v700 = vshrl.u32 %v699, 7
      %v701 = vsub.s32 %v698, %v700
      %v702 = vrot.slane %v695, %v701
      %v703 = vcombine.low %v691, %v692
      %v705 = vunpack.c.l.s4 1983009808
      %v706 = vunpack.c.0.s8 %v705
      %v707 = vlaneseq
      %v708 = vshrl.u32 %v707, 7
      %v709 = vsub.s32 %v706, %v708
      %v710 = vrot.slane %v703, %v709
      %v711 = vcombine.low %v683, %v690
      %v713 = vunpack.c.l.s4 1983009808
      %v714 = vunpack.c.0.s8 %v713
      %v715 = vlaneseq
      %v716 = vshrl.u32 %v715, 7
      %v717 = vsub.s32 %v714, %v716
      %v718 = vrot.slane %v711, %v717
      %v719 = vcombine.low %v693, %v694
      %v721 = vunpack.c.l.s4 1983009808
      %v722 = vunpack.c.0.s8 %v721
      %v723 = vlaneseq
      %v724 = vshrl.u32 %v723, 7
      %v725 = vsub.s32 %v722, %v724
      %v726 = vrot.slane %v719, %v725
      %v727 = vcombine.low %v702, %v710
      %v728 = vcombine.high %v702, %v710
      %v730 = vunpack.c.l.s4 1934713408
      %v731 = vunpack.c.0.s8 %v730
      %v732 = vlaneseq
      %v733 = vshrl.u32 %v732, 7
      %v734 = vsub.s32 %v731, %v733
      %v735 = vrot.slane %v727, %v734
      %v737 = vunpack.c.l.s4 1934713408
      %v738 = vunpack.c.0.s8 %v737
      %v739 = vlaneseq
      %v740 = vshrl.u32 %v739, 7
      %v741 = vsub.s32 %v738, %v740
      %v742 = vrot.slane %v728, %v741
      %v743 = vcombine.low %v718, %v726
      %v744 = vcombine.high %v718, %v726
      %v746 = vunpack.c.l.s4 1934713408
      %v747 = vunpack.c.0.s8 %v746
      %v748 = vlaneseq
      %v749 = vshrl.u32 %v748, 7
      %v750 = vsub.s32 %v747, %v749
      %v751 = vrot.slane %v743, %v750
      %v753 = vunpack.c.l.s4 1934713408
      %v754 = vunpack.c.0.s8 %v753
      %v755 = vlaneseq
      %v756 = vshrl.u32 %v755, 7
      %v757 = vsub.s32 %v754, %v756
      %v758 = vrot.slane %v744, %v757
      %v759 = vcombine.low %v735, %v751
      %v760 = vcombine.high %v735, %v751
      %v761 = vcombine.low %v742, %v758
      %v762 = vcombine.high %v742, %v758
      %763 = vst.msk [vmem:[%s339] sm:$0xff] %vm610, %v759
      %764 = vst.msk [vmem:[%s339 + $0x8] sm:$0xff] %vm610, %v760
      %765 = vst.msk [vmem:[%s339 + $0x10] sm:$0xff] %vm610, %v761
      %766 = vst.msk [vmem:[%s339 + $0x18] sm:$0xff] %vm610, %v762
      %767 = vrot.lane.b32.xlu0 %v461, 64
      %v768 = vpop.permute.xlu0 %767
      %769 = vrot.lane.b32.xlu0 %v466, 64
      %v770 = vpop.permute.xlu0 %769
      %771 = vrot.lane.b32.xlu0 %v469, 64
      %v772 = vpop.permute.xlu0 %771
      %773 = vrot.lane.b32.xlu0 %v472, 64
      %v774 = vpop.permute.xlu0 %773
      %v779 = vcombine.low %v768, %v772
      %v780 = vcombine.high %v768, %v772
      %v782 = vunpack.c.l.s4 1983009808
      %v783 = vunpack.c.0.s8 %v782
      %v784 = vlaneseq
      %v785 = vshrl.u32 %v784, 7
      %v786 = vsub.s32 %v783, %v785
      %v787 = vrot.slane %v779, %v786
      %v789 = vunpack.c.l.s4 1983009808
      %v790 = vunpack.c.0.s8 %v789
      %v791 = vlaneseq
      %v792 = vshrl.u32 %v791, 7
      %v793 = vsub.s32 %v790, %v792
      %v794 = vrot.slane %v780, %v793
      %v795 = vcombine.low %v770, %v774
      %v796 = vcombine.high %v770, %v774
      %v798 = vunpack.c.l.s4 1983009808
      %v799 = vunpack.c.0.s8 %v798
      %v800 = vlaneseq
      %v801 = vshrl.u32 %v800, 7
      %v802 = vsub.s32 %v799, %v801
      %v803 = vrot.slane %v795, %v802
      %v805 = vunpack.c.l.s4 1983009808
      %v806 = vunpack.c.0.s8 %v805
      %v807 = vlaneseq
      %v808 = vshrl.u32 %v807, 7
      %v809 = vsub.s32 %v806, %v808
      %v810 = vrot.slane %v796, %v809
      %v811 = vcombine.low %v787, %v803
      %v812 = vcombine.high %v787, %v803
      %v814 = vunpack.c.l.s4 1934713408
      %v815 = vunpack.c.0.s8 %v814
      %v816 = vlaneseq
      %v817 = vshrl.u32 %v816, 7
      %v818 = vsub.s32 %v815, %v817
      %v819 = vrot.slane %v811, %v818
      %v821 = vunpack.c.l.s4 1934713408
      %v822 = vunpack.c.0.s8 %v821
      %v823 = vlaneseq
      %v824 = vshrl.u32 %v823, 7
      %v825 = vsub.s32 %v822, %v824
      %v826 = vrot.slane %v812, %v825
      %v827 = vcombine.low %v794, %v810
      %v828 = vcombine.high %v794, %v810
      %v830 = vunpack.c.l.s4 1934713408
      %v831 = vunpack.c.0.s8 %v830
      %v832 = vlaneseq
      %v833 = vshrl.u32 %v832, 7
      %v834 = vsub.s32 %v831, %v833
      %v835 = vrot.slane %v827, %v834
      %v837 = vunpack.c.l.s4 1934713408
      %v838 = vunpack.c.0.s8 %v837
      %v839 = vlaneseq
      %v840 = vshrl.u32 %v839, 7
      %v841 = vsub.s32 %v838, %v840
      %v842 = vrot.slane %v828, %v841
      %v843 = vcombine.high %v819, 0.0
      %v844 = vcombine.high %v826, 0.0
      %v845 = vcombine.high %v835, 0.0
      %v846 = vcombine.high %v842, 0.0
      %v847 = vcombine.low %v819, %v826
      %v849 = vunpack.c.l.s4 1983009808
      %v850 = vunpack.c.0.s8 %v849
      %v851 = vlaneseq
      %v852 = vshrl.u32 %v851, 7
      %v853 = vsub.s32 %v850, %v852
      %v854 = vrot.slane %v847, %v853
      %v855 = vcombine.low %v843, %v844
      %v857 = vunpack.c.l.s4 1983009808
      %v858 = vunpack.c.0.s8 %v857
      %v859 = vlaneseq
      %v860 = vshrl.u32 %v859, 7
      %v861 = vsub.s32 %v858, %v860
      %v862 = vrot.slane %v855, %v861
      %v863 = vcombine.low %v835, %v842
      %v865 = vunpack.c.l.s4 1983009808
      %v866 = vunpack.c.0.s8 %v865
      %v867 = vlaneseq
      %v868 = vshrl.u32 %v867, 7
      %v869 = vsub.s32 %v866, %v868
      %v870 = vrot.slane %v863, %v869
      %v871 = vcombine.low %v845, %v846
      %v873 = vunpack.c.l.s4 1983009808
      %v874 = vunpack.c.0.s8 %v873
      %v875 = vlaneseq
      %v876 = vshrl.u32 %v875, 7
      %v877 = vsub.s32 %v874, %v876
      %v878 = vrot.slane %v871, %v877
      %v879 = vcombine.low %v854, %v862
      %v880 = vcombine.high %v854, %v862
      %v882 = vunpack.c.l.s4 1934713408
      %v883 = vunpack.c.0.s8 %v882
      %v884 = vlaneseq
      %v885 = vshrl.u32 %v884, 7
      %v886 = vsub.s32 %v883, %v885
      %v887 = vrot.slane %v879, %v886
      %v889 = vunpack.c.l.s4 1934713408
      %v890 = vunpack.c.0.s8 %v889
      %v891 = vlaneseq
      %v892 = vshrl.u32 %v891, 7
      %v893 = vsub.s32 %v890, %v892
      %v894 = vrot.slane %v880, %v893
      %v895 = vcombine.low %v870, %v878
      %v896 = vcombine.high %v870, %v878
      %v898 = vunpack.c.l.s4 1934713408
      %v899 = vunpack.c.0.s8 %v898
      %v900 = vlaneseq
      %v901 = vshrl.u32 %v900, 7
      %v902 = vsub.s32 %v899, %v901
      %v903 = vrot.slane %v895, %v902
      %v905 = vunpack.c.l.s4 1934713408
      %v906 = vunpack.c.0.s8 %v905
      %v907 = vlaneseq
      %v908 = vshrl.u32 %v907, 7
      %v909 = vsub.s32 %v906, %v908
      %v910 = vrot.slane %v896, %v909
      %v911 = vcombine.low %v887, %v903
      %v912 = vcombine.high %v887, %v903
      %v913 = vcombine.low %v894, %v910
      %v914 = vcombine.high %v894, %v910
      %915 = vst.msk [vmem:[%s347] sm:$0xff] %vm610, %v911
      %916 = vst.msk [vmem:[%s347 + $0x8] sm:$0xff] %vm610, %v912
      %917 = vst.msk [vmem:[%s347 + $0x10] sm:$0xff] %vm610, %v913
      %918 = vst.msk [vmem:[%s347 + $0x18] sm:$0xff] %vm610, %v914
      %p919 = scmp.lt.s32.totalorder %s23, 1
      %s920 = scalar_select %p919, %s23, 1
      %p921 = scmp.lt.s32.totalorder %s24, 0
      %s922 = scalar_select %p921, %s24, 0
      %s923 = smul.addr %s920, 4
      %s924 = sadd.s32 %s922, %s923
      %s925 = smul.addr %s924, 8
      %s926 = scalar_lea.vmem %s5, %s925
      %p927 = scmp.lt.s32.totalorder %s23, 1
      %s928 = scalar_select %p927, %s23, 1
      %p929 = scmp.lt.s32.totalorder %s24, 0
      %s930 = scalar_select %p929, %s24, 0
      %s931 = smul.addr %s928, 4
      %s932 = sadd.s32 %s930, %s931
      %s933 = smul.addr %s932, 8
      %s934 = scalar_lea.vmem %s6, %s933
      %p935 = scmp.lt.s32.totalorder %s23, 1
      %s936 = scalar_select %p935, %s23, 1
      %p937 = scmp.lt.s32.totalorder %s24, 0
      %s938 = scalar_select %p937, %s24, 0
      %s939 = smul.addr %s936, 4
      %s940 = sadd.s32 %s938, %s939
      %s941 = smul.addr %s940, 8
      %s942 = scalar_lea.vmem %s7, %s941
      // Predicated region
      $region41: #{transformer_block.2} parent=39 // pred_check
        %p943 = pneg %p163
      $region42: #{transformer_block.2} parent=39 // pred_check_branch
        %945 = sbr.rel (%p943) target = $region44
      $region43: #{transformer_block.2} parent=39 // pred_region
        _
      $region44: #{transformer_block.2} parent=39 // pred_fallthru
        _
      // Predicated region
      $region45: #{transformer_block.2} parent=39 // pred_check
        %p946 = pneg %p191
      $region46: #{transformer_block.2} parent=39 // pred_check_branch
        %948 = sbr.rel (%p946) target = $region48
      $region47: #{transformer_block.2} parent=39 // pred_region
        _
      $region48: #{transformer_block.2} parent=39 // pred_fallthru
        _
      // Predicated region
      $region49: #{transformer_block.2} parent=39 // pred_check
        %p949 = pneg %p219
      $region50: #{transformer_block.2} parent=39 // pred_check_branch
        %951 = sbr.rel (%p949) target = $region52
      $region51: #{transformer_block.2} parent=39 // pred_region
        _
      $region52: #{transformer_block.2} parent=39 // pred_fallthru
        _
    $region40: #{transformer_block.2} parent=5 // pred_fallthru
      _
    %p952 = scmp.le.s32.totalorder 2, %s14
    // Predicated region
    $region53: #{transformer_block.2} parent=5 // pred_check
      %p953 = pneg %p952
    $region54: #{transformer_block.2} parent=5 // pred_check_branch
      %955 = sbr.rel (%p953) target = $region56
    $region55: #{transformer_block.2} parent=5 // pred_region
      %s956 = ssub.s32 %s14, 2
      // Predicated region
      $region57: #{transformer_block.2} parent=55 // pred_check
        %p957 = pneg %p169
      $region58: #{transformer_block.2} parent=55 // pred_check_branch
        %959 = sbr.rel (%p957) target = $region60
      $region59: #{transformer_block.2} parent=55 // pred_region
        %p960 = scmp.lt.s32.totalorder %s25, 1
        %s961 = scalar_select %p960, %s25, 1
        %p962 = scmp.lt.s32.totalorder %s26, 0
        %s963 = scalar_select %p962, %s26, 0
        %s964 = smul.addr %s961, 4
        %s965 = sadd.s32 %s963, %s964
        %s966 = smul.addr %s965, 8
        %s967 = scalar_lea.vmem %s5, %s966
      $region60: #{transformer_block.2} parent=55 // pred_fallthru
        _
      // Predicated region
      $region61: #{transformer_block.2} parent=55 // pred_check
        %p968 = pneg %p197
      $region62: #{transformer_block.2} parent=55 // pred_check_branch
        %970 = sbr.rel (%p968) target = $region64
      $region63: #{transformer_block.2} parent=55 // pred_region
        %p971 = scmp.lt.s32.totalorder %s25, 1
        %s972 = scalar_select %p971, %s25, 1
        %p973 = scmp.lt.s32.totalorder %s26, 0
        %s974 = scalar_select %p973, %s26, 0
        %s975 = smul.addr %s972, 4
        %s976 = sadd.s32 %s974, %s975
        %s977 = smul.addr %s976, 8
        %s978 = scalar_lea.vmem %s6, %s977
      $region64: #{transformer_block.2} parent=55 // pred_fallthru
        _
      // Predicated region
      $region65: #{transformer_block.2} parent=55 // pred_check
        %p979 = pneg %p225
      $region66: #{transformer_block.2} parent=55 // pred_check_branch
        %981 = sbr.rel (%p979) target = $region68
      $region67: #{transformer_block.2} parent=55 // pred_region
        %p982 = scmp.lt.s32.totalorder %s25, 1
        %s983 = scalar_select %p982, %s25, 1
        %p984 = scmp.lt.s32.totalorder %s26, 0
        %s985 = scalar_select %p984, %s26, 0
        %s986 = smul.addr %s983, 4
        %s987 = sadd.s32 %s985, %s986
        %s988 = smul.addr %s987, 8
        %s989 = scalar_lea.vmem %s7, %s988
      $region68: #{transformer_block.2} parent=55 // pred_fallthru
        _
    $region56: #{transformer_block.2} parent=5 // pred_fallthru
      _
  $region6: #{transformer_block.2} parent=0 // loop_footer
    %s18 = sadd.s32 1, %s14
  $region7: #{transformer_block.2} parent=0 // loop_footer_branch
    %13 = sbr.rel target = $region3
  $region8: #{transformer_block.2} parent=0 // loop_exit
    _

// kernel: transformer_block.3
$region0: #{transformer_block.3}
  #allocation0 [shape = 'u32[]', space=smem, size = 0x4, offset = 0x4, fixed_abs, tag = 'smem constant byte address 0x4 - core index']
  #allocation1 [shape = 'u32[144,128]{1,0:T(1,128)}', space=vmem, size = 0x12000, scoped, tag = 'internal scratch']
  #allocation2 [shape = 'f32[4,8,1]{2,1,0:T(8,128)}', space=vmem, size = 0x4000, scoped, tag = 'scratch operand']
  #allocation3 [shape = 'f32[4,8,1]{2,1,0:T(8,128)}', space=vmem, size = 0x4000, scoped, tag = 'scratch operand']
  #allocation4 [shape = 'f32[4,8,8]{2,1,0:T(8,128)}', space=vmem, size = 0x4000, scoped, tag = 'scratch operand']
  %s0 = inlined_call_operand.vmem [shape: f32[2,8,32], index: 0, kind: input, shape index: {}]
  %s1 = inlined_call_operand.vmem [shape: f32[2,4,8,8], index: 1, kind: input, shape index: {}]
  %s2 = inlined_call_operand.vmem [shape: f32[2,4,8,8], index: 2, kind: input, shape index: {}]
  %s3 = inlined_call_operand.vmem [shape: f32[2,4,8,8], index: 3, kind: input, shape index: {}]
  %s4 = inlined_call_operand.vmem [shape: f32[4,8,32], index: 4, kind: input, shape index: {}]
  %s5 = inlined_call_operand.vmem [shape: f32[1,32], index: 5, kind: input, shape index: {}]
  %s6 = inlined_call_operand.vmem [shape: f32[1,32], index: 6, kind: input, shape index: {}]
  %s7 = inlined_call_operand.vmem [shape: f32[1,32], index: 7, kind: input, shape index: {}]
  %s8 = inlined_call_operand.vmem [shape: f32[32,128], index: 8, kind: input, shape index: {}]
  %s9 = inlined_call_operand.vmem [shape: f32[1,128], index: 9, kind: input, shape index: {}]
  %s10 = inlined_call_operand.vmem [shape: f32[128,32], index: 10, kind: input, shape index: {}]
  %s11 = inlined_call_operand.vmem [shape: f32[1,32], index: 11, kind: input, shape index: {}]
  %s12 = inlined_call_operand.hbm [shape: f32[2,8,32], index: 12, kind: output, shape index: {}]
  %s13 = sld [smem:[#allocation0]]
  $region89: #{transformer_block.3} parent=0
    _
  %s15 = ssub.s32 1, %s13
  %s16 = scalar_select 0, %s15, %s13
  $region1: #{transformer_block.3} parent=0
    #allocation5 [shape = 'u8[8192]{0}', space=vmem, size = 0x2000, scoped, tag = 'output window, operand 0']
    #allocation6 [shape = 's32[2]{0}', space=sflag, size = 0x8, scoped, tag = 'scoped memory for transformer_block.3']
    %17 = vsyncpa [#allocation6], 0
    %s18 = scalar_lea.sflag [#allocation6], 1
    %19 = vsyncpa %s18, 0
    loop: start=0, step=1, limit=4
    $region2: #{transformer_block.3} parent=1 // loop_pre_header
      _
    $region3: #{transformer_block.3} parent=1 // loop_header
      %s21 = sphi 0, %s25
      %p22 = scmp.ge.s32.totalorder %s21, 4
      %s28 = sphi 0, %s47
      %s29 = sphi 0, %s43
      %s30 = sphi 0, %s39
      %s31 = sphi 0, %s28
      %s32 = sphi 0, %s29
      %s33 = sphi 0, %s30
      %s34 = sphi 0, %s31
      %s35 = sphi 0, %s32
      %s36 = sphi 0, %s33
      %s52 = sphi 0, %s54
      %s55 = sphi 0, %s52
      %s56 = sphi 0, %s55
      %s72 = sphi 0, %s56
      %s80 = sphi 0, %s82
      %s83 = sphi 0, %s80
      %s84 = sphi 0, %s83
      %s100 = sphi 0, %s84
      %s108 = sphi 0, %s110
      %s111 = sphi 0, %s108
      %s112 = sphi 0, %s111
      %s128 = sphi 0, %s112
      %s136 = sphi 0, %s138
      %s139 = sphi 0, %s136
      %s140 = sphi 0, %s139
      %s156 = sphi 0, %s140
      %s160 = sphi 0, %s160
      %s162 = sphi 0, %s160
      %s163 = sphi 0, %s162
      %s177 = sphi 0, %s163
      %s181 = sphi 0, %s181
      %s183 = sphi 0, %s181
      %s184 = sphi 0, %s183
      %s198 = sphi 0, %s184
      %s202 = sphi 0, %s202
      %s204 = sphi 0, %s202
      %s205 = sphi 0, %s204
      %s219 = sphi 0, %s205
      %s223 = sphi 0, %s223
      %s225 = sphi 0, %s223
      %s226 = sphi 0, %s225
      %s240 = sphi 0, %s226
      %s244 = sphi 0, %s244
      %s246 = sphi 0, %s244
      %s247 = sphi 0, %s246
      %s261 = sphi 0, %s247
      %s265 = sphi 0, %s265
      %s267 = sphi 0, %s265
      %s268 = sphi 0, %s267
      %s282 = sphi 0, %s268
      %s286 = sphi 0, %s286
      %s288 = sphi 0, %s286
      %s289 = sphi 0, %s288
      %s303 = sphi 0, %s289
      %s307 = sphi 0, %s307
      %s309 = sphi 0, %s307
      %s310 = sphi 0, %s309
      %s324 = sphi 0, %s310
      %s332 = sphi 0, %s334
      %s335 = sphi 0, %s332
      %s336 = sphi 0, %s335
      %s352 = sphi 0, %s336
    $region4: #{transformer_block.3} parent=1 // loop_header_branch
      %24 = sbr.rel (%p22) target = $region8
    $region5: #{transformer_block.3} parent=1 // loop_body
      %s26 = ssub.s32 %s21, 1
      %s27 = ssub.s32 %s21, 2
      %s37 = sadd.s32 1, %s30
      %p38 = scmp.ge.s32.totalorder %s37, 1
      %s39 = scalar_select %p38, 0, %s37
      %s40 = sadd.s32 1, %s29
      %s41 = scalar_select %p38, %s40, %s29
      %p42 = scmp.ge.s32.totalorder %s41, 1
      %s43 = scalar_select %p42, 0, %s41
      %s44 = sadd.s32 1, %s28
      %s45 = scalar_select %p42, %s44, %s28
      %p46 = scmp.ge.s32.totalorder %s45, 2
      %s47 = scalar_select %p46, 0, %s45
      %s48 = ssub.s32 %s28, %s47
      %s49 = ssub.s32 %s29, %s43
      %s50 = sor.u32 %s48, %s49
      %p51 = scmp.eq.s32.totalorder %s50, 0
      %s53 = sadd.s32 %s52, 1
      %s54 = scalar_select %p51, %s52, %s53
      %p57 = pneg %p51
      %p58 = scmp.eq.s32.totalorder %s21, 1
      %p59 = por %p57, %p58
      %p60 = scmp.ne.s32.totalorder %s52, %s55
      %p61 = scmp.eq.s32.totalorder %s21, 0
      %p62 = por %p60, %p61
      %p63 = scmp.ne.s32.totalorder %s52, %s55
      %p64 = scmp.eq.s32.totalorder %s26, 1
      %p65 = por %p63, %p64
      %p66 = scmp.ne.s32.totalorder %s55, %s56
      %p67 = scmp.eq.s32.totalorder %s26, 0
      %p68 = por %p66, %p67
      %p69 = scmp.ne.s32.totalorder %s55, %s56
      %p70 = scmp.eq.s32.totalorder %s27, 1
      %p71 = por %p69, %p70
      %p73 = scmp.ne.s32.totalorder %s56, %s72
      %p74 = scmp.eq.s32.totalorder %s27, 0
      %p75 = por %p73, %p74
      %s76 = ssub.s32 %s28, %s47
      %s77 = ssub.s32 %s29, %s43
      %s78 = sor.u32 %s76, %s77
      %p79 = scmp.eq.s32.totalorder %s78, 0
      %s81 = sadd.s32 %s80, 1
      %s82 = scalar_select %p79, %s80, %s81
      %p85 = pneg %p79
      %p86 = scmp.eq.s32.totalorder %s21, 1
      %p87 = por %p85, %p86
      %p88 = scmp.ne.s32.totalorder %s80, %s83
      %p89 = scmp.eq.s32.totalorder %s21, 0
      %p90 = por %p88, %p89
      %p91 = scmp.ne.s32.totalorder %s80, %s83
      %p92 = scmp.eq.s32.totalorder %s26, 1
      %p93 = por %p91, %p92
      %p94 = scmp.ne.s32.totalorder %s83, %s84
      %p95 = scmp.eq.s32.totalorder %s26, 0
      %p96 = por %p94, %p95
      %p97 = scmp.ne.s32.totalorder %s83, %s84
      %p98 = scmp.eq.s32.totalorder %s27, 1
      %p99 = por %p97, %p98
      %p101 = scmp.ne.s32.totalorder %s84, %s100
      %p102 = scmp.eq.s32.totalorder %s27, 0
      %p103 = por %p101, %p102
      %s104 = ssub.s32 %s28, %s47
      %s105 = ssub.s32 %s30, %s39
      %s106 = sor.u32 %s104, %s105
      %p107 = scmp.eq.s32.totalorder %s106, 0
      %s109 = sadd.s32 %s108, 1
      %s110 = scalar_select %p107, %s108, %s109
      %p113 = pneg %p107
      %p114 = scmp.eq.s32.totalorder %s21, 1
      %p115 = por %p113, %p114
      %p116 = scmp.ne.s32.totalorder %s108, %s111
      %p117 = scmp.eq.s32.totalorder %s21, 0
      %p118 = por %p116, %p117
      %p119 = scmp.ne.s32.totalorder %s108, %s111
      %p120 = scmp.eq.s32.totalorder %s26, 1
      %p121 = por %p119, %p120
      %p122 = scmp.ne.s32.totalorder %s111, %s112
      %p123 = scmp.eq.s32.totalorder %s26, 0
      %p124 = por %p122, %p123
      %p125 = scmp.ne.s32.totalorder %s111, %s112
      %p126 = scmp.eq.s32.totalorder %s27, 1
      %p127 = por %p125, %p126
      %p129 = scmp.ne.s32.totalorder %s112, %s128
      %p130 = scmp.eq.s32.totalorder %s27, 0
      %p131 = por %p129, %p130
      %s132 = ssub.s32 %s28, %s47
      %s133 = ssub.s32 %s30, %s39
      %s134 = sor.u32 %s132, %s133
      %p135 = scmp.eq.s32.totalorder %s134, 0
      %s137 = sadd.s32 %s136, 1
      %s138 = scalar_select %p135, %s136, %s137
      %p141 = pneg %p135
      %p142 = scmp.eq.s32.totalorder %s21, 1
      %p143 = por %p141, %p142
      %p144 = scmp.ne.s32.totalorder %s136, %s139
      %p145 = scmp.eq.s32.totalorder %s21, 0
      %p146 = por %p144, %p145
      %p147 = scmp.ne.s32.totalorder %s136, %s139
      %p148 = scmp.eq.s32.totalorder %s26, 1
      %p149 = por %p147, %p148
      %p150 = scmp.ne.s32.totalorder %s139, %s140
      %p151 = scmp.eq.s32.totalorder %s26, 0
      %p152 = por %p150, %p151
      %p153 = scmp.ne.s32.totalorder %s139, %s140
      %p154 = scmp.eq.s32.totalorder %s27, 1
      %p155 = por %p153, %p154
      %p157 = scmp.ne.s32.totalorder %s140, %s156
      %p158 = scmp.eq.s32.totalorder %s27, 0
      %p159 = por %p157, %p158
      %s161 = sadd.s32 %s160, 1
      %p164 = scmp.eq.s32.totalorder %s21, 1
      %p165 = scmp.ne.s32.totalorder %s160, %s162
      %p166 = scmp.eq.s32.totalorder %s21, 0
      %p167 = por %p165, %p166
      %p168 = scmp.ne.s32.totalorder %s160, %s162
      %p169 = scmp.eq.s32.totalorder %s26, 1
      %p170 = por %p168, %p169
      %p171 = scmp.ne.s32.totalorder %s162, %s163
      %p172 = scmp.eq.s32.totalorder %s26, 0
      %p173 = por %p171, %p172
      %p174 = scmp.ne.s32.totalorder %s162, %s163
      %p175 = scmp.eq.s32.totalorder %s27, 1
      %p176 = por %p174, %p175
      %p178 = scmp.ne.s32.totalorder %s163, %s177
      %p179 = scmp.eq.s32.totalorder %s27, 0
      %p180 = por %p178, %p179
      %s182 = sadd.s32 %s181, 1
      %p185 = scmp.eq.s32.totalorder %s21, 1
      %p186 = scmp.ne.s32.totalorder %s181, %s183
      %p187 = scmp.eq.s32.totalorder %s21, 0
      %p188 = por %p186, %p187
      %p189 = scmp.ne.s32.totalorder %s181, %s183
      %p190 = scmp.eq.s32.totalorder %s26, 1
      %p191 = por %p189, %p190
      %p192 = scmp.ne.s32.totalorder %s183, %s184
      %p193 = scmp.eq.s32.totalorder %s26, 0
      %p194 = por %p192, %p193
      %p195 = scmp.ne.s32.totalorder %s183, %s184
      %p196 = scmp.eq.s32.totalorder %s27, 1
      %p197 = por %p195, %p196
      %p199 = scmp.ne.s32.totalorder %s184, %s198
      %p200 = scmp.eq.s32.totalorder %s27, 0
      %p201 = por %p199, %p200
      %s203 = sadd.s32 %s202, 1
      %p206 = scmp.eq.s32.totalorder %s21, 1
      %p207 = scmp.ne.s32.totalorder %s202, %s204
      %p208 = scmp.eq.s32.totalorder %s21, 0
      %p209 = por %p207, %p208
      %p210 = scmp.ne.s32.totalorder %s202, %s204
      %p211 = scmp.eq.s32.totalorder %s26, 1
      %p212 = por %p210, %p211
      %p213 = scmp.ne.s32.totalorder %s204, %s205
      %p214 = scmp.eq.s32.totalorder %s26, 0
      %p215 = por %p213, %p214
      %p216 = scmp.ne.s32.totalorder %s204, %s205
      %p217 = scmp.eq.s32.totalorder %s27, 1
      %p218 = por %p216, %p217
      %p220 = scmp.ne.s32.totalorder %s205, %s219
      %p221 = scmp.eq.s32.totalorder %s27, 0
      %p222 = por %p220, %p221
      %s224 = sadd.s32 %s223, 1
      %p227 = scmp.eq.s32.totalorder %s21, 1
      %p228 = scmp.ne.s32.totalorder %s223, %s225
      %p229 = scmp.eq.s32.totalorder %s21, 0
      %p230 = por %p228, %p229
      %p231 = scmp.ne.s32.totalorder %s223, %s225
      %p232 = scmp.eq.s32.totalorder %s26, 1
      %p233 = por %p231, %p232
      %p234 = scmp.ne.s32.totalorder %s225, %s226
      %p235 = scmp.eq.s32.totalorder %s26, 0
      %p236 = por %p234, %p235
      %p237 = scmp.ne.s32.totalorder %s225, %s226
      %p238 = scmp.eq.s32.totalorder %s27, 1
      %p239 = por %p237, %p238
      %p241 = scmp.ne.s32.totalorder %s226, %s240
      %p242 = scmp.eq.s32.totalorder %s27, 0
      %p243 = por %p241, %p242
      %s245 = sadd.s32 %s244, 1
      %p248 = scmp.eq.s32.totalorder %s21, 1
      %p249 = scmp.ne.s32.totalorder %s244, %s246
      %p250 = scmp.eq.s32.totalorder %s21, 0
      %p251 = por %p249, %p250
      %p252 = scmp.ne.s32.totalorder %s244, %s246
      %p253 = scmp.eq.s32.totalorder %s26, 1
      %p254 = por %p252, %p253
      %p255 = scmp.ne.s32.totalorder %s246, %s247
      %p256 = scmp.eq.s32.totalorder %s26, 0
      %p257 = por %p255, %p256
      %p258 = scmp.ne.s32.totalorder %s246, %s247
      %p259 = scmp.eq.s32.totalorder %s27, 1
      %p260 = por %p258, %p259
      %p262 = scmp.ne.s32.totalorder %s247, %s261
      %p263 = scmp.eq.s32.totalorder %s27, 0
      %p264 = por %p262, %p263
      %s266 = sadd.s32 %s265, 1
      %p269 = scmp.eq.s32.totalorder %s21, 1
      %p270 = scmp.ne.s32.totalorder %s265, %s267
      %p271 = scmp.eq.s32.totalorder %s21, 0
      %p272 = por %p270, %p271
      %p273 = scmp.ne.s32.totalorder %s265, %s267
      %p274 = scmp.eq.s32.totalorder %s26, 1
      %p275 = por %p273, %p274
      %p276 = scmp.ne.s32.totalorder %s267, %s268
      %p277 = scmp.eq.s32.totalorder %s26, 0
      %p278 = por %p276, %p277
      %p279 = scmp.ne.s32.totalorder %s267, %s268
      %p280 = scmp.eq.s32.totalorder %s27, 1
      %p281 = por %p279, %p280
      %p283 = scmp.ne.s32.totalorder %s268, %s282
      %p284 = scmp.eq.s32.totalorder %s27, 0
      %p285 = por %p283, %p284
      %s287 = sadd.s32 %s286, 1
      %p290 = scmp.eq.s32.totalorder %s21, 1
      %p291 = scmp.ne.s32.totalorder %s286, %s288
      %p292 = scmp.eq.s32.totalorder %s21, 0
      %p293 = por %p291, %p292
      %p294 = scmp.ne.s32.totalorder %s286, %s288
      %p295 = scmp.eq.s32.totalorder %s26, 1
      %p296 = por %p294, %p295
      %p297 = scmp.ne.s32.totalorder %s288, %s289
      %p298 = scmp.eq.s32.totalorder %s26, 0
      %p299 = por %p297, %p298
      %p300 = scmp.ne.s32.totalorder %s288, %s289
      %p301 = scmp.eq.s32.totalorder %s27, 1
      %p302 = por %p300, %p301
      %p304 = scmp.ne.s32.totalorder %s289, %s303
      %p305 = scmp.eq.s32.totalorder %s27, 0
      %p306 = por %p304, %p305
      %s308 = sadd.s32 %s307, 1
      %p311 = scmp.eq.s32.totalorder %s21, 1
      %p312 = scmp.ne.s32.totalorder %s307, %s309
      %p313 = scmp.eq.s32.totalorder %s21, 0
      %p314 = por %p312, %p313
      %p315 = scmp.ne.s32.totalorder %s307, %s309
      %p316 = scmp.eq.s32.totalorder %s26, 1
      %p317 = por %p315, %p316
      %p318 = scmp.ne.s32.totalorder %s309, %s310
      %p319 = scmp.eq.s32.totalorder %s26, 0
      %p320 = por %p318, %p319
      %p321 = scmp.ne.s32.totalorder %s309, %s310
      %p322 = scmp.eq.s32.totalorder %s27, 1
      %p323 = por %p321, %p322
      %p325 = scmp.ne.s32.totalorder %s310, %s324
      %p326 = scmp.eq.s32.totalorder %s27, 0
      %p327 = por %p325, %p326
      %s328 = ssub.s32 %s28, %s47
      %s329 = ssub.s32 %s29, %s43
      %s330 = sor.u32 %s328, %s329
      %p331 = scmp.eq.s32.totalorder %s330, 0
      %s333 = sadd.s32 %s332, 1
      %s334 = scalar_select %p331, %s332, %s333
      %p337 = pneg %p331
      %p338 = scmp.eq.s32.totalorder %s21, 1
      %p339 = por %p337, %p338
      %p340 = scmp.ne.s32.totalorder %s332, %s335
      %p341 = scmp.eq.s32.totalorder %s21, 0
      %p342 = por %p340, %p341
      %p343 = scmp.ne.s32.totalorder %s332, %s335
      %p344 = scmp.eq.s32.totalorder %s26, 1
      %p345 = por %p343, %p344
      %p346 = scmp.ne.s32.totalorder %s335, %s336
      %p347 = scmp.eq.s32.totalorder %s26, 0
      %p348 = por %p346, %p347
      %p349 = scmp.ne.s32.totalorder %s335, %s336
      %p350 = scmp.eq.s32.totalorder %s27, 1
      %p351 = por %p349, %p350
      %p353 = scmp.ne.s32.totalorder %s336, %s352
      %p354 = scmp.eq.s32.totalorder %s27, 0
      %p355 = por %p353, %p354
      %p356 = scmp.le.s32.totalorder 1, %s21
      %p357 = scmp.lt.s32.totalorder %s21, 3
      %p358 = pnand %p356, %p357
      %p359 = pneg %p358
      // Predicated region
      $region9: #{transformer_block.3} parent=5 // pred_check
        _
      $region10: #{transformer_block.3} parent=5 // pred_check_branch
        %361 = sbr.rel (%p358) target = $region12
      $region11: #{transformer_block.3} parent=5 // pred_region
        %s362 = ssub.s32 %s21, 1
        // Predicated region
        $region13: #{transformer_block.3} parent=11 // pred_check
          %p363 = pneg %p173
        $region14: #{transformer_block.3} parent=11 // pred_check_branch
          %365 = sbr.rel (%p363) target = $region16
        $region15: #{transformer_block.3} parent=11 // pred_region
          _
        $region16: #{transformer_block.3} parent=11 // pred_fallthru
          _
        // Predicated region
        $region17: #{transformer_block.3} parent=11 // pred_check
          %p366 = pneg %p194
        $region18: #{transformer_block.3} parent=11 // pred_check_branch
          %368 = sbr.rel (%p366) target = $region20
        $region19: #{transformer_block.3} parent=11 // pred_region
          _
        $region20: #{transformer_block.3} parent=11 // pred_fallthru
          _
        // Predicated region
        $region21: #{transformer_block.3} parent=11 // pred_check
          %p369 = pneg %p215
        $region22: #{transformer_block.3} parent=11 // pred_check_branch
          %371 = sbr.rel (%p369) target = $region24
        $region23: #{transformer_block.3} parent=11 // pred_region
          _
        $region24: #{transformer_block.3} parent=11 // pred_fallthru
          _
        // Predicated region
        $region25: #{transformer_block.3} parent=11 // pred_check
          %p372 = pneg %p236
        $region26: #{transformer_block.3} parent=11 // pred_check_branch
          %374 = sbr.rel (%p372) target = $region28
        $region27: #{transformer_block.3} parent=11 // pred_region
          _
        $region28: #{transformer_block.3} parent=11 // pred_fallthru
          _
        // Predicated region
        $region29: #{transformer_block.3} parent=11 // pred_check
          %p375 = pneg %p257
        $region30: #{transformer_block.3} parent=11 // pred_check_branch
          %377 = sbr.rel (%p375) target = $region32
        $region31: #{transformer_block.3} parent=11 // pred_region
          _
        $region32: #{transformer_block.3} parent=11 // pred_fallthru
          _
        // Predicated region
        $region33: #{transformer_block.3} parent=11 // pred_check
          %p378 = pneg %p278
        $region34: #{transformer_block.3} parent=11 // pred_check_branch
          %380 = sbr.rel (%p378) target = $region36
        $region35: #{transformer_block.3} parent=11 // pred_region
          _
        $region36: #{transformer_block.3} parent=11 // pred_fallthru
          _
        // Predicated region
        $region37: #{transformer_block.3} parent=11 // pred_check
          %p381 = pneg %p299
        $region38: #{transformer_block.3} parent=11 // pred_check_branch
          %383 = sbr.rel (%p381) target = $region40
        $region39: #{transformer_block.3} parent=11 // pred_region
          _
        $region40: #{transformer_block.3} parent=11 // pred_fallthru
          _
        // Predicated region
        $region41: #{transformer_block.3} parent=11 // pred_check
          %p384 = pneg %p320
        $region42: #{transformer_block.3} parent=11 // pred_check_branch
          %386 = sbr.rel (%p384) target = $region44
        $region43: #{transformer_block.3} parent=11 // pred_region
          _
        $region44: #{transformer_block.3} parent=11 // pred_fallthru
          _
      $region12: #{transformer_block.3} parent=5 // pred_fallthru
        _
      %p387 = scmp.lt.s32.totalorder %s21, 2
      // Predicated region
      $region45: #{transformer_block.3} parent=5 // pred_check
        %p388 = pneg %p387
      $region46: #{transformer_block.3} parent=5 // pred_check_branch
        %390 = sbr.rel (%p388) target = $region48
      $region47: #{transformer_block.3} parent=5 // pred_region
        // Predicated region
        $region49: #{transformer_block.3} parent=47 // pred_check
          %p391 = pneg %p62
        $region50: #{transformer_block.3} parent=47 // pred_check_branch
          %393 = sbr.rel (%p391) target = $region52
        $region51: #{transformer_block.3} parent=47 // pred_region
          %p394 = scmp.lt.s32.totalorder %s28, 1
          %s395 = scalar_select %p394, %s28, 1
          %p396 = scmp.lt.s32.totalorder %s29, 0
          %s397 = scalar_select %p396, %s29, 0
          %s398 = sadd.s32 %s397, %s395
          %s399 = smul.addr %s398, 8
          %s400 = scalar_lea.vmem %s0, %s399
        $region52: #{transformer_block.3} parent=47 // pred_fallthru
          _
        // Predicated region
        $region53: #{transformer_block.3} parent=47 // pred_check
          %p401 = pneg %p90
        $region54: #{transformer_block.3} parent=47 // pred_check_branch
          %403 = sbr.rel (%p401) target = $region56
        $region55: #{transformer_block.3} parent=47 // pred_region
          %p404 = scmp.lt.s32.totalorder %s28, 1
          %s405 = scalar_select %p404, %s28, 1
          %p406 = scmp.lt.s32.totalorder %s29, 0
          %s407 = scalar_select %p406, %s29, 0
          %s408 = smul.addr %s405, 4
          %s409 = sadd.s32 %s407, %s408
          %s410 = smul.addr %s409, 8
          %s411 = scalar_lea.vmem %s1, %s410
        $region56: #{transformer_block.3} parent=47 // pred_fallthru
          _
        // Predicated region
        $region57: #{transformer_block.3} parent=47 // pred_check
          %p412 = pneg %p118
        $region58: #{transformer_block.3} parent=47 // pred_check_branch
          %414 = sbr.rel (%p412) target = $region60
        $region59: #{transformer_block.3} parent=47 // pred_region
          %p415 = scmp.lt.s32.totalorder %s28, 1
          %s416 = scalar_select %p415, %s28, 1
          %p417 = scmp.lt.s32.totalorder %s30, 0
          %s418 = scalar_select %p417, %s30, 0
          %s419 = smul.addr %s416, 4
          %s420 = sadd.s32 %s418, %s419
          %s421 = smul.addr %s420, 8
          %s422 = scalar_lea.vmem %s2, %s421
        $region60: #{transformer_block.3} parent=47 // pred_fallthru
          _
        // Predicated region
        $region61: #{transformer_block.3} parent=47 // pred_check
          %p423 = pneg %p146
        $region62: #{transformer_block.3} parent=47 // pred_check_branch
          %425 = sbr.rel (%p423) target = $region64
        $region63: #{transformer_block.3} parent=47 // pred_region
          %p426 = scmp.lt.s32.totalorder %s28, 1
          %s427 = scalar_select %p426, %s28, 1
          %p428 = scmp.lt.s32.totalorder %s30, 0
          %s429 = scalar_select %p428, %s30, 0
          %s430 = smul.addr %s427, 4
          %s431 = sadd.s32 %s429, %s430
          %s432 = smul.addr %s431, 8
          %s433 = scalar_lea.vmem %s3, %s432
        $region64: #{transformer_block.3} parent=47 // pred_fallthru
          _
      $region48: #{transformer_block.3} parent=5 // pred_fallthru
        _
      %p434 = scmp.le.s32.totalorder 1, %s21
      %p435 = scmp.lt.s32.totalorder %s21, 3
      %p436 = pnand %p434, %p435
      %p437 = pneg %p436
      // Predicated region
      $region65: #{transformer_block.3} parent=5 // pred_check
        _
      $region66: #{transformer_block.3} parent=5 // pred_check_branch
        %439 = sbr.rel (%p436) target = $region68
      $region67: #{transformer_block.3} parent=5 // pred_region
        %s440 = ssub.s32 %s21, 1
        %p441 = scmp.lt.s32.totalorder %s31, 1
        %s442 = scalar_select %p441, %s31, 1
        %p443 = scmp.lt.s32.totalorder %s32, 0
        %s444 = scalar_select %p443, %s32, 0
        %s445 = sadd.s32 %s444, %s442
        %s446 = smul.addr %s445, 8
        %s447 = scalar_lea.vmem %s0, %s446
        %p448 = pneg %p68
        %p449 = pneg %p65
        %p450 = scmp.lt.s32.totalorder %s31, 1
        %s451 = scalar_select %p450, %s31, 1
        %p452 = scmp.lt.s32.totalorder %s32, 0
        %s453 = scalar_select %p452, %s32, 0
        %s454 = smul.addr %s451, 4
        %s455 = sadd.s32 %s453, %s454
        %s456 = smul.addr %s455, 8
        %s457 = scalar_lea.vmem %s1, %s456
        %p458 = pneg %p96
        %p459 = pneg %p93
        %p460 = scmp.lt.s32.totalorder %s31, 1
        %s461 = scalar_select %p460, %s31, 1
        %p462 = scmp.lt.s32.totalorder %s33, 0
        %s463 = scalar_select %p462, %s33, 0
        %s464 = smul.addr %s461, 4
        %s465 = sadd.s32 %s463, %s464
        %s466 = smul.addr %s465, 8
        %s467 = scalar_lea.vmem %s2, %s466
        %p468 = pneg %p124
        %p469 = pneg %p121
        %p470 = scmp.lt.s32.totalorder %s31, 1
        %s471 = scalar_select %p470, %s31, 1
        %p472 = scmp.lt.s32.totalorder %s33, 0
        %s473 = scalar_select %p472, %s33, 0
        %s474 = smul.addr %s471, 4
        %s475 = sadd.s32 %s473, %s474
        %s476 = smul.addr %s475, 8
        %s477 = scalar_lea.vmem %s3, %s476
        %p478 = pneg %p152
        %p479 = pneg %p149
        %p480 = pneg %p173
        %p481 = pneg %p170
        %p482 = pneg %p194
        %p483 = pneg %p191
        %p484 = pneg %p215
        %p485 = pneg %p212
        %p486 = pneg %p236
        %p487 = pneg %p233
        %p488 = pneg %p257
        %p489 = pneg %p254
        %p490 = pneg %p278
        %p491 = pneg %p275
        %p492 = pneg %p299
        %p493 = pneg %p296
        %p494 = pneg %p320
        %p495 = pneg %p317
        %p496 = pneg %p348
        %p497 = pneg %p345
        %s498 = sand.u32 %s335, 1
        %s499 = scalar_lea.sflag [#allocation6], %s498
        %s500 = sand.u32 %s335, 1
        %s501 = smul.addr %s500, 8
        %s502 = scalar_lea.vmem [#allocation5], %s501
        %p503 = scmp.lt.s32.totalorder %s31, 1
        %s504 = scalar_select %p503, %s31, 1
        %p505 = scmp.lt.s32.totalorder %s32, 0
        %s506 = scalar_select %p505, %s32, 0
        %s507 = sadd.s32 %s506, %s504
        %s508 = smul.addr %s507, 8
        %s509 = scalar_lea.vmem %s0, %s508
        %p510 = scmp.lt.s32.totalorder %s31, 1
        %s511 = scalar_select %p510, %s31, 1
        %p512 = scmp.lt.s32.totalorder %s32, 0
        %s513 = scalar_select %p512, %s32, 0
        %s514 = smul.addr %s511, 4
        %s515 = sadd.s32 %s513, %s514
        %s516 = smul.addr %s515, 8
        %s517 = scalar_lea.vmem %s1, %s516
        %p518 = scmp.lt.s32.totalorder %s31, 1
        %s519 = scalar_select %p518, %s31, 1
        %p520 = scmp.lt.s32.totalorder %s33, 0
        %s521 = scalar_select %p520, %s33, 0
        %s522 = smul.addr %s519, 4
        %s523 = sadd.s32 %s521, %s522
        %s524 = smul.addr %s523, 8
        %s525 = scalar_lea.vmem %s2, %s524
        %p526 = scmp.lt.s32.totalorder %s31, 1
        %s527 = scalar_select %p526, %s31, 1
        %p528 = scmp.lt.s32.totalorder %s33, 0
        %s529 = scalar_select %p528, %s33, 0
        %s530 = smul.addr %s527, 4
        %s531 = sadd.s32 %s529, %s530
        %s532 = smul.addr %s531, 8
        %s533 = scalar_lea.vmem %s3, %s532
        %p534 = scmp.eq.s32.totalorder %s33, 0
        // Predicated region
        $region69: #{transformer_block.3} parent=67 // pred_check
          %p535 = pneg %p534
        $region70: #{transformer_block.3} parent=67 // pred_check_branch
          %537 = sbr.rel (%p535) target = $region72
        $region71: #{transformer_block.3} parent=67 // pred_region
          %vm538 = vcmask 7168
          %539 = vst.msk [vmem:[#allocation2] sm:$0xff] %vm538, -inf
          %540 = vst.msk [vmem:[#allocation2 + $0x8] sm:$0xff] %vm538, -inf
          %541 = vst.msk [vmem:[#allocation2 + $0x10] sm:$0xff] %vm538, -inf
          %542 = vst.msk [vmem:[#allocation2 + $0x18] sm:$0xff] %vm538, -inf
          %543 = vst.msk [vmem:[#allocation3] sm:$0xff] %vm538, 0.0
          %544 = vst.msk [vmem:[#allocation3 + $0x8] sm:$0xff] %vm538, 0.0
          %545 = vst.msk [vmem:[#allocation3 + $0x10] sm:$0xff] %vm538, 0.0
          %546 = vst.msk [vmem:[#allocation3 + $0x18] sm:$0xff] %vm538, 0.0
          %vm547 = vcmask 64512
          %548 = vst.msk [vmem:[#allocation4] sm:$0xff] %vm547, 0.0
          %549 = vst.msk [vmem:[#allocation4 + $0x8] sm:$0xff] %vm547, 0.0
          %550 = vst.msk [vmem:[#allocation4 + $0x10] sm:$0xff] %vm547, 0.0
          %551 = vst.msk [vmem:[#allocation4 + $0x18] sm:$0xff] %vm547, 0.0
        $region72: #{transformer_block.3} parent=67 // pred_fallthru
          _
        %v552 = vld [vmem:[%s517] sm:$0xff]
        %v553 = vld [vmem:[%s517 + $0x8] sm:$0xff]
        %v554 = vld [vmem:[%s517 + $0x10] sm:$0xff]
        %v555 = vld [vmem:[%s517 + $0x18] sm:$0xff]
        %v556 = vld [vmem:[%s525] sm:$0xff]
        %v557 = vld [vmem:[%s525 + $0x8] sm:$0xff]
        %v558 = vld [vmem:[%s525 + $0x10] sm:$0xff]
        %v559 = vld [vmem:[%s525 + $0x18] sm:$0xff]
        %v560 = vld [vmem:[%s533] sm:$0xff]
        %v561 = vld [vmem:[%s533 + $0x8] sm:$0xff]
        %v562 = vld [vmem:[%s533 + $0x10] sm:$0xff]
        %v563 = vld [vmem:[%s533 + $0x18] sm:$0xff]
        %vm564 = vcmask 64512
        %v566 = vsel %vm564, %v552, 0
        %v569 = vsel %vm564, %v556, 0
        %571 = vmatprep.subr.mxu0 0.0
        %572 = vmatpush1.xpose.msra.mxu0 %v569
        %573 = vmatprep.subr.mxu0 0.0
        %574 = vmatpush1.xpose.msra.mxu0 0.0
        %575 = vmatprep.subr.mxu0 0.0
        %576 = vmatpush1.xpose.msra.mxu0 0.0
        %577 = vmatprep.subr.mxu0 0.0
        %578 = vmatpush1.xpose.msra.mxu0 0.0
        %579 = vmatprep.subr.mxu0 0.0
        %580 = vmatpush1.xpose.msra.mxu0 0.0
        %581 = vmatprep.subr.mxu0 0.0
        %582 = vmatpush1.xpose.msra.mxu0 0.0
        %583 = vmatprep.subr.mxu0 0.0
        %584 = vmatpush1.xpose.msra.mxu0 0.0
        %585 = vmatprep.subr.mxu0 0.0
        %586 = vmatpush1.xpose.msra.mxu0 0.0
        %587 = vmatprep.subr.mxu0 0.0
        %588 = vmatpush1.xpose.msra.mxu0 0.0
        %589 = vmatprep.subr.mxu0 0.0
        %590 = vmatpush1.xpose.msra.mxu0 0.0
        %591 = vmatprep.subr.mxu0 0.0
        %592 = vmatpush1.xpose.msra.mxu0 0.0
        %593 = vmatprep.subr.mxu0 0.0
        %594 = vmatpush1.xpose.msra.mxu0 0.0
        %595 = vmatprep.subr.mxu0 0.0
        %596 = vmatpush1.xpose.msra.mxu0 0.0
        %597 = vmatprep.subr.mxu0 0.0
        %598 = vmatpush1.xpose.msra.mxu0 0.0
        %599 = vmatprep.subr.mxu0 0.0
        %600 = vmatpush1.xpose.msra.mxu0 0.0
        %601 = vmatprep.subr.mxu0 0.0
        %602 = vmatpush1.xpose.msra.mxu0 0.0
        %603 = vmatprep.subr.mxu0 0.0
        %604 = vmatpush1.xpose.msra.mxu0 0.0
        %605 = vmatprep.subr.mxu0 0.0
        %606 = vmatpush1.xpose.msra.mxu0 0.0
        %607 = vmatprep.subr.mxu0 0.0
        %608 = vmatpush1.xpose.msra.mxu0 0.0
        %609 = vmatprep.subr.mxu0 0.0
        %610 = vmatpush1.xpose.msra.mxu0 0.0
        %611 = vmatprep.subr.mxu0 0.0
        %612 = vmatpush1.xpose.msra.mxu0 0.0
        %613 = vmatprep.subr.mxu0 0.0
        %614 = vmatpush1.xpose.msra.mxu0 0.0
        %615 = vmatprep.subr.mxu0 0.0
        %616 = vmatpush1.xpose.msra.mxu0 0.0
        %617 = vmatprep.subr.mxu0 0.0
        %618 = vmatpush1.xpose.msra.mxu0 0.0
        %619 = vmatprep.subr.mxu0 0.0
        %620 = vmatpush1.xpose.msra.mxu0 0.0
        %621 = vmatprep.subr.mxu0 0.0
        %622 = vmatpush1.xpose.msra.mxu0 0.0
        %623 = vmatprep.subr.mxu0 0.0
        %624 = vmatpush1.xpose.msra.mxu0 0.0
        %625 = vmatprep.subr.mxu0 0.0
        %626 = vmatpush1.xpose.msra.mxu0 0.0
        %627 = vmatprep.subr.mxu0 0.0
        %628 = vmatpush1.xpose.msra.mxu0 0.0
        %629 = vmatprep.subr.mxu0 0.0
        %630 = vmatpush1.xpose.msra.mxu0 0.0
        %631 = vmatprep.subr.mxu0 0.0
        %632 = vmatpush1.xpose.msra.mxu0 0.0
        %633 = vmatprep.subr.mxu0 0.0
        %634 = vmatpush1.xpose.msra.mxu0 0.0
        %635 = vmatprep.mubr.f32.mxu0 0.0
        %636 = vmatmul.mubr.f32.gmra.mrb[0].mxu0 %v566
        %v637 = vpop.f32.mrb[0].mxu0
        %v638 = vadd.f32 0.0, %v637
        %v639 = vpop.f32.mrb[0].mxu0
        %640 = vdwg.mxu0
        %v642 = vsel %vm564, %v553, 0
        %v645 = vsel %vm564, %v557, 0
        %647 = vmatprep.subr.mxu0 0.0
        %648 = vmatpush1.xpose.msra.mxu0 %v645
        %649 = vmatprep.subr.mxu0 0.0
        %650 = vmatpush1.xpose.msra.mxu0 0.0
        %651 = vmatprep.subr.mxu0 0.0
        %652 = vmatpush1.xpose.msra.mxu0 0.0
        %653 = vmatprep.subr.mxu0 0.0
        %654 = vmatpush1.xpose.msra.mxu0 0.0
        %655 = vmatprep.subr.mxu0 0.0
        %656 = vmatpush1.xpose.msra.mxu0 0.0
        %657 = vmatprep.subr.mxu0 0.0
        %658 = vmatpush1.xpose.msra.mxu0 0.0
        %659 = vmatprep.subr.mxu0 0.0
        %660 = vmatpush1.xpose.msra.mxu0 0.0
        %661 = vmatprep.subr.mxu0 0.0
        %662 = vmatpush1.xpose.msra.mxu0 0.0
        %663 = vmatprep.subr.mxu0 0.0
        %664 = vmatpush1.xpose.msra.mxu0 0.0
        %665 = vmatprep.subr.mxu0 0.0
        %666 = vmatpush1.xpose.msra.mxu0 0.0
        %667 = vmatprep.subr.mxu0 0.0
        %668 = vmatpush1.xpose.msra.mxu0 0.0
        %669 = vmatprep.subr.mxu0 0.0
        %670 = vmatpush1.xpose.msra.mxu0 0.0
        %671 = vmatprep.subr.mxu0 0.0
        %672 = vmatpush1.xpose.msra.mxu0 0.0
        %673 = vmatprep.subr.mxu0 0.0
        %674 = vmatpush1.xpose.msra.mxu0 0.0
        %675 = vmatprep.subr.mxu0 0.0
        %676 = vmatpush1.xpose.msra.mxu0 0.0
        %677 = vmatprep.subr.mxu0 0.0
        %678 = vmatpush1.xpose.msra.mxu0 0.0
        %679 = vmatprep.subr.mxu0 0.0
        %680 = vmatpush1.xpose.msra.mxu0 0.0
        %681 = vmatprep.subr.mxu0 0.0
        %682 = vmatpush1.xpose.msra.mxu0 0.0
        %683 = vmatprep.subr.mxu0 0.0
        %684 = vmatpush1.xpose.msra.mxu0 0.0
        %685 = vmatprep.subr.mxu0 0.0
        %686 = vmatpush1.xpose.msra.mxu0 0.0
        %687 = vmatprep.subr.mxu0 0.0
        %688 = vmatpush1.xpose.msra.mxu0 0.0
        %689 = vmatprep.subr.mxu0 0.0
        %690 = vmatpush1.xpose.msra.mxu0 0.0
        %691 = vmatprep.subr.mxu0 0.0
        %692 = vmatpush1.xpose.msra.mxu0 0.0
        %693 = vmatprep.subr.mxu0 0.0
        %694 = vmatpush1.xpose.msra.mxu0 0.0
        %695 = vmatprep.subr.mxu0 0.0
        %696 = vmatpush1.xpose.msra.mxu0 0.0
        %697 = vmatprep.subr.mxu0 0.0
        %698 = vmatpush1.xpose.msra.mxu0 0.0
        %699 = vmatprep.subr.mxu0 0.0
        %700 = vmatpush1.xpose.msra.mxu0 0.0
        %701 = vmatprep.subr.mxu0 0.0
        %702 = vmatpush1.xpose.msra.mxu0 0.0
        %703 = vmatprep.subr.mxu0 0.0
        %704 = vmatpush1.xpose.msra.mxu0 0.0
        %705 = vmatprep.subr.mxu0 0.0
        %706 = vmatpush1.xpose.msra.mxu0 0.0
        %707 = vmatprep.subr.mxu0 0.0
        %708 = vmatpush1.xpose.msra.mxu0 0.0
        %709 = vmatprep.subr.mxu0 0.0
        %710 = vmatpush1.xpose.msra.mxu0 0.0
        %711 = vmatprep.mubr.f32.mxu0 0.0
        %712 = vmatmul.mubr.f32.gmra.mrb[0].mxu0 %v642
        %v713 = vpop.f32.mrb[0].mxu0
        %v714 = vadd.f32 0.0, %v713
        %v715 = vpop.f32.mrb[0].mxu0
        %716 = vdwg.mxu0
        %v718 = vsel %vm564, %v554, 0
        %v721 = vsel %vm564, %v558, 0
        %723 = vmatprep.subr.mxu0 0.0
        %724 = vmatpush1.xpose.msra.mxu0 %v721
        %725 = vmatprep.subr.mxu0 0.0
        %726 = vmatpush1.xpose.msra.mxu0 0.0
        %727 = vmatprep.subr.mxu0 0.0
        %728 = vmatpush1.xpose.msra.mxu0 0.0
        %729 = vmatprep.subr.mxu0 0.0
        %730 = vmatpush1.xpose.msra.mxu0 0.0
        %731 = vmatprep.subr.mxu0 0.0
        %732 = vmatpush1.xpose.msra.mxu0 0.0
        %733 = vmatprep.subr.mxu0 0.0
        %734 = vmatpush1.xpose.msra.mxu0 0.0
        %735 = vmatprep.subr.mxu0 0.0
        %736 = vmatpush1.xpose.msra.mxu0 0.0
        %737 = vmatprep.subr.mxu0 0.0
        %738 = vmatpush1.xpose.msra.mxu0 0.0
        %739 = vmatprep.subr.mxu0 0.0
        %740 = vmatpush1.xpose.msra.mxu0 0.0
        %741 = vmatprep.subr.mxu0 0.0
        %742 = vmatpush1.xpose.msra.mxu0 0.0
        %743 = vmatprep.subr.mxu0 0.0
        %744 = vmatpush1.xpose.msra.mxu0 0.0
        %745 = vmatprep.subr.mxu0 0.0
        %746 = vmatpush1.xpose.msra.mxu0 0.0
        %747 = vmatprep.subr.mxu0 0.0
        %748 = vmatpush1.xpose.msra.mxu0 0.0
        %749 = vmatprep.subr.mxu0 0.0
        %750 = vmatpush1.xpose.msra.mxu0 0.0
        %751 = vmatprep.subr.mxu0 0.0
        %752 = vmatpush1.xpose.msra.mxu0 0.0
        %753 = vmatprep.subr.mxu0 0.0
        %754 = vmatpush1.xpose.msra.mxu0 0.0
        %755 = vmatprep.subr.mxu0 0.0
        %756 = vmatpush1.xpose.msra.mxu0 0.0
        %757 = vmatprep.subr.mxu0 0.0
        %758 = vmatpush1.xpose.msra.mxu0 0.0
        %759 = vmatprep.subr.mxu0 0.0
        %760 = vmatpush1.xpose.msra.mxu0 0.0
        %761 = vmatprep.subr.mxu0 0.0
        %762 = vmatpush1.xpose.msra.mxu0 0.0
        %763 = vmatprep.subr.mxu0 0.0
        %764 = vmatpush1.xpose.msra.mxu0 0.0
        %765 = vmatprep.subr.mxu0 0.0
        %766 = vmatpush1.xpose.msra.mxu0 0.0
        %767 = vmatprep.subr.mxu0 0.0
        %768 = vmatpush1.xpose.msra.mxu0 0.0
        %769 = vmatprep.subr.mxu0 0.0
        %770 = vmatpush1.xpose.msra.mxu0 0.0
        %771 = vmatprep.subr.mxu0 0.0
        %772 = vmatpush1.xpose.msra.mxu0 0.0
        %773 = vmatprep.subr.mxu0 0.0
        %774 = vmatpush1.xpose.msra.mxu0 0.0
        %775 = vmatprep.subr.mxu0 0.0
        %776 = vmatpush1.xpose.msra.mxu0 0.0
        %777 = vmatprep.subr.mxu0 0.0
        %778 = vmatpush1.xpose.msra.mxu0 0.0
        %779 = vmatprep.subr.mxu0 0.0
        %780 = vmatpush1.xpose.msra.mxu0 0.0
        %781 = vmatprep.subr.mxu0 0.0
        %782 = vmatpush1.xpose.msra.mxu0 0.0
        %783 = vmatprep.subr.mxu0 0.0
        %784 = vmatpush1.xpose.msra.mxu0 0.0
        %785 = vmatprep.subr.mxu0 0.0
        %786 = vmatpush1.xpose.msra.mxu0 0.0
        %787 = vmatprep.mubr.f32.mxu0 0.0
        %788 = vmatmul.mubr.f32.gmra.mrb[0].mxu0 %v718
        %v789 = vpop.f32.mrb[0].mxu0
        %v790 = vadd.f32 0.0, %v789
        %v791 = vpop.f32.mrb[0].mxu0
        %792 = vdwg.mxu0
        %v794 = vsel %vm564, %v555, 0
        %v797 = vsel %vm564, %v559, 0
        %799 = vmatprep.subr.mxu0 0.0
        %800 = vmatpush1.xpose.msra.mxu0 %v797
        %801 = vmatprep.subr.mxu0 0.0
        %802 = vmatpush1.xpose.msra.mxu0 0.0
        %803 = vmatprep.subr.mxu0 0.0
        %804 = vmatpush1.xpose.msra.mxu0 0.0
        %805 = vmatprep.subr.mxu0 0.0
        %806 = vmatpush1.xpose.msra.mxu0 0.0
        %807 = vmatprep.subr.mxu0 0.0
        %808 = vmatpush1.xpose.msra.mxu0 0.0
        %809 = vmatprep.subr.mxu0 0.0
        %810 = vmatpush1.xpose.msra.mxu0 0.0
        %811 = vmatprep.subr.mxu0 0.0
        %812 = vmatpush1.xpose.msra.mxu0 0.0
        %813 = vmatprep.subr.mxu0 0.0
        %814 = vmatpush1.xpose.msra.mxu0 0.0
        %815 = vmatprep.subr.mxu0 0.0
        %816 = vmatpush1.xpose.msra.mxu0 0.0
        %817 = vmatprep.subr.mxu0 0.0
        %818 = vmatpush1.xpose.msra.mxu0 0.0
        %819 = vmatprep.subr.mxu0 0.0
        %820 = vmatpush1.xpose.msra.mxu0 0.0
        %821 = vmatprep.subr.mxu0 0.0
        %822 = vmatpush1.xpose.msra.mxu0 0.0
        %823 = vmatprep.subr.mxu0 0.0
        %824 = vmatpush1.xpose.msra.mxu0 0.0
        %825 = vmatprep.subr.mxu0 0.0
        %826 = vmatpush1.xpose.msra.mxu0 0.0
        %827 = vmatprep.subr.mxu0 0.0
        %828 = vmatpush1.xpose.msra.mxu0 0.0
        %829 = vmatprep.subr.mxu0 0.0
        %830 = vmatpush1.xpose.msra.mxu0 0.0
        %831 = vmatprep.subr.mxu0 0.0
        %832 = vmatpush1.xpose.msra.mxu0 0.0
        %833 = vmatprep.subr.mxu0 0.0
        %834 = vmatpush1.xpose.msra.mxu0 0.0
        %835 = vmatprep.subr.mxu0 0.0
        %836 = vmatpush1.xpose.msra.mxu0 0.0
        %837 = vmatprep.subr.mxu0 0.0
        %838 = vmatpush1.xpose.msra.mxu0 0.0
        %839 = vmatprep.subr.mxu0 0.0
        %840 = vmatpush1.xpose.msra.mxu0 0.0
        %841 = vmatprep.subr.mxu0 0.0
        %842 = vmatpush1.xpose.msra.mxu0 0.0
        %843 = vmatprep.subr.mxu0 0.0
        %844 = vmatpush1.xpose.msra.mxu0 0.0
        %845 = vmatprep.subr.mxu0 0.0
        %846 = vmatpush1.xpose.msra.mxu0 0.0
        %847 = vmatprep.subr.mxu0 0.0
        %848 = vmatpush1.xpose.msra.mxu0 0.0
        %849 = vmatprep.subr.mxu0 0.0
        %850 = vmatpush1.xpose.msra.mxu0 0.0
        %851 = vmatprep.subr.mxu0 0.0
        %852 = vmatpush1.xpose.msra.mxu0 0.0
        %853 = vmatprep.subr.mxu0 0.0
        %854 = vmatpush1.xpose.msra.mxu0 0.0
        %855 = vmatprep.subr.mxu0 0.0
        %856 = vmatpush1.xpose.msra.mxu0 0.0
        %857 = vmatprep.subr.mxu0 0.0
        %858 = vmatpush1.xpose.msra.mxu0 0.0
        %859 = vmatprep.subr.mxu0 0.0
        %860 = vmatpush1.xpose.msra.mxu0 0.0
        %861 = vmatprep.subr.mxu0 0.0
        %862 = vmatpush1.xpose.msra.mxu0 0.0
        %863 = vmatprep.mubr.f32.mxu0 0.0
        %864 = vmatmul.mubr.f32.gmra.mrb[0].mxu0 %v794
        %v865 = vpop.f32.mrb[0].mxu0
        %v866 = vadd.f32 0.0, %v865
        %v867 = vpop.f32.mrb[0].mxu0
        %868 = vdwg.mxu0
        %v869 = vld [vmem:[#allocation2] sm:$0xff]
        %v870 = vld [vmem:[#allocation2 + $0x8] sm:$0xff]
        %v871 = vld [vmem:[#allocation2 + $0x10] sm:$0xff]
        %v872 = vld [vmem:[#allocation2 + $0x18] sm:$0xff]
        %v873 = vsel %vm564, %v638, -inf
        %874 = vmax.xlane.f32.xlu0 %v873
        %v875 = vpop.xlane.xlu0 %874
        %v876 = vsel %vm564, %v714, -inf
        %877 = vmax.xlane.f32.xlu0 %v876
        %v878 = vpop.xlane.xlu0 %877
        %v879 = vsel %vm564, %v790, -inf
        %880 = vmax.xlane.f32.xlu0 %v879
        %v881 = vpop.xlane.xlu0 %880
        %v882 = vsel %vm564, %v866, -inf
        %883 = vmax.xlane.f32.xlu0 %v882
        %v884 = vpop.xlane.xlu0 %883
        %v885 = vmax.f32 %v869, %v875
        %v886 = vmax.f32 %v870, %v878
        %v887 = vmax.f32 %v871, %v881
        %v888 = vmax.f32 %v872, %v884
        %v889 = vsub.f32 %v869, %v885
        %v890 = vsub.f32 %v870, %v886
        %v891 = vsub.f32 %v871, %v887
        %v892 = vsub.f32 %v872, %v888
        %v893 = vmul.f32 %v889, 1.442695
        %v894 = vpow.pop %v893
        %v895 = vmul.f32 %v890, 1.442695
        %v896 = vpow.pop %v895
        %v897 = vmul.f32 %v891, 1.442695
        %v898 = vpow.pop %v897
        %v899 = vmul.f32 %v892, 1.442695
        %v900 = vpow.pop %v899
        %902 = vset.pattern.permute.xlu0 0
        %903 = vperm.xlu0 %902, %v885
        %v904 = vpop.permute.xlu0 %903
        %907 = vset.pattern.permute.xlu0 0
        %908 = vperm.xlu0 %907, %v886
        %v909 = vpop.permute.xlu0 %908
        %912 = vset.pattern.permute.xlu0 0
        %913 = vperm.xlu0 %912, %v887
        %v914 = vpop.permute.xlu0 %913
        %917 = vset.pattern.permute.xlu0 0
        %918 = vperm.xlu0 %917, %v888
        %v919 = vpop.permute.xlu0 %918
        %v921 = vsub.f32 %v638, %v904
        %v922 = vsub.f32 %v714, %v909
        %v923 = vsub.f32 %v790, %v914
        %v924 = vsub.f32 %v866, %v919
        %v925 = vmul.f32 %v921, 1.442695
        %v926 = vpow.pop %v925
        %v927 = vmul.f32 %v922, 1.442695
        %v928 = vpow.pop %v927
        %v929 = vmul.f32 %v923, 1.442695
        %v930 = vpow.pop %v929
        %v931 = vmul.f32 %v924, 1.442695
        %v932 = vpow.pop %v931
        %v933 = vld [vmem:[#allocation3] sm:$0xff]
        %v934 = vld [vmem:[#allocation3 + $0x8] sm:$0xff]
        %v935 = vld [vmem:[#allocation3 + $0x10] sm:$0xff]
        %v936 = vld [vmem:[#allocation3 + $0x18] sm:$0xff]
        %v937 = vmul.f32 %v894, %v933
        %v938 = vmul.f32 %v896, %v934
        %v939 = vmul.f32 %v898, %v935
        %v940 = vmul.f32 %v900, %v936
        %v941 = vsel %vm564, %v926, 0.0
        %942 = vadd.xlane.f32.xlu0 %v941
        %v943 = vpop.xlane.xlu0 %942
        %v944 = vsel %vm564, %v928, 0.0
        %945 = vadd.xlane.f32.xlu0 %v944
        %v946 = vpop.xlane.xlu0 %945
        %v947 = vsel %vm564, %v930, 0.0
        %948 = vadd.xlane.f32.xlu0 %v947
        %v949 = vpop.xlane.xlu0 %948
        %v950 = vsel %vm564, %v932, 0.0
        %951 = vadd.xlane.f32.xlu0 %v950
        %v952 = vpop.xlane.xlu0 %951
        %v953 = vadd.f32 %v937, %v943
        %v954 = vadd.f32 %v938, %v946
        %v955 = vadd.f32 %v939, %v949
        %v956 = vadd.f32 %v940, %v952
        %vm957 = vcmask 7168
        %958 = vst.msk [vmem:[#allocation3] sm:$0xff] %vm957, %v953
        %959 = vst.msk [vmem:[#allocation3 + $0x8] sm:$0xff] %vm957, %v954
        %960 = vst.msk [vmem:[#allocation3 + $0x10] sm:$0xff] %vm957, %v955
        %961 = vst.msk [vmem:[#allocation3 + $0x18] sm:$0xff] %vm957, %v956
        %v962 = vld [vmem:[#allocation4] sm:$0xff]
        %v963 = vld [vmem:[#allocation4 + $0x8] sm:$0xff]
        %v964 = vld [vmem:[#allocation4 + $0x10] sm:$0xff]
        %v965 = vld [vmem:[#allocation4 + $0x18] sm:$0xff]
        %967 = vset.pattern.permute.xlu0 0
        %968 = vperm.xlu0 %967, %v894
        %v969 = vpop.permute.xlu0 %968
        %972 = vset.pattern.permute.xlu0 0
        %973 = vperm.xlu0 %972, %v896
        %v974 = vpop.permute.xlu0 %973
        %977 = vset.pattern.permute.xlu0 0
        %978 = vperm.xlu0 %977, %v898
        %v979 = vpop.permute.xlu0 %978
        %982 = vset.pattern.permute.xlu0 0
        %983 = vperm.xlu0 %982, %v900
        %v984 = vpop.permute.xlu0 %983
        %v986 = vmul.f32 %v969, %v962
        %v987 = vmul.f32 %v974, %v963
        %v988 = vmul.f32 %v979, %v964
        %v989 = vmul.f32 %v984, %v965
        %v991 = vsel %vm564, %v926, 0
        %993 = vmatprep.subr.mxu0 0.0
        %994 = vmatpush1.msra.mxu0 %v560
        %995 = vmatprep.subr.mxu0 0.0
        %996 = vmatpush1.msra.mxu0 0.0
        %997 = vmatprep.subr.mxu0 0.0
        %998 = vmatpush1.msra.mxu0 0.0
        %999 = vmatprep.subr.mxu0 0.0
        %1000 = vmatpush1.msra.mxu0 0.0
        %1001 = vmatprep.subr.mxu0 0.0
        %1002 = vmatpush1.msra.mxu0 0.0
        %1003 = vmatprep.subr.mxu0 0.0
        %1004 = vmatpush1.msra.mxu0 0.0
        %1005 = vmatprep.subr.mxu0 0.0
        %1006 = vmatpush1.msra.mxu0 0.0
        %1007 = vmatprep.subr.mxu0 0.0
        %1008 = vmatpush1.msra.mxu0 0.0
        %1009 = vmatprep.subr.mxu0 0.0
        %1010 = vmatpush1.msra.mxu0 0.0
        %1011 = vmatprep.subr.mxu0 0.0
        %1012 = vmatpush1.msra.mxu0 0.0
        %1013 = vmatprep.subr.mxu0 0.0
        %1014 = vmatpush1.msra.mxu0 0.0
        %1015 = vmatprep.subr.mxu0 0.0
        %1016 = vmatpush1.msra.mxu0 0.0
        %1017 = vmatprep.subr.mxu0 0.0
        %1018 = vmatpush1.msra.mxu0 0.0
        %1019 = vmatprep.subr.mxu0 0.0
        %1020 = vmatpush1.msra.mxu0 0.0
        %1021 = vmatprep.subr.mxu0 0.0
        %1022 = vmatpush1.msra.mxu0 0.0
        %1023 = vmatprep.subr.mxu0 0.0
        %1024 = vmatpush1.msra.mxu0 0.0
        %1025 = vmatprep.subr.mxu0 0.0
        %1026 = vmatpush1.msra.mxu0 0.0
        %1027 = vmatprep.subr.mxu0 0.0
        %1028 = vmatpush1.msra.mxu0 0.0
        %1029 = vmatprep.subr.mxu0 0.0
        %1030 = vmatpush1.msra.mxu0 0.0
        %1031 = vmatprep.subr.mxu0 0.0
        %1032 = vmatpush1.msra.mxu0 0.0
        %1033 = vmatprep.subr.mxu0 0.0
        %1034 = vmatpush1.msra.mxu0 0.0
        %1035 = vmatprep.subr.mxu0 0.0
        %1036 = vmatpush1.msra.mxu0 0.0
        %1037 = vmatprep.subr.mxu0 0.0
        %1038 = vmatpush1.msra.mxu0 0.0
        %1039 = vmatprep.subr.mxu0 0.0
        %1040 = vmatpush1.msra.mxu0 0.0
        %1041 = vmatprep.subr.mxu0 0.0
        %1042 = vmatpush1.msra.mxu0 0.0
        %1043 = vmatprep.subr.mxu0 0.0
        %1044 = vmatpush1.msra.mxu0 0.0
        %1045 = vmatprep.subr.mxu0 0.0
        %1046 = vmatpush1.msra.mxu0 0.0
        %1047 = vmatprep.subr.mxu0 0.0
        %1048 = vmatpush1.msra.mxu0 0.0
        %1049 = vmatprep.subr.mxu0 0.0
        %1050 = vmatpush1.msra.mxu0 0.0
        %1051 = vmatprep.subr.mxu0 0.0
        %1052 = vmatpush1.msra.mxu0 0.0
        %1053 = vmatprep.subr.mxu0 0.0
        %1054 = vmatpush1.msra.mxu0 0.0
        %1055 = vmatprep.subr.mxu0 0.0
        %1056 = vmatpush1.msra.mxu0 0.0
        %1057 = vmatprep.mubr.f32.mxu0 0.0
        %1058 = vmatmul.mubr.f32.gmra.mrb[0].mxu0 %v991
        %v1059 = vpop.f32.mrb[0].mxu0
        %v1060 = vadd.f32 0.0, %v1059
        %v1061 = vpop.f32.mrb[0].mxu0
        %1062 = vdwg.mxu0
        %v1064 = vsel %vm564, %v928, 0
        %1066 = vmatprep.subr.mxu0 0.0
        %1067 = vmatpush1.msra.mxu0 %v561
        %1068 = vmatprep.subr.mxu0 0.0
        %1069 = vmatpush1.msra.mxu0 0.0
        %1070 = vmatprep.subr.mxu0 0.0
        %1071 = vmatpush1.msra.mxu0 0.0
        %1072 = vmatprep.subr.mxu0 0.0
        %1073 = vmatpush1.msra.mxu0 0.0
        %1074 = vmatprep.subr.mxu0 0.0
        %1075 = vmatpush1.msra.mxu0 0.0
        %1076 = vmatprep.subr.mxu0 0.0
        %1077 = vmatpush1.msra.mxu0 0.0
        %1078 = vmatprep.subr.mxu0 0.0
        %1079 = vmatpush1.msra.mxu0 0.0
        %1080 = vmatprep.subr.mxu0 0.0
        %1081 = vmatpush1.msra.mxu0 0.0
        %1082 = vmatprep.subr.mxu0 0.0
        %1083 = vmatpush1.msra.mxu0 0.0
        %1084 = vmatprep.subr.mxu0 0.0
        %1085 = vmatpush1.msra.mxu0 0.0
        %1086 = vmatprep.subr.mxu0 0.0
        %1087 = vmatpush1.msra.mxu0 0.0
        %1088 = vmatprep.subr.mxu0 0.0
        %1089 = vmatpush1.msra.mxu0 0.0
        %1090 = vmatprep.subr.mxu0 0.0
        %1091 = vmatpush1.msra.mxu0 0.0
        %1092 = vmatprep.subr.mxu0 0.0
        %1093 = vmatpush1.msra.mxu0 0.0
        %1094 = vmatprep.subr.mxu0 0.0
        %1095 = vmatpush1.msra.mxu0 0.0
        %1096 = vmatprep.subr.mxu0 0.0
        %1097 = vmatpush1.msra.mxu0 0.0
        %1098 = vmatprep.subr.mxu0 0.0
        %1099 = vmatpush1.msra.mxu0 0.0
        %1100 = vmatprep.subr.mxu0 0.0
        %1101 = vmatpush1.msra.mxu0 0.0
        %1102 = vmatprep.subr.mxu0 0.0
        %1103 = vmatpush1.msra.mxu0 0.0
        %1104 = vmatprep.subr.mxu0 0.0
        %1105 = vmatpush1.msra.mxu0 0.0
        %1106 = vmatprep.subr.mxu0 0.0
        %1107 = vmatpush1.msra.mxu0 0.0
        %1108 = vmatprep.subr.mxu0 0.0
        %1109 = vmatpush1.msra.mxu0 0.0
        %1110 = vmatprep.subr.mxu0 0.0
        %1111 = vmatpush1.msra.mxu0 0.0
        %1112 = vmatprep.subr.mxu0 0.0
        %1113 = vmatpush1.msra.mxu0 0.0
        %1114 = vmatprep.subr.mxu0 0.0
        %1115 = vmatpush1.msra.mxu0 0.0
        %1116 = vmatprep.subr.mxu0 0.0
        %1117 = vmatpush1.msra.mxu0 0.0
        %1118 = vmatprep.subr.mxu0 0.0
        %1119 = vmatpush1.msra.mxu0 0.0
        %1120 = vmatprep.subr.mxu0 0.0
        %1121 = vmatpush1.msra.mxu0 0.0
        %1122 = vmatprep.subr.mxu0 0.0
        %1123 = vmatpush1.msra.mxu0 0.0
        %1124 = vmatprep.subr.mxu0 0.0
        %1125 = vmatpush1.msra.mxu0 0.0
        %1126 = vmatprep.subr.mxu0 0.0
        %1127 = vmatpush1.msra.mxu0 0.0
        %1128 = vmatprep.subr.mxu0 0.0
        %1129 = vmatpush1.msra.mxu0 0.0
        %1130 = vmatprep.mubr.f32.mxu0 0.0
        %1131 = vmatmul.mubr.f32.gmra.mrb[0].mxu0 %v1064
        %v1132 = vpop.f32.mrb[0].mxu0
        %v1133 = vadd.f32 0.0, %v1132
        %v1134 = vpop.f32.mrb[0].mxu0
        %1135 = vdwg.mxu0
        %v1137 = vsel %vm564, %v930, 0
        %1139 = vmatprep.subr.mxu0 0.0
        %1140 = vmatpush1.msra.mxu0 %v562
        %1141 = vmatprep.subr.mxu0 0.0
        %1142 = vmatpush1.msra.mxu0 0.0
        %1143 = vmatprep.subr.mxu0 0.0
        %1144 = vmatpush1.msra.mxu0 0.0
        %1145 = vmatprep.subr.mxu0 0.0
        %1146 = vmatpush1.msra.mxu0 0.0
        %1147 = vmatprep.subr.mxu0 0.0
        %1148 = vmatpush1.msra.mxu0 0.0
        %1149 = vmatprep.subr.mxu0 0.0
        %1150 = vmatpush1.msra.mxu0 0.0
        %1151 = vmatprep.subr.mxu0 0.0
        %1152 = vmatpush1.msra.mxu0 0.0
        %1153 = vmatprep.subr.mxu0 0.0
        %1154 = vmatpush1.msra.mxu0 0.0
        %1155 = vmatprep.subr.mxu0 0.0
        %1156 = vmatpush1.msra.mxu0 0.0
        %1157 = vmatprep.subr.mxu0 0.0
        %1158 = vmatpush1.msra.mxu0 0.0
        %1159 = vmatprep.subr.mxu0 0.0
        %1160 = vmatpush1.msra.mxu0 0.0
        %1161 = vmatprep.subr.mxu0 0.0
        %1162 = vmatpush1.msra.mxu0 0.0
        %1163 = vmatprep.subr.mxu0 0.0
        %1164 = vmatpush1.msra.mxu0 0.0
        %1165 = vmatprep.subr.mxu0 0.0
        %1166 = vmatpush1.msra.mxu0 0.0
        %1167 = vmatprep.subr.mxu0 0.0
        %1168 = vmatpush1.msra.mxu0 0.0
        %1169 = vmatprep.subr.mxu0 0.0
        %1170 = vmatpush1.msra.mxu0 0.0
        %1171 = vmatprep.subr.mxu0 0.0
        %1172 = vmatpush1.msra.mxu0 0.0
        %1173 = vmatprep.subr.mxu0 0.0
        %1174 = vmatpush1.msra.mxu0 0.0
        %1175 = vmatprep.subr.mxu0 0.0
        %1176 = vmatpush1.msra.mxu0 0.0
        %1177 = vmatprep.subr.mxu0 0.0
        %1178 = vmatpush1.msra.mxu0 0.0
        %1179 = vmatprep.subr.mxu0 0.0
        %1180 = vmatpush1.msra.mxu0 0.0
        %1181 = vmatprep.subr.mxu0 0.0
        %1182 = vmatpush1.msra.mxu0 0.0
        %1183 = vmatprep.subr.mxu0 0.0
        %1184 = vmatpush1.msra.mxu0 0.0
        %1185 = vmatprep.subr.mxu0 0.0
        %1186 = vmatpush1.msra.mxu0 0.0
        %1187 = vmatprep.subr.mxu0 0.0
        %1188 = vmatpush1.msra.mxu0 0.0
        %1189 = vmatprep.subr.mxu0 0.0
        %1190 = vmatpush1.msra.mxu0 0.0
        %1191 = vmatprep.subr.mxu0 0.0
        %1192 = vmatpush1.msra.mxu0 0.0
        %1193 = vmatprep.subr.mxu0 0.0
        %1194 = vmatpush1.msra.mxu0 0.0
        %1195 = vmatprep.subr.mxu0 0.0
        %1196 = vmatpush1.msra.mxu0 0.0
        %1197 = vmatprep.subr.mxu0 0.0
        %1198 = vmatpush1.msra.mxu0 0.0
        %1199 = vmatprep.subr.mxu0 0.0
        %1200 = vmatpush1.msra.mxu0 0.0
        %1201 = vmatprep.subr.mxu0 0.0
        %1202 = vmatpush1.msra.mxu0 0.0
        %1203 = vmatprep.mubr.f32.mxu0 0.0
        %1204 = vmatmul.mubr.f32.gmra.mrb[0].mxu0 %v1137
        %v1205 = vpop.f32.mrb[0].mxu0
        %v1206 = vadd.f32 0.0, %v1205
        %v1207 = vpop.f32.mrb[0].mxu0
        %1208 = vdwg.mxu0
        %v1210 = vsel %vm564, %v932, 0
        %1212 = vmatprep.subr.mxu0 0.0
        %1213 = vmatpush1.msra.mxu0 %v563
        %1214 = vmatprep.subr.mxu0 0.0
        %1215 = vmatpush1.msra.mxu0 0.0
        %1216 = vmatprep.subr.mxu0 0.0
        %1217 = vmatpush1.msra.mxu0 0.0
        %1218 = vmatprep.subr.mxu0 0.0
        %1219 = vmatpush1.msra.mxu0 0.0
        %1220 = vmatprep.subr.mxu0 0.0
        %1221 = vmatpush1.msra.mxu0 0.0
        %1222 = vmatprep.subr.mxu0 0.0
        %1223 = vmatpush1.msra.mxu0 0.0
        %1224 = vmatprep.subr.mxu0 0.0
        %1225 = vmatpush1.msra.mxu0 0.0
        %1226 = vmatprep.subr.mxu0 0.0
        %1227 = vmatpush1.msra.mxu0 0.0
        %1228 = vmatprep.subr.mxu0 0.0
        %1229 = vmatpush1.msra.mxu0 0.0
        %1230 = vmatprep.subr.mxu0 0.0
        %1231 = vmatpush1.msra.mxu0 0.0
        %1232 = vmatprep.subr.mxu0 0.0
        %1233 = vmatpush1.msra.mxu0 0.0
        %1234 = vmatprep.subr.mxu0 0.0
        %1235 = vmatpush1.msra.mxu0 0.0
        %1236 = vmatprep.subr.mxu0 0.0
        %1237 = vmatpush1.msra.mxu0 0.0
        %1238 = vmatprep.subr.mxu0 0.0
        %1239 = vmatpush1.msra.mxu0 0.0
        %1240 = vmatprep.subr.mxu0 0.0
        %1241 = vmatpush1.msra.mxu0 0.0
        %1242 = vmatprep.subr.mxu0 0.0
        %1243 = vmatpush1.msra.mxu0 0.0
        %1244 = vmatprep.subr.mxu0 0.0
        %1245 = vmatpush1.msra.mxu0 0.0
        %1246 = vmatprep.subr.mxu0 0.0
        %1247 = vmatpush1.msra.mxu0 0.0
        %1248 = vmatprep.subr.mxu0 0.0
        %1249 = vmatpush1.msra.mxu0 0.0
        %1250 = vmatprep.subr.mxu0 0.0
        %1251 = vmatpush1.msra.mxu0 0.0
        %1252 = vmatprep.subr.mxu0 0.0
        %1253 = vmatpush1.msra.mxu0 0.0
        %1254 = vmatprep.subr.mxu0 0.0
        %1255 = vmatpush1.msra.mxu0 0.0
        %1256 = vmatprep.subr.mxu0 0.0
        %1257 = vmatpush1.msra.mxu0 0.0
        %1258 = vmatprep.subr.mxu0 0.0
        %1259 = vmatpush1.msra.mxu0 0.0
        %1260 = vmatprep.subr.mxu0 0.0
        %1261 = vmatpush1.msra.mxu0 0.0
        %1262 = vmatprep.subr.mxu0 0.0
        %1263 = vmatpush1.msra.mxu0 0.0
        %1264 = vmatprep.subr.mxu0 0.0
        %1265 = vmatpush1.msra.mxu0 0.0
        %1266 = vmatprep.subr.mxu0 0.0
        %1267 = vmatpush1.msra.mxu0 0.0
        %1268 = vmatprep.subr.mxu0 0.0
        %1269 = vmatpush1.msra.mxu0 0.0
        %1270 = vmatprep.subr.mxu0 0.0
        %1271 = vmatpush1.msra.mxu0 0.0
        %1272 = vmatprep.subr.mxu0 0.0
        %1273 = vmatpush1.msra.mxu0 0.0
        %1274 = vmatprep.subr.mxu0 0.0
        %1275 = vmatpush1.msra.mxu0 0.0
        %1276 = vmatprep.mubr.f32.mxu0 0.0
        %1277 = vmatmul.mubr.f32.gmra.mrb[0].mxu0 %v1210
        %v1278 = vpop.f32.mrb[0].mxu0
        %v1279 = vadd.f32 0.0, %v1278
        %v1280 = vpop.f32.mrb[0].mxu0
        %1281 = vdwg.mxu0
        %v1282 = vadd.f32 %v986, %v1060
        %v1283 = vadd.f32 %v987, %v1133
        %v1284 = vadd.f32 %v988, %v1206
        %v1285 = vadd.f32 %v989, %v1279
        %1286 = vst.msk [vmem:[#allocation4] sm:$0xff] %vm564, %v1282
        %1287 = vst.msk [vmem:[#allocation4 + $0x8] sm:$0xff] %vm564, %v1283
        %1288 = vst.msk [vmem:[#allocation4 + $0x10] sm:$0xff] %vm564, %v1284
        %1289 = vst.msk [vmem:[#allocation4 + $0x18] sm:$0xff] %vm564, %v1285
        %1290 = vst.msk [vmem:[#allocation2] sm:$0xff] %vm957, %v885
        %1291 = vst.msk [vmem:[#allocation2 + $0x8] sm:$0xff] %vm957, %v886
        %1292 = vst.msk [vmem:[#allocation2 + $0x10] sm:$0xff] %vm957, %v887
        %1293 = vst.msk [vmem:[#allocation2 + $0x18] sm:$0xff] %vm957, %v888
        // Predicated region
        $region73: #{transformer_block.3} parent=67 // pred_check
          %p1294 = pneg %p534
        $region74: #{transformer_block.3} parent=67 // pred_check_branch
          %1296 = sbr.rel (%p1294) target = $region76
        $region75: #{transformer_block.3} parent=67 // pred_region
          %v1297 = vld [vmem:[#allocation3] sm:$0xff]
          %v1298 = vld [vmem:[#allocation3 + $0x8] sm:$0xff]
          %v1299 = vld [vmem:[#allocation3 + $0x10] sm:$0xff]
          %v1300 = vld [vmem:[#allocation3 + $0x18] sm:$0xff]
          %v1301 = vrcp.pop %v1297
          %v1302 = vmul.f32 1.0, %v1301
          %v1303 = vrcp.pop %v1298
          %v1304 = vmul.f32 1.0, %v1303
          %v1305 = vrcp.pop %v1299
          %v1306 = vmul.f32 1.0, %v1305
          %v1307 = vrcp.pop %v1300
          %v1308 = vmul.f32 1.0, %v1307
          %v1309 = vld [vmem:[#allocation4] sm:$0xff]
          %v1310 = vld [vmem:[#allocation4 + $0x8] sm:$0xff]
          %v1311 = vld [vmem:[#allocation4 + $0x10] sm:$0xff]
          %v1312 = vld [vmem:[#allocation4 + $0x18] sm:$0xff]
          %1314 = vset.pattern.permute.xlu0 0
          %1315 = vperm.xlu0 %1314, %v1302
          %v1316 = vpop.permute.xlu0 %1315
          %1319 = vset.pattern.permute.xlu0 0
          %1320 = vperm.xlu0 %1319, %v1304
          %v1321 = vpop.permute.xlu0 %1320
          %1324 = vset.pattern.permute.xlu0 0
          %1325 = vperm.xlu0 %1324, %v1306
          %v1326 = vpop.permute.xlu0 %1325
          %1329 = vset.pattern.permute.xlu0 0
          %1330 = vperm.xlu0 %1329, %v1308
          %v1331 = vpop.permute.xlu0 %1330
          %v1333 = vmul.f32 %v1309, %v1316
          %v1334 = vmul.f32 %v1310, %v1321
          %v1335 = vmul.f32 %v1311, %v1326
          %v1336 = vmul.f32 %v1312, %v1331
          %v1337 = vld [vmem:[%s4] sm:$0xff]
          %s1338 = scalar_lea.vmem %s4, 8
          %v1339 = vld [vmem:[%s1338] sm:$0xff]
          %v1341 = vsel %vm564, %v1334, 0
          %1343 = vmatprep.subr.mxu0 0.0
          %1344 = vmatpush1.msra.mxu0 %v1339
          %1345 = vmatprep.subr.mxu0 0.0
          %1346 = vmatpush1.msra.mxu0 0.0
          %1347 = vmatprep.subr.mxu0 0.0
          %1348 = vmatpush1.msra.mxu0 0.0
          %1349 = vmatprep.subr.mxu0 0.0
          %1350 = vmatpush1.msra.mxu0 0.0
          %1351 = vmatprep.subr.mxu0 0.0
          %1352 = vmatpush1.msra.mxu0 0.0
          %1353 = vmatprep.subr.mxu0 0.0
          %1354 = vmatpush1.msra.mxu0 0.0
          %1355 = vmatprep.subr.mxu0 0.0
          %1356 = vmatpush1.msra.mxu0 0.0
          %1357 = vmatprep.subr.mxu0 0.0
          %1358 = vmatpush1.msra.mxu0 0.0
          %1359 = vmatprep.subr.mxu0 0.0
          %1360 = vmatpush1.msra.mxu0 0.0
          %1361 = vmatprep.subr.mxu0 0.0
          %1362 = vmatpush1.msra.mxu0 0.0
          %1363 = vmatprep.subr.mxu0 0.0
          %1364 = vmatpush1.msra.mxu0 0.0
          %1365 = vmatprep.subr.mxu0 0.0
          %1366 = vmatpush1.msra.mxu0 0.0
          %1367 = vmatprep.subr.mxu0 0.0
          %1368 = vmatpush1.msra.mxu0 0.0
          %1369 = vmatprep.subr.mxu0 0.0
          %1370 = vmatpush1.msra.mxu0 0.0
          %1371 = vmatprep.subr.mxu0 0.0
          %1372 = vmatpush1.msra.mxu0 0.0
          %1373 = vmatprep.subr.mxu0 0.0
          %1374 = vmatpush1.msra.mxu0 0.0
          %1375 = vmatprep.subr.mxu0 0.0
          %1376 = vmatpush1.msra.mxu0 0.0
          %1377 = vmatprep.subr.mxu0 0.0
          %1378 = vmatpush1.msra.mxu0 0.0
          %1379 = vmatprep.subr.mxu0 0.0
          %1380 = vmatpush1.msra.mxu0 0.0
          %1381 = vmatprep.subr.mxu0 0.0
          %1382 = vmatpush1.msra.mxu0 0.0
          %1383 = vmatprep.subr.mxu0 0.0
          %1384 = vmatpush1.msra.mxu0 0.0
          %1385 = vmatprep.subr.mxu0 0.0
          %1386 = vmatpush1.msra.mxu0 0.0
          %1387 = vmatprep.subr.mxu0 0.0
          %1388 = vmatpush1.msra.mxu0 0.0
          %1389 = vmatprep.subr.mxu0 0.0
          %1390 = vmatpush1.msra.mxu0 0.0
          %1391 = vmatprep.subr.mxu0 0.0
          %1392 = vmatpush1.msra.mxu0 0.0
          %1393 = vmatprep.subr.mxu0 0.0
          %1394 = vmatpush1.msra.mxu0 0.0
          %1395 = vmatprep.subr.mxu0 0.0
          %1396 = vmatpush1.msra.mxu0 0.0
          %1397 = vmatprep.subr.mxu0 0.0
          %1398 = vmatpush1.msra.mxu0 0.0
          %1399 = vmatprep.subr.mxu0 0.0
          %1400 = vmatpush1.msra.mxu0 0.0
          %1401 = vmatprep.subr.mxu0 0.0
          %1402 = vmatpush1.msra.mxu0 0.0
          %1403 = vmatprep.subr.mxu0 0.0
          %1404 = vmatpush1.msra.mxu0 0.0
          %1405 = vmatprep.subr.mxu0 0.0
          %1406 = vmatpush1.msra.mxu0 0.0
          %1407 = vmatprep.mubr.f32.mxu0 0.0
          %1408 = vmatmul.mubr.f32.gmra.mrb[0].mxu0 %v1341
          %v1409 = vpop.f32.mrb[0].mxu0
          %v1410 = vadd.f32 0.0, %v1409
          %v1411 = vpop.f32.mrb[0].mxu0
          %1412 = vdwg.mxu0
          %v1414 = vsel %vm564, %v1333, 0
          %1416 = vmatprep.subr.mxu0 0.0
          %1417 = vmatpush1.msra.mxu0 %v1337
          %1418 = vmatprep.subr.mxu0 0.0
          %1419 = vmatpush1.msra.mxu0 0.0
          %1420 = vmatprep.subr.mxu0 0.0
          %1421 = vmatpush1.msra.mxu0 0.0
          %1422 = vmatprep.subr.mxu0 0.0
          %1423 = vmatpush1.msra.mxu0 0.0
          %1424 = vmatprep.subr.mxu0 0.0
          %1425 = vmatpush1.msra.mxu0 0.0
          %1426 = vmatprep.subr.mxu0 0.0
          %1427 = vmatpush1.msra.mxu0 0.0
          %1428 = vmatprep.subr.mxu0 0.0
          %1429 = vmatpush1.msra.mxu0 0.0
          %1430 = vmatprep.subr.mxu0 0.0
          %1431 = vmatpush1.msra.mxu0 0.0
          %1432 = vmatprep.subr.mxu0 0.0
          %1433 = vmatpush1.msra.mxu0 0.0
          %1434 = vmatprep.subr.mxu0 0.0
          %1435 = vmatpush1.msra.mxu0 0.0
          %1436 = vmatprep.subr.mxu0 0.0
          %1437 = vmatpush1.msra.mxu0 0.0
          %1438 = vmatprep.subr.mxu0 0.0
          %1439 = vmatpush1.msra.mxu0 0.0
          %1440 = vmatprep.subr.mxu0 0.0
          %1441 = vmatpush1.msra.mxu0 0.0
          %1442 = vmatprep.subr.mxu0 0.0
          %1443 = vmatpush1.msra.mxu0 0.0
          %1444 = vmatprep.subr.mxu0 0.0
          %1445 = vmatpush1.msra.mxu0 0.0
          %1446 = vmatprep.subr.mxu0 0.0
          %1447 = vmatpush1.msra.mxu0 0.0
          %1448 = vmatprep.subr.mxu0 0.0
          %1449 = vmatpush1.msra.mxu0 0.0
          %1450 = vmatprep.subr.mxu0 0.0
          %1451 = vmatpush1.msra.mxu0 0.0
          %1452 = vmatprep.subr.mxu0 0.0
          %1453 = vmatpush1.msra.mxu0 0.0
          %1454 = vmatprep.subr.mxu0 0.0
          %1455 = vmatpush1.msra.mxu0 0.0
          %1456 = vmatprep.subr.mxu0 0.0
          %1457 = vmatpush1.msra.mxu0 0.0
          %1458 = vmatprep.subr.mxu0 0.0
          %1459 = vmatpush1.msra.mxu0 0.0
          %1460 = vmatprep.subr.mxu0 0.0
          %1461 = vmatpush1.msra.mxu0 0.0
          %1462 = vmatprep.subr.mxu0 0.0
          %1463 = vmatpush1.msra.mxu0 0.0
          %1464 = vmatprep.subr.mxu0 0.0
          %1465 = vmatpush1.msra.mxu0 0.0
          %1466 = vmatprep.subr.mxu0 0.0
          %1467 = vmatpush1.msra.mxu0 0.0
          %1468 = vmatprep.subr.mxu0 0.0
          %1469 = vmatpush1.msra.mxu0 0.0
          %1470 = vmatprep.subr.mxu0 0.0
          %1471 = vmatpush1.msra.mxu0 0.0
          %1472 = vmatprep.subr.mxu0 0.0
          %1473 = vmatpush1.msra.mxu0 0.0
          %1474 = vmatprep.subr.mxu0 0.0
          %1475 = vmatpush1.msra.mxu0 0.0
          %1476 = vmatprep.subr.mxu0 0.0
          %1477 = vmatpush1.msra.mxu0 0.0
          %1478 = vmatprep.subr.mxu0 0.0
          %1479 = vmatpush1.msra.mxu0 0.0
          %1480 = vmatprep.mubr.f32.mxu0 0.0
          %1481 = vmatmul.mubr.f32.gmra.mrb[0].mxu0 %v1414
          %v1482 = vpop.f32.mrb[0].mxu0
          %v1483 = vadd.f32 %v1410, %v1482
          %v1484 = vpop.f32.mrb[0].mxu0
          %1485 = vdwg.mxu0
          %s1486 = scalar_lea.vmem %s4, 16
          %v1487 = vld [vmem:[%s1486] sm:$0xff]
          %v1489 = vsel %vm564, %v1335, 0
          %1491 = vmatprep.subr.mxu0 0.0
          %1492 = vmatpush1.msra.mxu0 %v1487
          %1493 = vmatprep.subr.mxu0 0.0
          %1494 = vmatpush1.msra.mxu0 0.0
          %1495 = vmatprep.subr.mxu0 0.0
          %1496 = vmatpush1.msra.mxu0 0.0
          %1497 = vmatprep.subr.mxu0 0.0
          %1498 = vmatpush1.msra.mxu0 0.0
          %1499 = vmatprep.subr.mxu0 0.0
          %1500 = vmatpush1.msra.mxu0 0.0
          %1501 = vmatprep.subr.mxu0 0.0
          %1502 = vmatpush1.msra.mxu0 0.0
          %1503 = vmatprep.subr.mxu0 0.0
          %1504 = vmatpush1.msra.mxu0 0.0
          %1505 = vmatprep.subr.mxu0 0.0
          %1506 = vmatpush1.msra.mxu0 0.0
          %1507 = vmatprep.subr.mxu0 0.0
          %1508 = vmatpush1.msra.mxu0 0.0
          %1509 = vmatprep.subr.mxu0 0.0
          %1510 = vmatpush1.msra.mxu0 0.0
          %1511 = vmatprep.subr.mxu0 0.0
          %1512 = vmatpush1.msra.mxu0 0.0
          %1513 = vmatprep.subr.mxu0 0.0
          %1514 = vmatpush1.msra.mxu0 0.0
          %1515 = vmatprep.subr.mxu0 0.0
          %1516 = vmatpush1.msra.mxu0 0.0
          %1517 = vmatprep.subr.mxu0 0.0
          %1518 = vmatpush1.msra.mxu0 0.0
          %1519 = vmatprep.subr.mxu0 0.0
          %1520 = vmatpush1.msra.mxu0 0.0
          %1521 = vmatprep.subr.mxu0 0.0
          %1522 = vmatpush1.msra.mxu0 0.0
          %1523 = vmatprep.subr.mxu0 0.0
          %1524 = vmatpush1.msra.mxu0 0.0
          %1525 = vmatprep.subr.mxu0 0.0
          %1526 = vmatpush1.msra.mxu0 0.0
          %1527 = vmatprep.subr.mxu0 0.0
          %1528 = vmatpush1.msra.mxu0 0.0
          %1529 = vmatprep.subr.mxu0 0.0
          %1530 = vmatpush1.msra.mxu0 0.0
          %1531 = vmatprep.subr.mxu0 0.0
          %1532 = vmatpush1.msra.mxu0 0.0
          %1533 = vmatprep.subr.mxu0 0.0
          %1534 = vmatpush1.msra.mxu0 0.0
          %1535 = vmatprep.subr.mxu0 0.0
          %1536 = vmatpush1.msra.mxu0 0.0
          %1537 = vmatprep.subr.mxu0 0.0
          %1538 = vmatpush1.msra.mxu0 0.0
          %1539 = vmatprep.subr.mxu0 0.0
          %1540 = vmatpush1.msra.mxu0 0.0
          %1541 = vmatprep.subr.mxu0 0.0
          %1542 = vmatpush1.msra.mxu0 0.0
          %1543 = vmatprep.subr.mxu0 0.0
          %1544 = vmatpush1.msra.mxu0 0.0
          %1545 = vmatprep.subr.mxu0 0.0
          %1546 = vmatpush1.msra.mxu0 0.0
          %1547 = vmatprep.subr.mxu0 0.0
          %1548 = vmatpush1.msra.mxu0 0.0
          %1549 = vmatprep.subr.mxu0 0.0
          %1550 = vmatpush1.msra.mxu0 0.0
          %1551 = vmatprep.subr.mxu0 0.0
          %1552 = vmatpush1.msra.mxu0 0.0
          %1553 = vmatprep.subr.mxu0 0.0
          %1554 = vmatpush1.msra.mxu0 0.0
          %1555 = vmatprep.mubr.f32.mxu0 0.0
          %1556 = vmatmul.mubr.f32.gmra.mrb[0].mxu0 %v1489
          %v1557 = vpop.f32.mrb[0].mxu0
          %v1558 = vadd.f32 0.0, %v1557
          %v1559 = vpop.f32.mrb[0].mxu0
          %1560 = vdwg.mxu0
          %v1561 = vadd.f32 %v1483, %v1558
          %s1562 = scalar_lea.vmem %s4, 24
          %v1563 = vld [vmem:[%s1562] sm:$0xff]
          %v1565 = vsel %vm564, %v1336, 0
          %1567 = vmatprep.subr.mxu0 0.0
          %1568 = vmatpush1.msra.mxu0 %v1563
          %1569 = vmatprep.subr.mxu0 0.0
          %1570 = vmatpush1.msra.mxu0 0.0
          %1571 = vmatprep.subr.mxu0 0.0
          %1572 = vmatpush1.msra.mxu0 0.0
          %1573 = vmatprep.subr.mxu0 0.0
          %1574 = vmatpush1.msra.mxu0 0.0
          %1575 = vmatprep.subr.mxu0 0.0
          %1576 = vmatpush1.msra.mxu0 0.0
          %1577 = vmatprep.subr.mxu0 0.0
          %1578 = vmatpush1.msra.mxu0 0.0
          %1579 = vmatprep.subr.mxu0 0.0
          %1580 = vmatpush1.msra.mxu0 0.0
          %1581 = vmatprep.subr.mxu0 0.0
          %1582 = vmatpush1.msra.mxu0 0.0
          %1583 = vmatprep.subr.mxu0 0.0
          %1584 = vmatpush1.msra.mxu0 0.0
          %1585 = vmatprep.subr.mxu0 0.0
          %1586 = vmatpush1.msra.mxu0 0.0
          %1587 = vmatprep.subr.mxu0 0.0
          %1588 = vmatpush1.msra.mxu0 0.0
          %1589 = vmatprep.subr.mxu0 0.0
          %1590 = vmatpush1.msra.mxu0 0.0
          %1591 = vmatprep.subr.mxu0 0.0
          %1592 = vmatpush1.msra.mxu0 0.0
          %1593 = vmatprep.subr.mxu0 0.0
          %1594 = vmatpush1.msra.mxu0 0.0
          %1595 = vmatprep.subr.mxu0 0.0
          %1596 = vmatpush1.msra.mxu0 0.0
          %1597 = vmatprep.subr.mxu0 0.0
          %1598 = vmatpush1.msra.mxu0 0.0
          %1599 = vmatprep.subr.mxu0 0.0
          %1600 = vmatpush1.msra.mxu0 0.0
          %1601 = vmatprep.subr.mxu0 0.0
          %1602 = vmatpush1.msra.mxu0 0.0
          %1603 = vmatprep.subr.mxu0 0.0
          %1604 = vmatpush1.msra.mxu0 0.0
          %1605 = vmatprep.subr.mxu0 0.0
          %1606 = vmatpush1.msra.mxu0 0.0
          %1607 = vmatprep.subr.mxu0 0.0
          %1608 = vmatpush1.msra.mxu0 0.0
          %1609 = vmatprep.subr.mxu0 0.0
          %1610 = vmatpush1.msra.mxu0 0.0
          %1611 = vmatprep.subr.mxu0 0.0
          %1612 = vmatpush1.msra.mxu0 0.0
          %1613 = vmatprep.subr.mxu0 0.0
          %1614 = vmatpush1.msra.mxu0 0.0
          %1615 = vmatprep.subr.mxu0 0.0
          %1616 = vmatpush1.msra.mxu0 0.0
          %1617 = vmatprep.subr.mxu0 0.0
          %1618 = vmatpush1.msra.mxu0 0.0
          %1619 = vmatprep.subr.mxu0 0.0
          %1620 = vmatpush1.msra.mxu0 0.0
          %1621 = vmatprep.subr.mxu0 0.0
          %1622 = vmatpush1.msra.mxu0 0.0
          %1623 = vmatprep.subr.mxu0 0.0
          %1624 = vmatpush1.msra.mxu0 0.0
          %1625 = vmatprep.subr.mxu0 0.0
          %1626 = vmatpush1.msra.mxu0 0.0
          %1627 = vmatprep.subr.mxu0 0.0
          %1628 = vmatpush1.msra.mxu0 0.0
          %1629 = vmatprep.subr.mxu0 0.0
          %1630 = vmatpush1.msra.mxu0 0.0
          %1631 = vmatprep.mubr.f32.mxu0 0.0
          %1632 = vmatmul.mubr.f32.gmra.mrb[0].mxu0 %v1565
          %v1633 = vpop.f32.mrb[0].mxu0
          %v1634 = vadd.f32 0.0, %v1633
          %v1635 = vpop.f32.mrb[0].mxu0
          %1636 = vdwg.mxu0
          %v1637 = vadd.f32 %v1561, %v1634
          %v1638 = vld [vmem:[%s5] sm:$0x1]
          %v1640 = vlaneseq
          %v1641 = vshrl.u32 %v1640, 7
          %v1642 = vsub.s32 0, %v1641
          %v1643 = vrot.slane %v1638, %v1642
          %v1645 = vadd.f32 %v1637, %v1643
          %v1646 = vld [vmem:[%s509] sm:$0xff]
          %v1647 = vadd.f32 %v1646, %v1645
          %v1648 = vld [vmem:[%s6] sm:$0x1]
          %v1649 = vld [vmem:[%s7] sm:$0x1]
          %vm1650 = vcmask 261120
          %v1651 = vsel %vm1650, %v1647, 0.0
          %1652 = vadd.xlane.f32.xlu0 %v1651
          %v1653 = vpop.xlane.xlu0 %1652
          %v1654 = vrcp.pop 32.0
          %v1655 = vmul.f32 %v1653, %v1654
          %v1656 = vsub.f32 %v1647, %v1655
          %v1657 = vmul.f32 %v1656, %v1656
          %v1658 = vsel %vm1650, %v1657, 0.0
          %1659 = vadd.xlane.f32.xlu0 %v1658
          %v1660 = vpop.xlane.xlu0 %1659
          %v1661 = vmul.f32 %v1660, %v1654
          %v1662 = vadd.f32 %v1661, 1e-05
          %v1663 = vrsqrt.pop %v1662
          %v1664 = vmul.f32 %v1656, %v1663
          %v1666 = vlaneseq
          %v1667 = vshrl.u32 %v1666, 7
          %v1668 = vsub.s32 0, %v1667
          %v1669 = vrot.slane %v1648, %v1668
          %v1671 = vmul.f32 %v1664, %v1669
          %v1673 = vlaneseq
          %v1674 = vshrl.u32 %v1673, 7
          %v1675 = vsub.s32 0, %v1674
          %v1676 = vrot.slane %v1649, %v1675
          %v1678 = vadd.f32 %v1671, %v1676
          %v1679 = vld [vmem:[%s8] sm:$0xff]
          %v1680 = vld [vmem:[%s8 + $0x8] sm:$0xff]
          %v1681 = vld [vmem:[%s8 + $0x10] sm:$0xff]
          %v1682 = vld [vmem:[%s8 + $0x18] sm:$0xff]
          %v1683 = vld [vmem:[%s9] sm:$0x1]
          %v1685 = vlaneseq
          %v1686 = vshrl.u32 %v1685, 7
          %v1687 = vsub.s32 0, %v1686
          %v1688 = vrot.slane %v1683, %v1687
          %v1691 = vsel %vm1650, %v1678, 0
          %1693 = vmatprep.subr.mxu0 0.0
          %1694 = vmatpush1.msra.mxu0 %v1679
          %1695 = vmatprep.subr.mxu0 0.0
          %1696 = vmatpush1.msra.mxu0 %v1680
          %1697 = vmatprep.subr.mxu0 0.0
          %1698 = vmatpush1.msra.mxu0 %v1681
          %1699 = vmatprep.subr.mxu0 0.0
          %1700 = vmatpush1.msra.mxu0 %v1682
          %1701 = vmatprep.subr.mxu0 0.0
          %1702 = vmatpush1.msra.mxu0 0.0
          %1703 = vmatprep.subr.mxu0 0.0
          %1704 = vmatpush1.msra.mxu0 0.0
          %1705 = vmatprep.subr.mxu0 0.0
          %1706 = vmatpush1.msra.mxu0 0.0
          %1707 = vmatprep.subr.mxu0 0.0
          %1708 = vmatpush1.msra.mxu0 0.0
          %1709 = vmatprep.subr.mxu0 0.0
          %1710 = vmatpush1.msra.mxu0 0.0
          %1711 = vmatprep.subr.mxu0 0.0
          %1712 = vmatpush1.msra.mxu0 0.0
          %1713 = vmatprep.subr.mxu0 0.0
          %1714 = vmatpush1.msra.mxu0 0.0
          %1715 = vmatprep.subr.mxu0 0.0
          %1716 = vmatpush1.msra.mxu0 0.0
          %1717 = vmatprep.subr.mxu0 0.0
          %1718 = vmatpush1.msra.mxu0 0.0
          %1719 = vmatprep.subr.mxu0 0.0
          %1720 = vmatpush1.msra.mxu0 0.0
          %1721 = vmatprep.subr.mxu0 0.0
          %1722 = vmatpush1.msra.mxu0 0.0
          %1723 = vmatprep.subr.mxu0 0.0
          %1724 = vmatpush1.msra.mxu0 0.0
          %1725 = vmatprep.subr.mxu0 0.0
          %1726 = vmatpush1.msra.mxu0 0.0
          %1727 = vmatprep.subr.mxu0 0.0
          %1728 = vmatpush1.msra.mxu0 0.0
          %1729 = vmatprep.subr.mxu0 0.0
          %1730 = vmatpush1.msra.mxu0 0.0
          %1731 = vmatprep.subr.mxu0 0.0
          %1732 = vmatpush1.msra.mxu0 0.0
          %1733 = vmatprep.subr.mxu0 0.0
          %1734 = vmatpush1.msra.mxu0 0.0
          %1735 = vmatprep.subr.mxu0 0.0
          %1736 = vmatpush1.msra.mxu0 0.0
          %1737 = vmatprep.subr.mxu0 0.0
          %1738 = vmatpush1.msra.mxu0 0.0
          %1739 = vmatprep.subr.mxu0 0.0
          %1740 = vmatpush1.msra.mxu0 0.0
          %1741 = vmatprep.subr.mxu0 0.0
          %1742 = vmatpush1.msra.mxu0 0.0
          %1743 = vmatprep.subr.mxu0 0.0
          %1744 = vmatpush1.msra.mxu0 0.0
          %1745 = vmatprep.subr.mxu0 0.0
          %1746 = vmatpush1.msra.mxu0 0.0
          %1747 = vmatprep.subr.mxu0 0.0
          %1748 = vmatpush1.msra.mxu0 0.0
          %1749 = vmatprep.subr.mxu0 0.0
          %1750 = vmatpush1.msra.mxu0 0.0
          %1751 = vmatprep.subr.mxu0 0.0
          %1752 = vmatpush1.msra.mxu0 0.0
          %1753 = vmatprep.subr.mxu0 0.0
          %1754 = vmatpush1.msra.mxu0 0.0
          %1755 = vmatprep.subr.mxu0 0.0
          %1756 = vmatpush1.msra.mxu0 0.0
          %1757 = vmatprep.mubr.f32.mxu0 0.0
          %1758 = vmatmul.mubr.f32.gmra.mrb[0].mxu0 %v1691
          %v1759 = vpop.f32.mrb[0].mxu0
          %v1760 = vadd.f32 %v1688, %v1759
          %v1761 = vpop.f32.mrb[0].mxu0
          %1762 = vdwg.mxu0
          %v1763 = vmul.f32 %v1760, 0.5
          %v1764 = vmul.f32 %v1760, 0.70710677
          %v1765 = verf.f32.pop %v1764
          %v1766 = vadd.f32 %v1765, 1.0
          %v1767 = vmul.f32 %v1763, %v1766
          %v1768 = vld [vmem:[%s10] sm:$0xff]
          %v1769 = vld [vmem:[%s10 + $0x8] sm:$0xff]
          %v1770 = vld [vmem:[%s10 + $0x10] sm:$0xff]
          %v1771 = vld [vmem:[%s10 + $0x18] sm:$0xff]
          %v1772 = vld [vmem:[%s10 + $0x20] sm:$0xff]
          %v1773 = vld [vmem:[%s10 + $0x28] sm:$0xff]
          %v1774 = vld [vmem:[%s10 + $0x30] sm:$0xff]
          %v1775 = vld [vmem:[%s10 + $0x38] sm:$0xff]
          %v1776 = vld [vmem:[%s10 + $0x40] sm:$0xff]
          %v1777 = vld [vmem:[%s10 + $0x48] sm:$0xff]
          %v1778 = vld [vmem:[%s10 + $0x50] sm:$0xff]
          %v1779 = vld [vmem:[%s10 + $0x58] sm:$0xff]
          %v1780 = vld [vmem:[%s10 + $0x60] sm:$0xff]
          %v1781 = vld [vmem:[%s10 + $0x68] sm:$0xff]
          %v1782 = vld [vmem:[%s10 + $0x70] sm:$0xff]
          %v1783 = vld [vmem:[%s10 + $0x78] sm:$0xff]
          %v1784 = vld [vmem:[%s11] sm:$0x1]
          %v1786 = vlaneseq
          %v1787 = vshrl.u32 %v1786, 7
          %v1788 = vsub.s32 0, %v1787
          %v1789 = vrot.slane %v1784, %v1788
          %1791 = vmatprep.subr.mxu0 0.0
          %1792 = vmatpush1.msra.mxu0 %v1768
          %1793 = vmatprep.subr.mxu0 0.0
          %1794 = vmatpush1.msra.mxu0 %v1769
          %1795 = vmatprep.subr.mxu0 0.0
          %1796 = vmatpush1.msra.mxu0 %v1770
          %1797 = vmatprep.subr.mxu0 0.0
          %1798 = vmatpush1.msra.mxu0 %v1771
          %1799 = vmatprep.subr.mxu0 0.0
          %1800 = vmatpush1.msra.mxu0 %v1772
          %1801 = vmatprep.subr.mxu0 0.0
          %1802 = vmatpush1.msra.mxu0 %v1773
          %1803 = vmatprep.subr.mxu0 0.0
          %1804 = vmatpush1.msra.mxu0 %v1774
          %1805 = vmatprep.subr.mxu0 0.0
          %1806 = vmatpush1.msra.mxu0 %v1775
          %1807 = vmatprep.subr.mxu0 0.0
          %1808 = vmatpush1.msra.mxu0 %v1776
          %1809 = vmatprep.subr.mxu0 0.0
          %1810 = vmatpush1.msra.mxu0 %v1777
          %1811 = vmatprep.subr.mxu0 0.0
          %1812 = vmatpush1.msra.mxu0 %v1778
          %1813 = vmatprep.subr.mxu0 0.0
          %1814 = vmatpush1.msra.mxu0 %v1779
          %1815 = vmatprep.subr.mxu0 0.0
          %1816 = vmatpush1.msra.mxu0 %v1780
          %1817 = vmatprep.subr.mxu0 0.0
          %1818 = vmatpush1.msra.mxu0 %v1781
          %1819 = vmatprep.subr.mxu0 0.0
          %1820 = vmatpush1.msra.mxu0 %v1782
          %1821 = vmatprep.subr.mxu0 0.0
          %1822 = vmatpush1.msra.mxu0 %v1783
          %1823 = vmatprep.subr.mxu0 0.0
          %1824 = vmatpush1.msra.mxu0 0.0
          %1825 = vmatprep.subr.mxu0 0.0
          %1826 = vmatpush1.msra.mxu0 0.0
          %1827 = vmatprep.subr.mxu0 0.0
          %1828 = vmatpush1.msra.mxu0 0.0
          %1829 = vmatprep.subr.mxu0 0.0
          %1830 = vmatpush1.msra.mxu0 0.0
          %1831 = vmatprep.subr.mxu0 0.0
          %1832 = vmatpush1.msra.mxu0 0.0
          %1833 = vmatprep.subr.mxu0 0.0
          %1834 = vmatpush1.msra.mxu0 0.0
          %1835 = vmatprep.subr.mxu0 0.0
          %1836 = vmatpush1.msra.mxu0 0.0
          %1837 = vmatprep.subr.mxu0 0.0
          %1838 = vmatpush1.msra.mxu0 0.0
          %1839 = vmatprep.subr.mxu0 0.0
          %1840 = vmatpush1.msra.mxu0 0.0
          %1841 = vmatprep.subr.mxu0 0.0
          %1842 = vmatpush1.msra.mxu0 0.0
          %1843 = vmatprep.subr.mxu0 0.0
          %1844 = vmatpush1.msra.mxu0 0.0
          %1845 = vmatprep.subr.mxu0 0.0
          %1846 = vmatpush1.msra.mxu0 0.0
          %1847 = vmatprep.subr.mxu0 0.0
          %1848 = vmatpush1.msra.mxu0 0.0
          %1849 = vmatprep.subr.mxu0 0.0
          %1850 = vmatpush1.msra.mxu0 0.0
          %1851 = vmatprep.subr.mxu0 0.0
          %1852 = vmatpush1.msra.mxu0 0.0
          %1853 = vmatprep.subr.mxu0 0.0
          %1854 = vmatpush1.msra.mxu0 0.0
          %1855 = vmatprep.mubr.f32.mxu0 0.0
          %1856 = vmatmul.mubr.f32.gmra.mrb[0].mxu0 %v1767
          %v1857 = vpop.f32.mrb[0].mxu0
          %v1858 = vadd.f32 %v1789, %v1857
          %v1859 = vpop.f32.mrb[0].mxu0
          %1860 = vdwg.mxu0
          %v1861 = vadd.f32 %v1647, %v1858
          %1862 = vst.msk [vmem:[%s502] sm:$0xff] %vm1650, %v1861
        $region76: #{transformer_block.3} parent=67 // pred_fallthru
          _
        %s1863 = sand.u32 %s335, 1
        %s1864 = scalar_lea.sflag [#allocation6], %s1863
        %s1865 = sand.u32 %s335, 1
        %s1866 = smul.addr %s1865, 8
        %s1867 = scalar_lea.vmem [#allocation5], %s1866
        // Predicated region
        $region77: #{transformer_block.3} parent=67 // pred_check
          %p1868 = pneg %p345
        $region78: #{transformer_block.3} parent=67 // pred_check_branch
          %1870 = sbr.rel (%p1868) target = $region80
        $region79: #{transformer_block.3} parent=67 // pred_region
          %s1872 = ssub.s32 128, 128
          %1873 = vsyncadd %s1864, %s1872
          %s1874 = sadd.s32 %s32, %s31
          %s1875 = smul.addr %s1874, 128
          %s1876 = scalar_lea.hbm %s12, %s1875
          %s1878 = sshll.u32 %s1867, 4
          %s1879 = int_to_ptr.vmem [resolvable:$true] %s1878
          %1881 = dma.vmem_to_hbm [thread:$0]  %s1879, 128, %s1876, %s1864
        $region80: #{transformer_block.3} parent=67 // pred_fallthru
          _
      $region68: #{transformer_block.3} parent=5 // pred_fallthru
        _
      %p1882 = scmp.le.s32.totalorder 2, %s21
      // Predicated region
      $region81: #{transformer_block.3} parent=5 // pred_check
        %p1883 = pneg %p1882
      $region82: #{transformer_block.3} parent=5 // pred_check_branch
        %1885 = sbr.rel (%p1883) target = $region84
      $region83: #{transformer_block.3} parent=5 // pred_region
        %s1886 = ssub.s32 %s21, 2
        // Predicated region
        $region85: #{transformer_block.3} parent=83 // pred_check
          %p1887 = pneg %p351
        $region86: #{transformer_block.3} parent=83 // pred_check_branch
          %1889 = sbr.rel (%p1887) target = $region88
        $region87: #{transformer_block.3} parent=83 // pred_region
          %s1890 = sand.u32 %s336, 1
          %s1891 = scalar_lea.sflag [#allocation6], %s1890
          %s1892 = sand.u32 %s336, 1
          %s1893 = smul.addr %s1892, 8
          %s1894 = scalar_lea.vmem [#allocation5], %s1893
          %1895 = dma.done %s1891, 128
        $region88: #{transformer_block.3} parent=83 // pred_fallthru
          _
      $region84: #{transformer_block.3} parent=5 // pred_fallthru
        _
    $region6: #{transformer_block.3} parent=1 // loop_footer
      %s25 = sadd.s32 1, %s21
    $region7: #{transformer_block.3} parent=1 // loop_footer_branch
      %20 = sbr.rel target = $region3
    $region8: #{transformer_block.3} parent=1 // loop_exit
      _
    %1896 = vsyncpa [#allocation6], 1
    %s1897 = scalar_lea.sflag [#allocation6], 1
    %1898 = vsyncpa %s1897, 1

</llo_original>
